<compile_context>
chip_gen: v7x
topology: tpu7x:2x2x1
jax: 0.10.0
libtpu: 0.0.40
codegen_flags: <defaults>
</compile_context>

<pallas_src>
import math
import functools

import jax
import jax.numpy as jnp
from jax.experimental import pallas as pl
from jax.experimental.pallas import tpu as pltpu


# ------------------------------ kernel helpers ------------------------------

def _layer_norm_f32(y, g, b, eps=1e-5):
    """PyTorch-style LayerNorm (biased variance, eps inside rsqrt), f32 math."""
    mean = jnp.mean(y, axis=-1, keepdims=True)
    yc = y - mean
    var = jnp.mean(yc * yc, axis=-1, keepdims=True)
    return yc * jax.lax.rsqrt(var + eps) * g + b


# ------------------------------- Pallas kernel -------------------------------

def _encoder_stack_kernel(x_ref, wqkv_ref, bqkv_ref, wo_ref, bo_ref,
                          g1_ref, b1_ref, w1_ref, bf1_ref, w2_ref, bf2_ref,
                          g2_ref, b2_ref, gf_ref, bfn_ref,
                          o_ref, act_ref, *,
                          nhead, batch, seq, has_final_norm):
    """One grid step == one encoder layer (all layers share the same weights,
    matching copy.deepcopy clones).  Activations are carried across layers in
    the persistent f32 VMEM scratch act_ref; the output is written only on the
    last layer (with the optional final LayerNorm fused in)."""
    l = pl.program_id(0)
    D = act_ref.shape[-1]
    Dh = D // nhead

    @pl.when(l == 0)
    def _():
        act_ref[...] = x_ref[...].astype(jnp.float32)

    x = act_ref[...]                                           # (B*S, D) f32

    # ---------------- self-attention (fused QKV, bf16 MXU ops) ---------------
    # One big projection over all rows and all heads: (B*S, D) @ (D, 3D).
    # The 1/sqrt(Dh) scale is already folded into the q columns of wqkv/bqkv.
    qkv = jnp.dot(x.astype(jnp.bfloat16), wqkv_ref[...],
                  preferred_element_type=jnp.float32) + bqkv_ref[...]

    av_rows = []
    for b in range(batch):                      # static unroll (tiny B, H)
        r0 = b * seq
        head_outs = []
        for h in range(nhead):
            c = h * Dh
            q = qkv[r0:r0 + seq, c:c + Dh].astype(jnp.bfloat16)
            k = qkv[r0:r0 + seq, D + c:D + c + Dh].astype(jnp.bfloat16)
            v = qkv[r0:r0 + seq, 2 * D + c:2 * D + c + Dh].astype(jnp.bfloat16)
            # q @ k^T without an explicit transpose (contract last dims).
            s = jax.lax.dot_general(q, k, (((1,), (1,)), ((), ())),
                                    preferred_element_type=jnp.float32)
            m = jnp.max(s, axis=-1, keepdims=True)
            e = jnp.exp(s - m)
            p = e * pl.reciprocal(jnp.sum(e, axis=-1, keepdims=True),
                                  approx=False)
            head_outs.append(jnp.dot(p.astype(jnp.bfloat16), v,
                                     preferred_element_type=jnp.float32))
        av_rows.append(jnp.concatenate(head_outs, axis=-1))    # (S, D)
    av = jnp.concatenate(av_rows, axis=0)                      # (B*S, D) f32

    attn = jnp.dot(av.astype(jnp.bfloat16), wo_ref[...],
                   preferred_element_type=jnp.float32) + bo_ref[...]
    y = _layer_norm_f32(x + attn, g1_ref[...], b1_ref[...])    # post-norm 1

    # --------------------------------- FFN -----------------------------------
    hdn = jnp.dot(y.astype(jnp.bfloat16), w1_ref[...],
                  preferred_element_type=jnp.float32) + bf1_ref[...]
    hdn = jnp.maximum(hdn, 0.0)                                 # ReLU
    z = y + jnp.dot(hdn.astype(jnp.bfloat16), w2_ref[...],
                    preferred_element_type=jnp.float32) + bf2_ref[...]
    z = _layer_norm_f32(z, g2_ref[...], b2_ref[...])            # post-norm 2

    act_ref[...] = z                                            # layer carry

    @pl.when(l == pl.num_programs(0) - 1)
    def _():
        out = z
        if has_final_norm:                       # static (trace-time) branch
            out = _layer_norm_f32(out, gf_ref[...], bfn_ref[...])
        o_ref[...] = out.astype(o_ref.dtype)


# ------------------------------ param preparation ----------------------------

def prepare_params(p, nhead, final_norm):
    """Cast matmul weights to bf16 once, pack QKV, and fold the attention
    scale into the q projection.  Weights are stored (in_features,
    out_features) so kernels compute x @ w."""
    D = p["norm1_g"].shape[0]
    Dh = D // nhead
    scale = 1.0 / math.sqrt(Dh)

    w_in = p["in_proj_w"]                      # (D, 3D), columns = [q | k | v]
    b_in = p["in_proj_b"]                      # (3D,)
    col_scale = jnp.concatenate([jnp.full((D,), scale, jnp.float32),
                                 jnp.ones((2 * D,), jnp.float32)])
    wqkv = (w_in * col_scale[None, :]).astype(jnp.bfloat16)
    bqkv = (b_in * col_scale).reshape(1, 3 * D)

    if final_norm is not None:
        gf = final_norm["g"].reshape(1, D)
        bfn = final_norm["b"].reshape(1, D)
    else:
        gf = jnp.ones((1, D), jnp.float32)
        bfn = jnp.zeros((1, D), jnp.float32)

    return dict(
        wqkv=wqkv, bqkv=bqkv,
        wo=p["out_proj_w"].astype(jnp.bfloat16),
        bo=p["out_proj_b"].reshape(1, D),
        g1=p["norm1_g"].reshape(1, D), b1=p["norm1_b"].reshape(1, D),
        w1=p["lin1_w"].astype(jnp.bfloat16), bf1=p["lin1_b"].reshape(1, -1),
        w2=p["lin2_w"].astype(jnp.bfloat16), bf2=p["lin2_b"].reshape(1, D),
        g2=p["norm2_g"].reshape(1, D), b2=p["norm2_b"].reshape(1, D),
        gf=gf, bfn=bfn,
    )


# --------------------------------- wrapper -----------------------------------

def transformer_encoder(src, layer_params, num_layers, nhead, final_norm=None):
    """TransformerEncoder.forward: num_layers identical (deep-copied) post-norm
    layers, then the optional final LayerNorm.  src: (S, B, D) -> (S, B, D).
    Whole stack runs in a single pallas_call."""
    S, B, D = src.shape
    assert D % nhead == 0
    BS = B * S
    pp = prepare_params(layer_params, nhead, final_norm)

    # One layout change for the whole stack: (S, B, D) -> (B*S, D).
    x2 = jnp.transpose(src, (1, 0, 2)).reshape(BS, D)

    order = ["wqkv", "bqkv", "wo", "bo", "g1", "b1",
             "w1", "bf1", "w2", "bf2", "g2", "b2", "gf", "bfn"]
    inputs = [x2] + [pp[k] for k in order]
    # Every block is the full (2-D) array with a constant index_map, so all
    # weights + activations stay VMEM-resident across the layer grid.
    in_specs = [pl.BlockSpec(a.shape, lambda l: (0, 0)) for a in inputs]

    kernel = functools.partial(
        _encoder_stack_kernel, nhead=nhead, batch=B, seq=S,
        has_final_norm=final_norm is not None)

    out = pl.pallas_call(
        kernel,
        out_shape=jax.ShapeDtypeStruct((BS, D), src.dtype),
        grid=(num_layers,),
        in_specs=in_specs,
        out_specs=pl.BlockSpec((BS, D), lambda l: (0, 0)),
        scratch_shapes=[pltpu.VMEM((BS, D), jnp.float32)],   # layer-carry acts
        compiler_params=pltpu.CompilerParams(
            dimension_semantics=("arbitrary",)),              # sequential layers
    )(*inputs)

    return jnp.transpose(out.reshape(B, S, D), (1, 0, 2))


# ------------------------------ param creation -------------------------------

def make_params(key, d_model, nhead, dim_ff):
    ks = jax.random.split(key, 6)

    def u(k, shape, bound):
        return jax.random.uniform(k, shape, jnp.float32, -bound, bound)

    xav = math.sqrt(6.0 / (d_model + 3 * d_model))
    p = {
        # stored transposed (in_features, out_features) so kernels do x @ w
        "in_proj_w":  u(ks[0], (d_model, 3 * d_model), xav),
        "in_proj_b":  jnp.zeros((3 * d_model,), jnp.float32),
        "out_proj_w": u(ks[1], (d_model, d_model), 1.0 / math.sqrt(d_model)),
        "out_proj_b": jnp.zeros((d_model,), jnp.float32),
        "lin1_w":     u(ks[2], (d_model, dim_ff), 1.0 / math.sqrt(d_model)),
        "lin1_b":     u(ks[3], (dim_ff,), 1.0 / math.sqrt(d_model)),
        "lin2_w":     u(ks[4], (dim_ff, d_model), 1.0 / math.sqrt(dim_ff)),
        "lin2_b":     u(ks[5], (d_model,), 1.0 / math.sqrt(dim_ff)),
        "norm1_g":    jnp.ones((d_model,), jnp.float32),
        "norm1_b":    jnp.zeros((d_model,), jnp.float32),
        "norm2_g":    jnp.ones((d_model,), jnp.float32),
        "norm2_b":    jnp.zeros((d_model,), jnp.float32),
    }
    final_norm = {"g": jnp.ones((d_model,), jnp.float32),
                  "b": jnp.zeros((d_model,), jnp.float32)}
    return p, final_norm


# ----------------------------------- main ------------------------------------

if __name__ == "__main__":
    # Lane-dense shapes: d_model and per-head dim are multiples of 128.
    S, B, D = 16, 2, 256        # seq, batch, d_model
    NHEAD = 2                   # per-head dim = 128
    DIM_FF = 512
    NUM_LAYERS = 2

    key = jax.random.PRNGKey(0)
    k_src, k_par = jax.random.split(key)
    src = jax.random.normal(k_src, (S, B, D), jnp.float32)

    layer_params, final_norm = make_params(k_par, D, NHEAD, DIM_FF)

    # TODO(synk): src_mask / key-padding-mask additive masking not wired in
    # (forward is exercised with mask=None, matching the default call).
    fwd = jax.jit(lambda s, p, fn: transformer_encoder(s, p, NUM_LAYERS,
                                                       NHEAD, fn))
    out = jax.block_until_ready(fwd(src, layer_params, final_norm))

    assert out.shape == (S, B, D) and out.dtype == jnp.float32
    assert bool(jnp.all(jnp.isfinite(out)))
    print("KERNEL_OK")
</pallas_src>

<mosaic_0001>
module attributes {stable_mosaic.version = 11 : i64} {
  func.func @_encoder_stack_kernel(%arg0: i32, %arg1: memref<32x256xf32, #tpu.memory_space<vmem>>, %arg2: memref<256x768xbf16, #tpu.memory_space<vmem>>, %arg3: memref<1x768xf32, #tpu.memory_space<vmem>>, %arg4: memref<256x256xbf16, #tpu.memory_space<vmem>>, %arg5: memref<1x256xf32, #tpu.memory_space<vmem>>, %arg6: memref<1x256xf32, #tpu.memory_space<vmem>>, %arg7: memref<1x256xf32, #tpu.memory_space<vmem>>, %arg8: memref<256x512xbf16, #tpu.memory_space<vmem>>, %arg9: memref<1x512xf32, #tpu.memory_space<vmem>>, %arg10: memref<512x256xbf16, #tpu.memory_space<vmem>>, %arg11: memref<1x256xf32, #tpu.memory_space<vmem>>, %arg12: memref<1x256xf32, #tpu.memory_space<vmem>>, %arg13: memref<1x256xf32, #tpu.memory_space<vmem>>, %arg14: memref<1x256xf32, #tpu.memory_space<vmem>>, %arg15: memref<1x256xf32, #tpu.memory_space<vmem>>, %arg16: memref<32x256xf32, #tpu.memory_space<vmem>>, %arg17: memref<32x256xf32, #tpu.memory_space<vmem>>) attributes {dimension_semantics = [#tpu.dimension_semantics<arbitrary>], iteration_bounds = array<i64: 2>, scalar_prefetch = 0 : i64, scratch_operands = 1 : i64, tpu.core_type = #tpu.core_type<tc>, window_params = [{pipeline_mode = #tpu.pipeline_mode<synchronous>, transform_indices = @transform_0, window_bounds = array<i64: 32, 256>}, {pipeline_mode = #tpu.pipeline_mode<synchronous>, transform_indices = @transform_1, window_bounds = array<i64: 256, 768>}, {pipeline_mode = #tpu.pipeline_mode<synchronous>, transform_indices = @transform_2, window_bounds = array<i64: 1, 768>}, {pipeline_mode = #tpu.pipeline_mode<synchronous>, transform_indices = @transform_3, window_bounds = array<i64: 256, 256>}, {pipeline_mode = #tpu.pipeline_mode<synchronous>, transform_indices = @transform_4, window_bounds = array<i64: 1, 256>}, {pipeline_mode = #tpu.pipeline_mode<synchronous>, transform_indices = @transform_5, window_bounds = array<i64: 1, 256>}, {pipeline_mode = #tpu.pipeline_mode<synchronous>, transform_indices = @transform_6, window_bounds = array<i64: 1, 256>}, {pipeline_mode = #tpu.pipeline_mode<synchronous>, transform_indices = @transform_7, window_bounds = array<i64: 256, 512>}, {pipeline_mode = #tpu.pipeline_mode<synchronous>, transform_indices = @transform_8, window_bounds = array<i64: 1, 512>}, {pipeline_mode = #tpu.pipeline_mode<synchronous>, transform_indices = @transform_9, window_bounds = array<i64: 512, 256>}, {pipeline_mode = #tpu.pipeline_mode<synchronous>, transform_indices = @transform_10, window_bounds = array<i64: 1, 256>}, {pipeline_mode = #tpu.pipeline_mode<synchronous>, transform_indices = @transform_11, window_bounds = array<i64: 1, 256>}, {pipeline_mode = #tpu.pipeline_mode<synchronous>, transform_indices = @transform_12, window_bounds = array<i64: 1, 256>}, {pipeline_mode = #tpu.pipeline_mode<synchronous>, transform_indices = @transform_13, window_bounds = array<i64: 1, 256>}, {pipeline_mode = #tpu.pipeline_mode<synchronous>, transform_indices = @transform_14, window_bounds = array<i64: 1, 256>}, {pipeline_mode = #tpu.pipeline_mode<synchronous>, transform_indices = @transform_15, window_bounds = array<i64: 32, 256>}]} {
    %c0_i32 = arith.constant 0 : i32
    %0 = arith.cmpi eq, %arg0, %c0_i32 : i32
    %1 = arith.extui %0 : i1 to i32
    %c0_i32_0 = arith.constant 0 : i32
    %2 = arith.cmpi ne, %1, %c0_i32_0 : i32
    scf.if %2 {
      %c0_59 = arith.constant 0 : index
      %c0_60 = arith.constant 0 : index
      %159 = vector.load %arg1[%c0_59, %c0_60] : memref<32x256xf32, #tpu.memory_space<vmem>>, vector<32x256xf32>
      %c0_61 = arith.constant 0 : index
      %c0_62 = arith.constant 0 : index
      %160 = vector.load %arg17[%c0_61, %c0_62] : memref<32x256xf32, #tpu.memory_space<vmem>>, vector<32x256xf32>
      tpu.vector_store %arg17[%c0_61, %c0_62], %159 {strides = array<i32>} : memref<32x256xf32, #tpu.memory_space<vmem>>, vector<32x256xf32>,
    } else {
    }
    %c0 = arith.constant 0 : index
    %c0_1 = arith.constant 0 : index
    %3 = vector.load %arg17[%c0, %c0_1] : memref<32x256xf32, #tpu.memory_space<vmem>>, vector<32x256xf32>
    %4 = arith.truncf %3 : vector<32x256xf32> to vector<32x256xbf16>
    %c0_2 = arith.constant 0 : index
    %c0_3 = arith.constant 0 : index
    %5 = vector.load %arg2[%c0_2, %c0_3] : memref<256x768xbf16, #tpu.memory_space<vmem>>, vector<256x768xbf16>
    %cst = arith.constant dense<0.000000e+00> : vector<32x768xf32>
    %6 = tpu.matmul %4, %5, %cst {dimension_numbers = #tpu.dot_dimension_numbers<[1], [0], [0], [1], [0, 0, 1, 1], [], []>} : vector<32x256xbf16>, vector<256x768xbf16>, vector<32x768xf32> -> vector<32x768xf32>
    %c0_4 = arith.constant 0 : index
    %c0_5 = arith.constant 0 : index
    %7 = vector.load %arg3[%c0_4, %c0_5] : memref<1x768xf32, #tpu.memory_space<vmem>>, vector<1x768xf32>
    %8 = vector.broadcast %7 : vector<1x768xf32> to vector<32x768xf32>
    %9 = arith.addf %6, %8 : vector<32x768xf32>
    %10 = vector.extract_strided_slice %9 {offsets = [0, 0], sizes = [16, 128], strides = [1, 1]} : vector<32x768xf32> to vector<16x128xf32>
    %11 = arith.truncf %10 : vector<16x128xf32> to vector<16x128xbf16>
    %12 = vector.extract_strided_slice %9 {offsets = [0, 256], sizes = [16, 128], strides = [1, 1]} : vector<32x768xf32> to vector<16x128xf32>
    %13 = arith.truncf %12 : vector<16x128xf32> to vector<16x128xbf16>
    %14 = vector.extract_strided_slice %9 {offsets = [0, 512], sizes = [16, 128], strides = [1, 1]} : vector<32x768xf32> to vector<16x128xf32>
    %15 = arith.truncf %14 : vector<16x128xf32> to vector<16x128xbf16>
    %cst_6 = arith.constant dense<0.000000e+00> : vector<16x16xf32>
    %16 = tpu.matmul %11, %13, %cst_6 {dimension_numbers = #tpu.dot_dimension_numbers<[1], [1], [0], [0], [0, 0, 1, 0], [], []>} : vector<16x128xbf16>, vector<16x128xbf16>, vector<16x16xf32> -> vector<16x16xf32>
    %cst_7 = arith.constant dense<0xFF800000> : vector<16xf32>
    %17 = vector.multi_reduction <maximumf>, %16, %cst_7 [1] : vector<16x16xf32> to vector<16xf32>
    %18 = vector.shape_cast %17 : vector<16xf32> to vector<16x1xf32>
    %19 = vector.broadcast %18 : vector<16x1xf32> to vector<16x16xf32>
    %20 = arith.subf %16, %19 : vector<16x16xf32>
    %21 = math.exp %20 : vector<16x16xf32>
    %cst_8 = arith.constant dense<0.000000e+00> : vector<16xf32>
    %22 = vector.multi_reduction <add>, %21, %cst_8 [1] : vector<16x16xf32> to vector<16xf32>
    %23 = vector.shape_cast %22 : vector<16xf32> to vector<16x1xf32>
    %24 = tpu.reciprocal %23 : vector<16x1xf32> -> vector<16x1xf32>
    %25 = vector.broadcast %24 : vector<16x1xf32> to vector<16x16xf32>
    %26 = arith.mulf %21, %25 : vector<16x16xf32>
    %27 = arith.truncf %26 : vector<16x16xf32> to vector<16x16xbf16>
    %cst_9 = arith.constant dense<0.000000e+00> : vector<16x128xf32>
    %28 = tpu.matmul %27, %15, %cst_9 {dimension_numbers = #tpu.dot_dimension_numbers<[1], [0], [0], [1], [0, 0, 1, 1], [], []>} : vector<16x16xbf16>, vector<16x128xbf16>, vector<16x128xf32> -> vector<16x128xf32>
    %29 = vector.extract_strided_slice %9 {offsets = [0, 128], sizes = [16, 128], strides = [1, 1]} : vector<32x768xf32> to vector<16x128xf32>
    %30 = arith.truncf %29 : vector<16x128xf32> to vector<16x128xbf16>
    %31 = vector.extract_strided_slice %9 {offsets = [0, 384], sizes = [16, 128], strides = [1, 1]} : vector<32x768xf32> to vector<16x128xf32>
    %32 = arith.truncf %31 : vector<16x128xf32> to vector<16x128xbf16>
    %33 = vector.extract_strided_slice %9 {offsets = [0, 640], sizes = [16, 128], strides = [1, 1]} : vector<32x768xf32> to vector<16x128xf32>
    %34 = arith.truncf %33 : vector<16x128xf32> to vector<16x128xbf16>
    %cst_10 = arith.constant dense<0.000000e+00> : vector<16x16xf32>
    %35 = tpu.matmul %30, %32, %cst_10 {dimension_numbers = #tpu.dot_dimension_numbers<[1], [1], [0], [0], [0, 0, 1, 0], [], []>} : vector<16x128xbf16>, vector<16x128xbf16>, vector<16x16xf32> -> vector<16x16xf32>
    %cst_11 = arith.constant dense<0xFF800000> : vector<16xf32>
    %36 = vector.multi_reduction <maximumf>, %35, %cst_11 [1] : vector<16x16xf32> to vector<16xf32>
    %37 = vector.shape_cast %36 : vector<16xf32> to vector<16x1xf32>
    %38 = vector.broadcast %37 : vector<16x1xf32> to vector<16x16xf32>
    %39 = arith.subf %35, %38 : vector<16x16xf32>
    %40 = math.exp %39 : vector<16x16xf32>
    %cst_12 = arith.constant dense<0.000000e+00> : vector<16xf32>
    %41 = vector.multi_reduction <add>, %40, %cst_12 [1] : vector<16x16xf32> to vector<16xf32>
    %42 = vector.shape_cast %41 : vector<16xf32> to vector<16x1xf32>
    %43 = tpu.reciprocal %42 : vector<16x1xf32> -> vector<16x1xf32>
    %44 = vector.broadcast %43 : vector<16x1xf32> to vector<16x16xf32>
    %45 = arith.mulf %40, %44 : vector<16x16xf32>
    %46 = arith.truncf %45 : vector<16x16xf32> to vector<16x16xbf16>
    %cst_13 = arith.constant dense<0.000000e+00> : vector<16x128xf32>
    %47 = tpu.matmul %46, %34, %cst_13 {dimension_numbers = #tpu.dot_dimension_numbers<[1], [0], [0], [1], [0, 0, 1, 1], [], []>} : vector<16x16xbf16>, vector<16x128xbf16>, vector<16x128xf32> -> vector<16x128xf32>
    %48 = tpu.concatenate %28, %47 in 1 : vector<16x128xf32>, vector<16x128xf32> -> vector<16x256xf32>
    %49 = vector.extract_strided_slice %9 {offsets = [16, 0], sizes = [16, 128], strides = [1, 1]} : vector<32x768xf32> to vector<16x128xf32>
    %50 = arith.truncf %49 : vector<16x128xf32> to vector<16x128xbf16>
    %51 = vector.extract_strided_slice %9 {offsets = [16, 256], sizes = [16, 128], strides = [1, 1]} : vector<32x768xf32> to vector<16x128xf32>
    %52 = arith.truncf %51 : vector<16x128xf32> to vector<16x128xbf16>
    %53 = vector.extract_strided_slice %9 {offsets = [16, 512], sizes = [16, 128], strides = [1, 1]} : vector<32x768xf32> to vector<16x128xf32>
    %54 = arith.truncf %53 : vector<16x128xf32> to vector<16x128xbf16>
    %cst_14 = arith.constant dense<0.000000e+00> : vector<16x16xf32>
    %55 = tpu.matmul %50, %52, %cst_14 {dimension_numbers = #tpu.dot_dimension_numbers<[1], [1], [0], [0], [0, 0, 1, 0], [], []>} : vector<16x128xbf16>, vector<16x128xbf16>, vector<16x16xf32> -> vector<16x16xf32>
    %cst_15 = arith.constant dense<0xFF800000> : vector<16xf32>
    %56 = vector.multi_reduction <maximumf>, %55, %cst_15 [1] : vector<16x16xf32> to vector<16xf32>
    %57 = vector.shape_cast %56 : vector<16xf32> to vector<16x1xf32>
    %58 = vector.broadcast %57 : vector<16x1xf32> to vector<16x16xf32>
    %59 = arith.subf %55, %58 : vector<16x16xf32>
    %60 = math.exp %59 : vector<16x16xf32>
    %cst_16 = arith.constant dense<0.000000e+00> : vector<16xf32>
    %61 = vector.multi_reduction <add>, %60, %cst_16 [1] : vector<16x16xf32> to vector<16xf32>
    %62 = vector.shape_cast %61 : vector<16xf32> to vector<16x1xf32>
    %63 = tpu.reciprocal %62 : vector<16x1xf32> -> vector<16x1xf32>
    %64 = vector.broadcast %63 : vector<16x1xf32> to vector<16x16xf32>
    %65 = arith.mulf %60, %64 : vector<16x16xf32>
    %66 = arith.truncf %65 : vector<16x16xf32> to vector<16x16xbf16>
    %cst_17 = arith.constant dense<0.000000e+00> : vector<16x128xf32>
    %67 = tpu.matmul %66, %54, %cst_17 {dimension_numbers = #tpu.dot_dimension_numbers<[1], [0], [0], [1], [0, 0, 1, 1], [], []>} : vector<16x16xbf16>, vector<16x128xbf16>, vector<16x128xf32> -> vector<16x128xf32>
    %68 = vector.extract_strided_slice %9 {offsets = [16, 128], sizes = [16, 128], strides = [1, 1]} : vector<32x768xf32> to vector<16x128xf32>
    %69 = arith.truncf %68 : vector<16x128xf32> to vector<16x128xbf16>
    %70 = vector.extract_strided_slice %9 {offsets = [16, 384], sizes = [16, 128], strides = [1, 1]} : vector<32x768xf32> to vector<16x128xf32>
    %71 = arith.truncf %70 : vector<16x128xf32> to vector<16x128xbf16>
    %72 = vector.extract_strided_slice %9 {offsets = [16, 640], sizes = [16, 128], strides = [1, 1]} : vector<32x768xf32> to vector<16x128xf32>
    %73 = arith.truncf %72 : vector<16x128xf32> to vector<16x128xbf16>
    %cst_18 = arith.constant dense<0.000000e+00> : vector<16x16xf32>
    %74 = tpu.matmul %69, %71, %cst_18 {dimension_numbers = #tpu.dot_dimension_numbers<[1], [1], [0], [0], [0, 0, 1, 0], [], []>} : vector<16x128xbf16>, vector<16x128xbf16>, vector<16x16xf32> -> vector<16x16xf32>
    %cst_19 = arith.constant dense<0xFF800000> : vector<16xf32>
    %75 = vector.multi_reduction <maximumf>, %74, %cst_19 [1] : vector<16x16xf32> to vector<16xf32>
    %76 = vector.shape_cast %75 : vector<16xf32> to vector<16x1xf32>
    %77 = vector.broadcast %76 : vector<16x1xf32> to vector<16x16xf32>
    %78 = arith.subf %74, %77 : vector<16x16xf32>
    %79 = math.exp %78 : vector<16x16xf32>
    %cst_20 = arith.constant dense<0.000000e+00> : vector<16xf32>
    %80 = vector.multi_reduction <add>, %79, %cst_20 [1] : vector<16x16xf32> to vector<16xf32>
    %81 = vector.shape_cast %80 : vector<16xf32> to vector<16x1xf32>
    %82 = tpu.reciprocal %81 : vector<16x1xf32> -> vector<16x1xf32>
    %83 = vector.broadcast %82 : vector<16x1xf32> to vector<16x16xf32>
    %84 = arith.mulf %79, %83 : vector<16x16xf32>
    %85 = arith.truncf %84 : vector<16x16xf32> to vector<16x16xbf16>
    %cst_21 = arith.constant dense<0.000000e+00> : vector<16x128xf32>
    %86 = tpu.matmul %85, %73, %cst_21 {dimension_numbers = #tpu.dot_dimension_numbers<[1], [0], [0], [1], [0, 0, 1, 1], [], []>} : vector<16x16xbf16>, vector<16x128xbf16>, vector<16x128xf32> -> vector<16x128xf32>
    %87 = tpu.concatenate %67, %86 in 1 : vector<16x128xf32>, vector<16x128xf32> -> vector<16x256xf32>
    %88 = tpu.concatenate %48, %87 in 0 : vector<16x256xf32>, vector<16x256xf32> -> vector<32x256xf32>
    %89 = arith.truncf %88 : vector<32x256xf32> to vector<32x256xbf16>
    %c0_22 = arith.constant 0 : index
    %c0_23 = arith.constant 0 : index
    %90 = vector.load %arg4[%c0_22, %c0_23] : memref<256x256xbf16, #tpu.memory_space<vmem>>, vector<256x256xbf16>
    %cst_24 = arith.constant dense<0.000000e+00> : vector<32x256xf32>
    %91 = tpu.matmul %89, %90, %cst_24 {dimension_numbers = #tpu.dot_dimension_numbers<[1], [0], [0], [1], [0, 0, 1, 1], [], []>} : vector<32x256xbf16>, vector<256x256xbf16>, vector<32x256xf32> -> vector<32x256xf32>
    %c0_25 = arith.constant 0 : index
    %c0_26 = arith.constant 0 : index
    %92 = vector.load %arg5[%c0_25, %c0_26] : memref<1x256xf32, #tpu.memory_space<vmem>>, vector<1x256xf32>
    %93 = vector.broadcast %92 : vector<1x256xf32> to vector<32x256xf32>
    %94 = arith.addf %91, %93 : vector<32x256xf32>
    %95 = arith.addf %3, %94 : vector<32x256xf32>
    %c0_27 = arith.constant 0 : index
    %c0_28 = arith.constant 0 : index
    %96 = vector.load %arg6[%c0_27, %c0_28] : memref<1x256xf32, #tpu.memory_space<vmem>>, vector<1x256xf32>
    %c0_29 = arith.constant 0 : index
    %c0_30 = arith.constant 0 : index
    %97 = vector.load %arg7[%c0_29, %c0_30] : memref<1x256xf32, #tpu.memory_space<vmem>>, vector<1x256xf32>
    %cst_31 = arith.constant dense<0.000000e+00> : vector<32xf32>
    %98 = vector.multi_reduction <add>, %95, %cst_31 [1] : vector<32x256xf32> to vector<32xf32>
    %99 = vector.shape_cast %98 : vector<32xf32> to vector<32x1xf32>
    %cst_32 = arith.constant 2.560000e+02 : f32
    %100 = vector.broadcast %cst_32 : f32 to vector<32x1xf32>
    %101 = arith.divf %99, %100 : vector<32x1xf32>
    %102 = vector.broadcast %101 : vector<32x1xf32> to vector<32x256xf32>
    %103 = arith.subf %95, %102 : vector<32x256xf32>
    %104 = arith.mulf %103, %103 : vector<32x256xf32>
    %cst_33 = arith.constant dense<0.000000e+00> : vector<32xf32>
    %105 = vector.multi_reduction <add>, %104, %cst_33 [1] : vector<32x256xf32> to vector<32xf32>
    %106 = vector.shape_cast %105 : vector<32xf32> to vector<32x1xf32>
    %cst_34 = arith.constant 2.560000e+02 : f32
    %107 = vector.broadcast %cst_34 : f32 to vector<32x1xf32>
    %108 = arith.divf %106, %107 : vector<32x1xf32>
    %cst_35 = arith.constant 9.99999974E-6 : f32
    %109 = vector.broadcast %cst_35 : f32 to vector<32x1xf32>
    %110 = arith.addf %108, %109 : vector<32x1xf32>
    %111 = math.rsqrt %110 : vector<32x1xf32>
    %112 = vector.broadcast %111 : vector<32x1xf32> to vector<32x256xf32>
    %113 = arith.mulf %103, %112 : vector<32x256xf32>
    %114 = vector.broadcast %96 : vector<1x256xf32> to vector<32x256xf32>
    %115 = arith.mulf %113, %114 : vector<32x256xf32>
    %116 = vector.broadcast %97 : vector<1x256xf32> to vector<32x256xf32>
    %117 = arith.addf %115, %116 : vector<32x256xf32>
    %118 = arith.truncf %117 : vector<32x256xf32> to vector<32x256xbf16>
    %c0_36 = arith.constant 0 : index
    %c0_37 = arith.constant 0 : index
    %119 = vector.load %arg8[%c0_36, %c0_37] : memref<256x512xbf16, #tpu.memory_space<vmem>>, vector<256x512xbf16>
    %cst_38 = arith.constant dense<0.000000e+00> : vector<32x512xf32>
    %120 = tpu.matmul %118, %119, %cst_38 {dimension_numbers = #tpu.dot_dimension_numbers<[1], [0], [0], [1], [0, 0, 1, 1], [], []>} : vector<32x256xbf16>, vector<256x512xbf16>, vector<32x512xf32> -> vector<32x512xf32>
    %c0_39 = arith.constant 0 : index
    %c0_40 = arith.constant 0 : index
    %121 = vector.load %arg9[%c0_39, %c0_40] : memref<1x512xf32, #tpu.memory_space<vmem>>, vector<1x512xf32>
    %122 = vector.broadcast %121 : vector<1x512xf32> to vector<32x512xf32>
    %123 = arith.addf %120, %122 : vector<32x512xf32>
    %cst_41 = arith.constant 0.000000e+00 : f32
    %124 = vector.broadcast %cst_41 : f32 to vector<32x512xf32>
    %125 = arith.maximumf %123, %124 : vector<32x512xf32>
    %126 = arith.truncf %125 : vector<32x512xf32> to vector<32x512xbf16>
    %c0_42 = arith.constant 0 : index
    %c0_43 = arith.constant 0 : index
    %127 = vector.load %arg10[%c0_42, %c0_43] : memref<512x256xbf16, #tpu.memory_space<vmem>>, vector<512x256xbf16>
    %cst_44 = arith.constant dense<0.000000e+00> : vector<32x256xf32>
    %128 = tpu.matmul %126, %127, %cst_44 {dimension_numbers = #tpu.dot_dimension_numbers<[1], [0], [0], [1], [0, 0, 1, 1], [], []>} : vector<32x512xbf16>, vector<512x256xbf16>, vector<32x256xf32> -> vector<32x256xf32>
    %129 = arith.addf %117, %128 : vector<32x256xf32>
    %c0_45 = arith.constant 0 : index
    %c0_46 = arith.constant 0 : index
    %130 = vector.load %arg11[%c0_45, %c0_46] : memref<1x256xf32, #tpu.memory_space<vmem>>, vector<1x256xf32>
    %131 = vector.broadcast %130 : vector<1x256xf32> to vector<32x256xf32>
    %132 = arith.addf %129, %131 : vector<32x256xf32>
    %c0_47 = arith.constant 0 : index
    %c0_48 = arith.constant 0 : index
    %133 = vector.load %arg12[%c0_47, %c0_48] : memref<1x256xf32, #tpu.memory_space<vmem>>, vector<1x256xf32>
    %c0_49 = arith.constant 0 : index
    %c0_50 = arith.constant 0 : index
    %134 = vector.load %arg13[%c0_49, %c0_50] : memref<1x256xf32, #tpu.memory_space<vmem>>, vector<1x256xf32>
    %cst_51 = arith.constant dense<0.000000e+00> : vector<32xf32>
    %135 = vector.multi_reduction <add>, %132, %cst_51 [1] : vector<32x256xf32> to vector<32xf32>
    %136 = vector.shape_cast %135 : vector<32xf32> to vector<32x1xf32>
    %cst_52 = arith.constant 2.560000e+02 : f32
    %137 = vector.broadcast %cst_52 : f32 to vector<32x1xf32>
    %138 = arith.divf %136, %137 : vector<32x1xf32>
    %139 = vector.broadcast %138 : vector<32x1xf32> to vector<32x256xf32>
    %140 = arith.subf %132, %139 : vector<32x256xf32>
    %141 = arith.mulf %140, %140 : vector<32x256xf32>
    %cst_53 = arith.constant dense<0.000000e+00> : vector<32xf32>
    %142 = vector.multi_reduction <add>, %141, %cst_53 [1] : vector<32x256xf32> to vector<32xf32>
    %143 = vector.shape_cast %142 : vector<32xf32> to vector<32x1xf32>
    %cst_54 = arith.constant 2.560000e+02 : f32
    %144 = vector.broadcast %cst_54 : f32 to vector<32x1xf32>
    %145 = arith.divf %143, %144 : vector<32x1xf32>
    %cst_55 = arith.constant 9.99999974E-6 : f32
    %146 = vector.broadcast %cst_55 : f32 to vector<32x1xf32>
    %147 = arith.addf %145, %146 : vector<32x1xf32>
    %148 = math.rsqrt %147 : vector<32x1xf32>
    %149 = vector.broadcast %148 : vector<32x1xf32> to vector<32x256xf32>
    %150 = arith.mulf %140, %149 : vector<32x256xf32>
    %151 = vector.broadcast %133 : vector<1x256xf32> to vector<32x256xf32>
    %152 = arith.mulf %150, %151 : vector<32x256xf32>
    %153 = vector.broadcast %134 : vector<1x256xf32> to vector<32x256xf32>
    %154 = arith.addf %152, %153 : vector<32x256xf32>
    %c0_56 = arith.constant 0 : index
    %c0_57 = arith.constant 0 : index
    %155 = vector.load %arg17[%c0_56, %c0_57] : memref<32x256xf32, #tpu.memory_space<vmem>>, vector<32x256xf32>
    tpu.vector_store %arg17[%c0_56, %c0_57], %154 {strides = array<i32>} : memref<32x256xf32, #tpu.memory_space<vmem>>, vector<32x256xf32>,
    %c1_i32 = arith.constant 1 : i32
    %156 = arith.cmpi eq, %arg0, %c1_i32 : i32
    %157 = arith.extui %156 : i1 to i32
    %c0_i32_58 = arith.constant 0 : i32
    %158 = arith.cmpi ne, %157, %c0_i32_58 : i32
    scf.if %158 {
      %c0_59 = arith.constant 0 : index
      %c0_60 = arith.constant 0 : index
      %159 = vector.load %arg14[%c0_59, %c0_60] : memref<1x256xf32, #tpu.memory_space<vmem>>, vector<1x256xf32>
      %c0_61 = arith.constant 0 : index
      %c0_62 = arith.constant 0 : index
      %160 = vector.load %arg15[%c0_61, %c0_62] : memref<1x256xf32, #tpu.memory_space<vmem>>, vector<1x256xf32>
      %cst_63 = arith.constant dense<0.000000e+00> : vector<32xf32>
      %161 = vector.multi_reduction <add>, %154, %cst_63 [1] : vector<32x256xf32> to vector<32xf32>
      %162 = vector.shape_cast %161 : vector<32xf32> to vector<32x1xf32>
      %cst_64 = arith.constant 2.560000e+02 : f32
      %163 = vector.broadcast %cst_64 : f32 to vector<32x1xf32>
      %164 = arith.divf %162, %163 : vector<32x1xf32>
      %165 = vector.broadcast %164 : vector<32x1xf32> to vector<32x256xf32>
      %166 = arith.subf %154, %165 : vector<32x256xf32>
      %167 = arith.mulf %166, %166 : vector<32x256xf32>
      %cst_65 = arith.constant dense<0.000000e+00> : vector<32xf32>
      %168 = vector.multi_reduction <add>, %167, %cst_65 [1] : vector<32x256xf32> to vector<32xf32>
      %169 = vector.shape_cast %168 : vector<32xf32> to vector<32x1xf32>
      %cst_66 = arith.constant 2.560000e+02 : f32
      %170 = vector.broadcast %cst_66 : f32 to vector<32x1xf32>
      %171 = arith.divf %169, %170 : vector<32x1xf32>
      %cst_67 = arith.constant 9.99999974E-6 : f32
      %172 = vector.broadcast %cst_67 : f32 to vector<32x1xf32>
      %173 = arith.addf %171, %172 : vector<32x1xf32>
      %174 = math.rsqrt %173 : vector<32x1xf32>
      %175 = vector.broadcast %174 : vector<32x1xf32> to vector<32x256xf32>
      %176 = arith.mulf %166, %175 : vector<32x256xf32>
      %177 = vector.broadcast %159 : vector<1x256xf32> to vector<32x256xf32>
      %178 = arith.mulf %176, %177 : vector<32x256xf32>
      %179 = vector.broadcast %160 : vector<1x256xf32> to vector<32x256xf32>
      %180 = arith.addf %178, %179 : vector<32x256xf32>
      %c0_68 = arith.constant 0 : index
      %c0_69 = arith.constant 0 : index
      %181 = vector.load %arg16[%c0_68, %c0_69] : memref<32x256xf32, #tpu.memory_space<vmem>>, vector<32x256xf32>
      tpu.vector_store %arg16[%c0_68, %c0_69], %180 {strides = array<i32>} : memref<32x256xf32, #tpu.memory_space<vmem>>, vector<32x256xf32>,
    } else {
    }
    return
  }
  func.func @transform_0(%arg0: i32) -> (i32, i32) {
    %c0_i32 = arith.constant 0 : i32
    %c0_i32_0 = arith.constant 0 : i32
    %c0_i32_1 = arith.constant 0 : i32
    return %c0_i32, %c0_i32_0 : i32, i32
  }
  func.func @transform_1(%arg0: i32) -> (i32, i32) {
    %c0_i32 = arith.constant 0 : i32
    %c0_i32_0 = arith.constant 0 : i32
    %c0_i32_1 = arith.constant 0 : i32
    return %c0_i32, %c0_i32_0 : i32, i32
  }
  func.func @transform_2(%arg0: i32) -> (i32, i32) {
    %c0_i32 = arith.constant 0 : i32
    %c0_i32_0 = arith.constant 0 : i32
    %c0_i32_1 = arith.constant 0 : i32
    return %c0_i32, %c0_i32_0 : i32, i32
  }
  func.func @transform_3(%arg0: i32) -> (i32, i32) {
    %c0_i32 = arith.constant 0 : i32
    %c0_i32_0 = arith.constant 0 : i32
    %c0_i32_1 = arith.constant 0 : i32
    return %c0_i32, %c0_i32_0 : i32, i32
  }
  func.func @transform_4(%arg0: i32) -> (i32, i32) {
    %c0_i32 = arith.constant 0 : i32
    %c0_i32_0 = arith.constant 0 : i32
    %c0_i32_1 = arith.constant 0 : i32
    return %c0_i32, %c0_i32_0 : i32, i32
  }
  func.func @transform_5(%arg0: i32) -> (i32, i32) {
    %c0_i32 = arith.constant 0 : i32
    %c0_i32_0 = arith.constant 0 : i32
    %c0_i32_1 = arith.constant 0 : i32
    return %c0_i32, %c0_i32_0 : i32, i32
  }
  func.func @transform_6(%arg0: i32) -> (i32, i32) {
    %c0_i32 = arith.constant 0 : i32
    %c0_i32_0 = arith.constant 0 : i32
    %c0_i32_1 = arith.constant 0 : i32
    return %c0_i32, %c0_i32_0 : i32, i32
  }
  func.func @transform_7(%arg0: i32) -> (i32, i32) {
    %c0_i32 = arith.constant 0 : i32
    %c0_i32_0 = arith.constant 0 : i32
    %c0_i32_1 = arith.constant 0 : i32
    return %c0_i32, %c0_i32_0 : i32, i32
  }
  func.func @transform_8(%arg0: i32) -> (i32, i32) {
    %c0_i32 = arith.constant 0 : i32
    %c0_i32_0 = arith.constant 0 : i32
    %c0_i32_1 = arith.constant 0 : i32
    return %c0_i32, %c0_i32_0 : i32, i32
  }
  func.func @transform_9(%arg0: i32) -> (i32, i32) {
    %c0_i32 = arith.constant 0 : i32
    %c0_i32_0 = arith.constant 0 : i32
    %c0_i32_1 = arith.constant 0 : i32
    return %c0_i32, %c0_i32_0 : i32, i32
  }
  func.func @transform_10(%arg0: i32) -> (i32, i32) {
    %c0_i32 = arith.constant 0 : i32
    %c0_i32_0 = arith.constant 0 : i32
    %c0_i32_1 = arith.constant 0 : i32
    return %c0_i32, %c0_i32_0 : i32, i32
  }
  func.func @transform_11(%arg0: i32) -> (i32, i32) {
    %c0_i32 = arith.constant 0 : i32
    %c0_i32_0 = arith.constant 0 : i32
    %c0_i32_1 = arith.constant 0 : i32
    return %c0_i32, %c0_i32_0 : i32, i32
  }
  func.func @transform_12(%arg0: i32) -> (i32, i32) {
    %c0_i32 = arith.constant 0 : i32
    %c0_i32_0 = arith.constant 0 : i32
    %c0_i32_1 = arith.constant 0 : i32
    return %c0_i32, %c0_i32_0 : i32, i32
  }
  func.func @transform_13(%arg0: i32) -> (i32, i32) {
    %c0_i32 = arith.constant 0 : i32
    %c0_i32_0 = arith.constant 0 : i32
    %c0_i32_1 = arith.constant 0 : i32
    return %c0_i32, %c0_i32_0 : i32, i32
  }
  func.func @transform_14(%arg0: i32) -> (i32, i32) {
    %c0_i32 = arith.constant 0 : i32
    %c0_i32_0 = arith.constant 0 : i32
    %c0_i32_1 = arith.constant 0 : i32
    return %c0_i32, %c0_i32_0 : i32, i32
  }
  func.func @transform_15(%arg0: i32) -> (i32, i32) {
    %c0_i32 = arith.constant 0 : i32
    %c0_i32_0 = arith.constant 0 : i32
    %c0_i32_1 = arith.constant 0 : i32
    return %c0_i32, %c0_i32_0 : i32, i32
  }
}

</mosaic_0001>

<llo_original>
// kernel: mul.9
$region0: #{mul.9}
  #allocation2 [shape = 's32[1]{0}', space=sflag, size = 0x4, scoped, tag = 'scoped memory for mul.9']
  %s0 = inlined_call_operand.hbm [shape: f32[768], index: 0, kind: input, shape index: {}]
  %s1 = inlined_call_operand.vmem [shape: f32[768], index: 1, kind: input, shape index: {}]
  %s2 = inlined_call_operand.vmem [shape: f32[768], index: 2, kind: output, shape index: {}]
  $region1: #{mul.9} parent=0
    #allocation0 [shape = 'u8[4096]{0}', space=vmem, size = 0x1000, scoped, tag = 'operand span for operand 0']
    #allocation1 [shape = 's32[1]{0}', space=sflag, size = 0x4, scoped, tag = 'scoped memory for mul.9']
    %3 = vsyncpa [#allocation1], 0
    %s5 = ssub.s32 128, 128
    %6 = vsyncadd [#allocation1], %s5
    %s8 = sshll.u32 [#allocation0], 4
    %s9 = int_to_ptr.vmem [resolvable:$true] %s8
    %11 = dma.hbm_to_vmem [thread:$0]  %s0, 128, %s9, [#allocation1]
    %12 = dma.done [#allocation1], 128
    %v13 = vld [vmem:[#allocation0] sm:$0x3f]
    %v14 = vld [vmem:[%s1] sm:$0x3f]
    %15 = xla_tuple %v13, %v14
    %16 = xla_tuple %15
    %v17 = vmul.f32 %v13, %v14
    %18 = xla_tuple %v17
    %19 = vst [vmem:[%s2] sm:$0xff] %v17
    %20 = vsyncpa [#allocation1], 1

// kernel: _lambda_.1
$region0: #{_lambda_.1}
  #allocation0 [shape = 'u32[]', space=smem, size = 0x4, offset = 0x4, fixed_abs, tag = 'smem constant byte address 0x4 - core index']
  #allocation1 [shape = 'u32[144,128]{1,0:T(1,128)}', space=vmem, size = 0x12000, scoped, tag = 'internal scratch']
  #allocation2 [shape = 'f32[32,256]{1,0:T(8,128)}', space=vmem, size = 0x8000, scoped, tag = 'scratch operand']
  %s0 = inlined_call_operand.vmem [shape: f32[32,256], index: 0, kind: input, shape index: {}]
  %s1 = inlined_call_operand.vmem [shape: bf16[256,768], index: 1, kind: input, shape index: {}]
  %s2 = inlined_call_operand.vmem [shape: f32[1,768], index: 2, kind: input, shape index: {}]
  %s3 = inlined_call_operand.vmem [shape: bf16[256,256], index: 3, kind: input, shape index: {}]
  %s4 = inlined_call_operand.vmem [shape: f32[1,256], index: 4, kind: input, shape index: {}]
  %s5 = inlined_call_operand.vmem [shape: f32[1,256], index: 5, kind: input, shape index: {}]
  %s6 = inlined_call_operand.vmem [shape: f32[1,256], index: 6, kind: input, shape index: {}]
  %s7 = inlined_call_operand.vmem [shape: bf16[256,512], index: 7, kind: input, shape index: {}]
  %s8 = inlined_call_operand.vmem [shape: f32[1,512], index: 8, kind: input, shape index: {}]
  %s9 = inlined_call_operand.vmem [shape: bf16[512,256], index: 9, kind: input, shape index: {}]
  %s10 = inlined_call_operand.vmem [shape: f32[1,256], index: 10, kind: input, shape index: {}]
  %s11 = inlined_call_operand.vmem [shape: f32[1,256], index: 11, kind: input, shape index: {}]
  %s12 = inlined_call_operand.vmem [shape: f32[1,256], index: 12, kind: input, shape index: {}]
  %s13 = inlined_call_operand.vmem [shape: f32[1,256], index: 13, kind: input, shape index: {}]
  %s14 = inlined_call_operand.vmem [shape: f32[1,256], index: 14, kind: input, shape index: {}]
  %s15 = inlined_call_operand.vmem [shape: f32[32,256], index: 15, kind: output, shape index: {}]
  %s16 = sld [smem:[#allocation0]]
  $region101: #{_lambda_.1} parent=0
    _
  %s18 = ssub.s32 1, %s16
  %s19 = scalar_select 0, %s18, %s16
  loop: start=0, step=1, limit=4
  $region2: #{_lambda_.1} parent=0 // loop_pre_header
    _
  $region3: #{_lambda_.1} parent=0 // loop_header
    %s21 = sphi 0, %s25
    %p22 = scmp.ge.s32.totalorder %s21, 4
    %s29 = sphi 0, %s29
    %s31 = sphi 0, %s29
    %s32 = sphi 0, %s31
    %s46 = sphi 0, %s32
    %s50 = sphi 0, %s50
    %s52 = sphi 0, %s50
    %s53 = sphi 0, %s52
    %s67 = sphi 0, %s53
    %s71 = sphi 0, %s71
    %s73 = sphi 0, %s71
    %s74 = sphi 0, %s73
    %s88 = sphi 0, %s74
    %s92 = sphi 0, %s92
    %s94 = sphi 0, %s92
    %s95 = sphi 0, %s94
    %s109 = sphi 0, %s95
    %s113 = sphi 0, %s113
    %s115 = sphi 0, %s113
    %s116 = sphi 0, %s115
    %s130 = sphi 0, %s116
    %s134 = sphi 0, %s134
    %s136 = sphi 0, %s134
    %s137 = sphi 0, %s136
    %s151 = sphi 0, %s137
    %s155 = sphi 0, %s155
    %s157 = sphi 0, %s155
    %s158 = sphi 0, %s157
    %s172 = sphi 0, %s158
    %s176 = sphi 0, %s176
    %s178 = sphi 0, %s176
    %s179 = sphi 0, %s178
    %s193 = sphi 0, %s179
    %s197 = sphi 0, %s197
    %s199 = sphi 0, %s197
    %s200 = sphi 0, %s199
    %s214 = sphi 0, %s200
    %s218 = sphi 0, %s218
    %s220 = sphi 0, %s218
    %s221 = sphi 0, %s220
    %s235 = sphi 0, %s221
    %s239 = sphi 0, %s239
    %s241 = sphi 0, %s239
    %s242 = sphi 0, %s241
    %s256 = sphi 0, %s242
    %s260 = sphi 0, %s260
    %s262 = sphi 0, %s260
    %s263 = sphi 0, %s262
    %s277 = sphi 0, %s263
    %s281 = sphi 0, %s281
    %s283 = sphi 0, %s281
    %s284 = sphi 0, %s283
    %s298 = sphi 0, %s284
    %s302 = sphi 0, %s302
    %s304 = sphi 0, %s302
    %s305 = sphi 0, %s304
    %s319 = sphi 0, %s305
    %s323 = sphi 0, %s323
    %s325 = sphi 0, %s323
    %s326 = sphi 0, %s325
    %s340 = sphi 0, %s326
    %s344 = sphi 0, %s344
    %s346 = sphi 0, %s344
    %s347 = sphi 0, %s346
    %s361 = sphi 0, %s347
  $region4: #{_lambda_.1} parent=0 // loop_header_branch
    %24 = sbr.rel (%p22) target = $region8
  $region5: #{_lambda_.1} parent=0 // loop_body
    %s26 = ssub.s32 %s21, 1
    %s27 = ssub.s32 %s21, 2
    %s28 = sadd.s32 %s21, 1
    %s30 = sadd.s32 %s29, 1
    %p33 = scmp.eq.s32.totalorder %s21, 1
    %p34 = scmp.ne.s32.totalorder %s29, %s31
    %p35 = scmp.eq.s32.totalorder %s21, 0
    %p36 = por %p34, %p35
    %p37 = scmp.ne.s32.totalorder %s29, %s31
    %p38 = scmp.eq.s32.totalorder %s26, 1
    %p39 = por %p37, %p38
    %p40 = scmp.ne.s32.totalorder %s31, %s32
    %p41 = scmp.eq.s32.totalorder %s26, 0
    %p42 = por %p40, %p41
    %p43 = scmp.ne.s32.totalorder %s31, %s32
    %p44 = scmp.eq.s32.totalorder %s27, 1
    %p45 = por %p43, %p44
    %p47 = scmp.ne.s32.totalorder %s32, %s46
    %p48 = scmp.eq.s32.totalorder %s27, 0
    %p49 = por %p47, %p48
    %s51 = sadd.s32 %s50, 1
    %p54 = scmp.eq.s32.totalorder %s21, 1
    %p55 = scmp.ne.s32.totalorder %s50, %s52
    %p56 = scmp.eq.s32.totalorder %s21, 0
    %p57 = por %p55, %p56
    %p58 = scmp.ne.s32.totalorder %s50, %s52
    %p59 = scmp.eq.s32.totalorder %s26, 1
    %p60 = por %p58, %p59
    %p61 = scmp.ne.s32.totalorder %s52, %s53
    %p62 = scmp.eq.s32.totalorder %s26, 0
    %p63 = por %p61, %p62
    %p64 = scmp.ne.s32.totalorder %s52, %s53
    %p65 = scmp.eq.s32.totalorder %s27, 1
    %p66 = por %p64, %p65
    %p68 = scmp.ne.s32.totalorder %s53, %s67
    %p69 = scmp.eq.s32.totalorder %s27, 0
    %p70 = por %p68, %p69
    %s72 = sadd.s32 %s71, 1
    %p75 = scmp.eq.s32.totalorder %s21, 1
    %p76 = scmp.ne.s32.totalorder %s71, %s73
    %p77 = scmp.eq.s32.totalorder %s21, 0
    %p78 = por %p76, %p77
    %p79 = scmp.ne.s32.totalorder %s71, %s73
    %p80 = scmp.eq.s32.totalorder %s26, 1
    %p81 = por %p79, %p80
    %p82 = scmp.ne.s32.totalorder %s73, %s74
    %p83 = scmp.eq.s32.totalorder %s26, 0
    %p84 = por %p82, %p83
    %p85 = scmp.ne.s32.totalorder %s73, %s74
    %p86 = scmp.eq.s32.totalorder %s27, 1
    %p87 = por %p85, %p86
    %p89 = scmp.ne.s32.totalorder %s74, %s88
    %p90 = scmp.eq.s32.totalorder %s27, 0
    %p91 = por %p89, %p90
    %s93 = sadd.s32 %s92, 1
    %p96 = scmp.eq.s32.totalorder %s21, 1
    %p97 = scmp.ne.s32.totalorder %s92, %s94
    %p98 = scmp.eq.s32.totalorder %s21, 0
    %p99 = por %p97, %p98
    %p100 = scmp.ne.s32.totalorder %s92, %s94
    %p101 = scmp.eq.s32.totalorder %s26, 1
    %p102 = por %p100, %p101
    %p103 = scmp.ne.s32.totalorder %s94, %s95
    %p104 = scmp.eq.s32.totalorder %s26, 0
    %p105 = por %p103, %p104
    %p106 = scmp.ne.s32.totalorder %s94, %s95
    %p107 = scmp.eq.s32.totalorder %s27, 1
    %p108 = por %p106, %p107
    %p110 = scmp.ne.s32.totalorder %s95, %s109
    %p111 = scmp.eq.s32.totalorder %s27, 0
    %p112 = por %p110, %p111
    %s114 = sadd.s32 %s113, 1
    %p117 = scmp.eq.s32.totalorder %s21, 1
    %p118 = scmp.ne.s32.totalorder %s113, %s115
    %p119 = scmp.eq.s32.totalorder %s21, 0
    %p120 = por %p118, %p119
    %p121 = scmp.ne.s32.totalorder %s113, %s115
    %p122 = scmp.eq.s32.totalorder %s26, 1
    %p123 = por %p121, %p122
    %p124 = scmp.ne.s32.totalorder %s115, %s116
    %p125 = scmp.eq.s32.totalorder %s26, 0
    %p126 = por %p124, %p125
    %p127 = scmp.ne.s32.totalorder %s115, %s116
    %p128 = scmp.eq.s32.totalorder %s27, 1
    %p129 = por %p127, %p128
    %p131 = scmp.ne.s32.totalorder %s116, %s130
    %p132 = scmp.eq.s32.totalorder %s27, 0
    %p133 = por %p131, %p132
    %s135 = sadd.s32 %s134, 1
    %p138 = scmp.eq.s32.totalorder %s21, 1
    %p139 = scmp.ne.s32.totalorder %s134, %s136
    %p140 = scmp.eq.s32.totalorder %s21, 0
    %p141 = por %p139, %p140
    %p142 = scmp.ne.s32.totalorder %s134, %s136
    %p143 = scmp.eq.s32.totalorder %s26, 1
    %p144 = por %p142, %p143
    %p145 = scmp.ne.s32.totalorder %s136, %s137
    %p146 = scmp.eq.s32.totalorder %s26, 0
    %p147 = por %p145, %p146
    %p148 = scmp.ne.s32.totalorder %s136, %s137
    %p149 = scmp.eq.s32.totalorder %s27, 1
    %p150 = por %p148, %p149
    %p152 = scmp.ne.s32.totalorder %s137, %s151
    %p153 = scmp.eq.s32.totalorder %s27, 0
    %p154 = por %p152, %p153
    %s156 = sadd.s32 %s155, 1
    %p159 = scmp.eq.s32.totalorder %s21, 1
    %p160 = scmp.ne.s32.totalorder %s155, %s157
    %p161 = scmp.eq.s32.totalorder %s21, 0
    %p162 = por %p160, %p161
    %p163 = scmp.ne.s32.totalorder %s155, %s157
    %p164 = scmp.eq.s32.totalorder %s26, 1
    %p165 = por %p163, %p164
    %p166 = scmp.ne.s32.totalorder %s157, %s158
    %p167 = scmp.eq.s32.totalorder %s26, 0
    %p168 = por %p166, %p167
    %p169 = scmp.ne.s32.totalorder %s157, %s158
    %p170 = scmp.eq.s32.totalorder %s27, 1
    %p171 = por %p169, %p170
    %p173 = scmp.ne.s32.totalorder %s158, %s172
    %p174 = scmp.eq.s32.totalorder %s27, 0
    %p175 = por %p173, %p174
    %s177 = sadd.s32 %s176, 1
    %p180 = scmp.eq.s32.totalorder %s21, 1
    %p181 = scmp.ne.s32.totalorder %s176, %s178
    %p182 = scmp.eq.s32.totalorder %s21, 0
    %p183 = por %p181, %p182
    %p184 = scmp.ne.s32.totalorder %s176, %s178
    %p185 = scmp.eq.s32.totalorder %s26, 1
    %p186 = por %p184, %p185
    %p187 = scmp.ne.s32.totalorder %s178, %s179
    %p188 = scmp.eq.s32.totalorder %s26, 0
    %p189 = por %p187, %p188
    %p190 = scmp.ne.s32.totalorder %s178, %s179
    %p191 = scmp.eq.s32.totalorder %s27, 1
    %p192 = por %p190, %p191
    %p194 = scmp.ne.s32.totalorder %s179, %s193
    %p195 = scmp.eq.s32.totalorder %s27, 0
    %p196 = por %p194, %p195
    %s198 = sadd.s32 %s197, 1
    %p201 = scmp.eq.s32.totalorder %s21, 1
    %p202 = scmp.ne.s32.totalorder %s197, %s199
    %p203 = scmp.eq.s32.totalorder %s21, 0
    %p204 = por %p202, %p203
    %p205 = scmp.ne.s32.totalorder %s197, %s199
    %p206 = scmp.eq.s32.totalorder %s26, 1
    %p207 = por %p205, %p206
    %p208 = scmp.ne.s32.totalorder %s199, %s200
    %p209 = scmp.eq.s32.totalorder %s26, 0
    %p210 = por %p208, %p209
    %p211 = scmp.ne.s32.totalorder %s199, %s200
    %p212 = scmp.eq.s32.totalorder %s27, 1
    %p213 = por %p211, %p212
    %p215 = scmp.ne.s32.totalorder %s200, %s214
    %p216 = scmp.eq.s32.totalorder %s27, 0
    %p217 = por %p215, %p216
    %s219 = sadd.s32 %s218, 1
    %p222 = scmp.eq.s32.totalorder %s21, 1
    %p223 = scmp.ne.s32.totalorder %s218, %s220
    %p224 = scmp.eq.s32.totalorder %s21, 0
    %p225 = por %p223, %p224
    %p226 = scmp.ne.s32.totalorder %s218, %s220
    %p227 = scmp.eq.s32.totalorder %s26, 1
    %p228 = por %p226, %p227
    %p229 = scmp.ne.s32.totalorder %s220, %s221
    %p230 = scmp.eq.s32.totalorder %s26, 0
    %p231 = por %p229, %p230
    %p232 = scmp.ne.s32.totalorder %s220, %s221
    %p233 = scmp.eq.s32.totalorder %s27, 1
    %p234 = por %p232, %p233
    %p236 = scmp.ne.s32.totalorder %s221, %s235
    %p237 = scmp.eq.s32.totalorder %s27, 0
    %p238 = por %p236, %p237
    %s240 = sadd.s32 %s239, 1
    %p243 = scmp.eq.s32.totalorder %s21, 1
    %p244 = scmp.ne.s32.totalorder %s239, %s241
    %p245 = scmp.eq.s32.totalorder %s21, 0
    %p246 = por %p244, %p245
    %p247 = scmp.ne.s32.totalorder %s239, %s241
    %p248 = scmp.eq.s32.totalorder %s26, 1
    %p249 = por %p247, %p248
    %p250 = scmp.ne.s32.totalorder %s241, %s242
    %p251 = scmp.eq.s32.totalorder %s26, 0
    %p252 = por %p250, %p251
    %p253 = scmp.ne.s32.totalorder %s241, %s242
    %p254 = scmp.eq.s32.totalorder %s27, 1
    %p255 = por %p253, %p254
    %p257 = scmp.ne.s32.totalorder %s242, %s256
    %p258 = scmp.eq.s32.totalorder %s27, 0
    %p259 = por %p257, %p258
    %s261 = sadd.s32 %s260, 1
    %p264 = scmp.eq.s32.totalorder %s21, 1
    %p265 = scmp.ne.s32.totalorder %s260, %s262
    %p266 = scmp.eq.s32.totalorder %s21, 0
    %p267 = por %p265, %p266
    %p268 = scmp.ne.s32.totalorder %s260, %s262
    %p269 = scmp.eq.s32.totalorder %s26, 1
    %p270 = por %p268, %p269
    %p271 = scmp.ne.s32.totalorder %s262, %s263
    %p272 = scmp.eq.s32.totalorder %s26, 0
    %p273 = por %p271, %p272
    %p274 = scmp.ne.s32.totalorder %s262, %s263
    %p275 = scmp.eq.s32.totalorder %s27, 1
    %p276 = por %p274, %p275
    %p278 = scmp.ne.s32.totalorder %s263, %s277
    %p279 = scmp.eq.s32.totalorder %s27, 0
    %p280 = por %p278, %p279
    %s282 = sadd.s32 %s281, 1
    %p285 = scmp.eq.s32.totalorder %s21, 1
    %p286 = scmp.ne.s32.totalorder %s281, %s283
    %p287 = scmp.eq.s32.totalorder %s21, 0
    %p288 = por %p286, %p287
    %p289 = scmp.ne.s32.totalorder %s281, %s283
    %p290 = scmp.eq.s32.totalorder %s26, 1
    %p291 = por %p289, %p290
    %p292 = scmp.ne.s32.totalorder %s283, %s284
    %p293 = scmp.eq.s32.totalorder %s26, 0
    %p294 = por %p292, %p293
    %p295 = scmp.ne.s32.totalorder %s283, %s284
    %p296 = scmp.eq.s32.totalorder %s27, 1
    %p297 = por %p295, %p296
    %p299 = scmp.ne.s32.totalorder %s284, %s298
    %p300 = scmp.eq.s32.totalorder %s27, 0
    %p301 = por %p299, %p300
    %s303 = sadd.s32 %s302, 1
    %p306 = scmp.eq.s32.totalorder %s21, 1
    %p307 = scmp.ne.s32.totalorder %s302, %s304
    %p308 = scmp.eq.s32.totalorder %s21, 0
    %p309 = por %p307, %p308
    %p310 = scmp.ne.s32.totalorder %s302, %s304
    %p311 = scmp.eq.s32.totalorder %s26, 1
    %p312 = por %p310, %p311
    %p313 = scmp.ne.s32.totalorder %s304, %s305
    %p314 = scmp.eq.s32.totalorder %s26, 0
    %p315 = por %p313, %p314
    %p316 = scmp.ne.s32.totalorder %s304, %s305
    %p317 = scmp.eq.s32.totalorder %s27, 1
    %p318 = por %p316, %p317
    %p320 = scmp.ne.s32.totalorder %s305, %s319
    %p321 = scmp.eq.s32.totalorder %s27, 0
    %p322 = por %p320, %p321
    %s324 = sadd.s32 %s323, 1
    %p327 = scmp.eq.s32.totalorder %s21, 1
    %p328 = scmp.ne.s32.totalorder %s323, %s325
    %p329 = scmp.eq.s32.totalorder %s21, 0
    %p330 = por %p328, %p329
    %p331 = scmp.ne.s32.totalorder %s323, %s325
    %p332 = scmp.eq.s32.totalorder %s26, 1
    %p333 = por %p331, %p332
    %p334 = scmp.ne.s32.totalorder %s325, %s326
    %p335 = scmp.eq.s32.totalorder %s26, 0
    %p336 = por %p334, %p335
    %p337 = scmp.ne.s32.totalorder %s325, %s326
    %p338 = scmp.eq.s32.totalorder %s27, 1
    %p339 = por %p337, %p338
    %p341 = scmp.ne.s32.totalorder %s326, %s340
    %p342 = scmp.eq.s32.totalorder %s27, 0
    %p343 = por %p341, %p342
    %s345 = sadd.s32 %s344, 1
    %p348 = scmp.eq.s32.totalorder %s21, 1
    %p349 = scmp.ne.s32.totalorder %s344, %s346
    %p350 = scmp.eq.s32.totalorder %s21, 0
    %p351 = por %p349, %p350
    %p352 = scmp.ne.s32.totalorder %s344, %s346
    %p353 = scmp.eq.s32.totalorder %s26, 1
    %p354 = por %p352, %p353
    %p355 = scmp.ne.s32.totalorder %s346, %s347
    %p356 = scmp.eq.s32.totalorder %s26, 0
    %p357 = por %p355, %p356
    %p358 = scmp.ne.s32.totalorder %s346, %s347
    %p359 = scmp.eq.s32.totalorder %s27, 1
    %p360 = por %p358, %p359
    %p362 = scmp.ne.s32.totalorder %s347, %s361
    %p363 = scmp.eq.s32.totalorder %s27, 0
    %p364 = por %p362, %p363
    %p365 = scmp.le.s32.totalorder 1, %s21
    %p366 = scmp.lt.s32.totalorder %s21, 3
    %p367 = pnand %p365, %p366
    %p368 = pneg %p367
    // Predicated region
    $region9: #{_lambda_.1} parent=5 // pred_check
      _
    $region10: #{_lambda_.1} parent=5 // pred_check_branch
      %370 = sbr.rel (%p367) target = $region12
    $region11: #{_lambda_.1} parent=5 // pred_region
      %s371 = ssub.s32 %s21, 1
      // Predicated region
      $region13: #{_lambda_.1} parent=11 // pred_check
        %p372 = pneg %p42
      $region14: #{_lambda_.1} parent=11 // pred_check_branch
        %374 = sbr.rel (%p372) target = $region16
      $region15: #{_lambda_.1} parent=11 // pred_region
        _
      $region16: #{_lambda_.1} parent=11 // pred_fallthru
        _
      // Predicated region
      $region17: #{_lambda_.1} parent=11 // pred_check
        %p375 = pneg %p63
      $region18: #{_lambda_.1} parent=11 // pred_check_branch
        %377 = sbr.rel (%p375) target = $region20
      $region19: #{_lambda_.1} parent=11 // pred_region
        _
      $region20: #{_lambda_.1} parent=11 // pred_fallthru
        _
      // Predicated region
      $region21: #{_lambda_.1} parent=11 // pred_check
        %p378 = pneg %p84
      $region22: #{_lambda_.1} parent=11 // pred_check_branch
        %380 = sbr.rel (%p378) target = $region24
      $region23: #{_lambda_.1} parent=11 // pred_region
        _
      $region24: #{_lambda_.1} parent=11 // pred_fallthru
        _
      // Predicated region
      $region25: #{_lambda_.1} parent=11 // pred_check
        %p381 = pneg %p105
      $region26: #{_lambda_.1} parent=11 // pred_check_branch
        %383 = sbr.rel (%p381) target = $region28
      $region27: #{_lambda_.1} parent=11 // pred_region
        _
      $region28: #{_lambda_.1} parent=11 // pred_fallthru
        _
      // Predicated region
      $region29: #{_lambda_.1} parent=11 // pred_check
        %p384 = pneg %p126
      $region30: #{_lambda_.1} parent=11 // pred_check_branch
        %386 = sbr.rel (%p384) target = $region32
      $region31: #{_lambda_.1} parent=11 // pred_region
        _
      $region32: #{_lambda_.1} parent=11 // pred_fallthru
        _
      // Predicated region
      $region33: #{_lambda_.1} parent=11 // pred_check
        %p387 = pneg %p147
      $region34: #{_lambda_.1} parent=11 // pred_check_branch
        %389 = sbr.rel (%p387) target = $region36
      $region35: #{_lambda_.1} parent=11 // pred_region
        _
      $region36: #{_lambda_.1} parent=11 // pred_fallthru
        _
      // Predicated region
      $region37: #{_lambda_.1} parent=11 // pred_check
        %p390 = pneg %p168
      $region38: #{_lambda_.1} parent=11 // pred_check_branch
        %392 = sbr.rel (%p390) target = $region40
      $region39: #{_lambda_.1} parent=11 // pred_region
        _
      $region40: #{_lambda_.1} parent=11 // pred_fallthru
        _
      // Predicated region
      $region41: #{_lambda_.1} parent=11 // pred_check
        %p393 = pneg %p189
      $region42: #{_lambda_.1} parent=11 // pred_check_branch
        %395 = sbr.rel (%p393) target = $region44
      $region43: #{_lambda_.1} parent=11 // pred_region
        _
      $region44: #{_lambda_.1} parent=11 // pred_fallthru
        _
      // Predicated region
      $region45: #{_lambda_.1} parent=11 // pred_check
        %p396 = pneg %p210
      $region46: #{_lambda_.1} parent=11 // pred_check_branch
        %398 = sbr.rel (%p396) target = $region48
      $region47: #{_lambda_.1} parent=11 // pred_region
        _
      $region48: #{_lambda_.1} parent=11 // pred_fallthru
        _
      // Predicated region
      $region49: #{_lambda_.1} parent=11 // pred_check
        %p399 = pneg %p231
      $region50: #{_lambda_.1} parent=11 // pred_check_branch
        %401 = sbr.rel (%p399) target = $region52
      $region51: #{_lambda_.1} parent=11 // pred_region
        _
      $region52: #{_lambda_.1} parent=11 // pred_fallthru
        _
      // Predicated region
      $region53: #{_lambda_.1} parent=11 // pred_check
        %p402 = pneg %p252
      $region54: #{_lambda_.1} parent=11 // pred_check_branch
        %404 = sbr.rel (%p402) target = $region56
      $region55: #{_lambda_.1} parent=11 // pred_region
        _
      $region56: #{_lambda_.1} parent=11 // pred_fallthru
        _
      // Predicated region
      $region57: #{_lambda_.1} parent=11 // pred_check
        %p405 = pneg %p273
      $region58: #{_lambda_.1} parent=11 // pred_check_branch
        %407 = sbr.rel (%p405) target = $region60
      $region59: #{_lambda_.1} parent=11 // pred_region
        _
      $region60: #{_lambda_.1} parent=11 // pred_fallthru
        _
      // Predicated region
      $region61: #{_lambda_.1} parent=11 // pred_check
        %p408 = pneg %p294
      $region62: #{_lambda_.1} parent=11 // pred_check_branch
        %410 = sbr.rel (%p408) target = $region64
      $region63: #{_lambda_.1} parent=11 // pred_region
        _
      $region64: #{_lambda_.1} parent=11 // pred_fallthru
        _
      // Predicated region
      $region65: #{_lambda_.1} parent=11 // pred_check
        %p411 = pneg %p315
      $region66: #{_lambda_.1} parent=11 // pred_check_branch
        %413 = sbr.rel (%p411) target = $region68
      $region67: #{_lambda_.1} parent=11 // pred_region
        _
      $region68: #{_lambda_.1} parent=11 // pred_fallthru
        _
      // Predicated region
      $region69: #{_lambda_.1} parent=11 // pred_check
        %p414 = pneg %p336
      $region70: #{_lambda_.1} parent=11 // pred_check_branch
        %416 = sbr.rel (%p414) target = $region72
      $region71: #{_lambda_.1} parent=11 // pred_region
        _
      $region72: #{_lambda_.1} parent=11 // pred_fallthru
        _
    $region12: #{_lambda_.1} parent=5 // pred_fallthru
      _
    %p417 = scmp.lt.s32.totalorder %s21, 2
    // Predicated region
    $region73: #{_lambda_.1} parent=5 // pred_check
      %p418 = pneg %p417
    $region74: #{_lambda_.1} parent=5 // pred_check_branch
      %420 = sbr.rel (%p418) target = $region76
    $region75: #{_lambda_.1} parent=5 // pred_region
      _
    $region76: #{_lambda_.1} parent=5 // pred_fallthru
      _
    %p421 = scmp.le.s32.totalorder 1, %s21
    %p422 = scmp.lt.s32.totalorder %s21, 3
    %p423 = pnand %p421, %p422
    %p424 = pneg %p423
    // Predicated region
    $region77: #{_lambda_.1} parent=5 // pred_check
      _
    $region78: #{_lambda_.1} parent=5 // pred_check_branch
      %426 = sbr.rel (%p423) target = $region80
    $region79: #{_lambda_.1} parent=5 // pred_region
      %s427 = ssub.s32 %s21, 1
      %p428 = pneg %p42
      %p429 = pneg %p39
      %p430 = pneg %p63
      %p431 = pneg %p60
      %p432 = pneg %p84
      %p433 = pneg %p81
      %p434 = pneg %p105
      %p435 = pneg %p102
      %p436 = pneg %p126
      %p437 = pneg %p123
      %p438 = pneg %p147
      %p439 = pneg %p144
      %p440 = pneg %p168
      %p441 = pneg %p165
      %p442 = pneg %p189
      %p443 = pneg %p186
      %p444 = pneg %p210
      %p445 = pneg %p207
      %p446 = pneg %p231
      %p447 = pneg %p228
      %p448 = pneg %p252
      %p449 = pneg %p249
      %p450 = pneg %p273
      %p451 = pneg %p270
      %p452 = pneg %p294
      %p453 = pneg %p291
      %p454 = pneg %p315
      %p455 = pneg %p312
      %p456 = pneg %p336
      %p457 = pneg %p333
      %p458 = pneg %p357
      %p459 = pneg %p354
      %p461 = scmp.eq.s32.totalorder %s26, 0
      // Predicated region
      $region81: #{_lambda_.1} parent=79 // pred_check
        %p462 = pneg %p461
      $region82: #{_lambda_.1} parent=79 // pred_check_branch
        %464 = sbr.rel (%p462) target = $region84
      $region83: #{_lambda_.1} parent=79 // pred_region
        %v465 = vld [vmem:[%s0] sm:$0xff]
        %v466 = vld [vmem:[%s0 + $0x8] sm:$0xff]
        %v467 = vld [vmem:[%s0 + $0x10] sm:$0xff]
        %v468 = vld [vmem:[%s0 + $0x18] sm:$0xff]
        %v469 = vld [vmem:[%s0 + $0x20] sm:$0xff]
        %v470 = vld [vmem:[%s0 + $0x28] sm:$0xff]
        %v471 = vld [vmem:[%s0 + $0x30] sm:$0xff]
        %v472 = vld [vmem:[%s0 + $0x38] sm:$0xff]
        %473 = vst [vmem:[#allocation2] sm:$0xff] %v465
        %474 = vst [vmem:[#allocation2 + $0x8] sm:$0xff] %v466
        %475 = vst [vmem:[#allocation2 + $0x10] sm:$0xff] %v467
        %476 = vst [vmem:[#allocation2 + $0x18] sm:$0xff] %v468
        %477 = vst [vmem:[#allocation2 + $0x20] sm:$0xff] %v469
        %478 = vst [vmem:[#allocation2 + $0x28] sm:$0xff] %v470
        %479 = vst [vmem:[#allocation2 + $0x30] sm:$0xff] %v471
        %480 = vst [vmem:[#allocation2 + $0x38] sm:$0xff] %v472
      $region84: #{_lambda_.1} parent=79 // pred_fallthru
        _
      %v481 = vld [vmem:[#allocation2] sm:$0xff]
      %v482 = vld [vmem:[#allocation2 + $0x8] sm:$0xff]
      %v483 = vld [vmem:[#allocation2 + $0x10] sm:$0xff]
      %v484 = vld [vmem:[#allocation2 + $0x18] sm:$0xff]
      %v485 = vld [vmem:[#allocation2 + $0x20] sm:$0xff]
      %v486 = vld [vmem:[#allocation2 + $0x28] sm:$0xff]
      %v487 = vld [vmem:[#allocation2 + $0x30] sm:$0xff]
      %v488 = vld [vmem:[#allocation2 + $0x38] sm:$0xff]
      %v489 = vpack.c.bf16 %v483, %v481
      %v490 = vpack.c.bf16 %v484, %v482
      %v491 = vpack.c.bf16 %v487, %v485
      %v492 = vpack.c.bf16 %v488, %v486
      %v493 = vld [vmem:[%s1] sm:$0xff]
      %v494 = vld [vmem:[%s1 + $0x8] sm:$0xff]
      %v495 = vld [vmem:[%s1 + $0x10] sm:$0xff]
      %v496 = vld [vmem:[%s1 + $0x18] sm:$0xff]
      %v497 = vld [vmem:[%s1 + $0x20] sm:$0xff]
      %v498 = vld [vmem:[%s1 + $0x28] sm:$0xff]
      %v499 = vld [vmem:[%s1 + $0x30] sm:$0xff]
      %v500 = vld [vmem:[%s1 + $0x38] sm:$0xff]
      %v501 = vld [vmem:[%s1 + $0x40] sm:$0xff]
      %v502 = vld [vmem:[%s1 + $0x48] sm:$0xff]
      %v503 = vld [vmem:[%s1 + $0x50] sm:$0xff]
      %v504 = vld [vmem:[%s1 + $0x58] sm:$0xff]
      %v505 = vld [vmem:[%s1 + $0x60] sm:$0xff]
      %v506 = vld [vmem:[%s1 + $0x68] sm:$0xff]
      %v507 = vld [vmem:[%s1 + $0x70] sm:$0xff]
      %v508 = vld [vmem:[%s1 + $0x78] sm:$0xff]
      %v509 = vld [vmem:[%s1 + $0x80] sm:$0xff]
      %v510 = vld [vmem:[%s1 + $0x88] sm:$0xff]
      %v511 = vld [vmem:[%s1 + $0x90] sm:$0xff]
      %v512 = vld [vmem:[%s1 + $0x98] sm:$0xff]
      %v513 = vld [vmem:[%s1 + $0xa0] sm:$0xff]
      %v514 = vld [vmem:[%s1 + $0xa8] sm:$0xff]
      %v515 = vld [vmem:[%s1 + $0xb0] sm:$0xff]
      %v516 = vld [vmem:[%s1 + $0xb8] sm:$0xff]
      %v517 = vld [vmem:[%s1 + $0xc0] sm:$0xff]
      %v518 = vld [vmem:[%s1 + $0xc8] sm:$0xff]
      %v519 = vld [vmem:[%s1 + $0xd0] sm:$0xff]
      %v520 = vld [vmem:[%s1 + $0xd8] sm:$0xff]
      %v521 = vld [vmem:[%s1 + $0xe0] sm:$0xff]
      %v522 = vld [vmem:[%s1 + $0xe8] sm:$0xff]
      %v523 = vld [vmem:[%s1 + $0xf0] sm:$0xff]
      %v524 = vld [vmem:[%s1 + $0xf8] sm:$0xff]
      %v525 = vld [vmem:[%s1 + $0x100] sm:$0xff]
      %v526 = vld [vmem:[%s1 + $0x108] sm:$0xff]
      %v527 = vld [vmem:[%s1 + $0x110] sm:$0xff]
      %v528 = vld [vmem:[%s1 + $0x118] sm:$0xff]
      %v529 = vld [vmem:[%s1 + $0x120] sm:$0xff]
      %v530 = vld [vmem:[%s1 + $0x128] sm:$0xff]
      %v531 = vld [vmem:[%s1 + $0x130] sm:$0xff]
      %v532 = vld [vmem:[%s1 + $0x138] sm:$0xff]
      %v533 = vld [vmem:[%s1 + $0x140] sm:$0xff]
      %v534 = vld [vmem:[%s1 + $0x148] sm:$0xff]
      %v535 = vld [vmem:[%s1 + $0x150] sm:$0xff]
      %v536 = vld [vmem:[%s1 + $0x158] sm:$0xff]
      %v537 = vld [vmem:[%s1 + $0x160] sm:$0xff]
      %v538 = vld [vmem:[%s1 + $0x168] sm:$0xff]
      %v539 = vld [vmem:[%s1 + $0x170] sm:$0xff]
      %v540 = vld [vmem:[%s1 + $0x178] sm:$0xff]
      %v541 = vld [vmem:[%s1 + $0x180] sm:$0xff]
      %v542 = vld [vmem:[%s1 + $0x188] sm:$0xff]
      %v543 = vld [vmem:[%s1 + $0x190] sm:$0xff]
      %v544 = vld [vmem:[%s1 + $0x198] sm:$0xff]
      %v545 = vld [vmem:[%s1 + $0x1a0] sm:$0xff]
      %v546 = vld [vmem:[%s1 + $0x1a8] sm:$0xff]
      %v547 = vld [vmem:[%s1 + $0x1b0] sm:$0xff]
      %v548 = vld [vmem:[%s1 + $0x1b8] sm:$0xff]
      %v549 = vld [vmem:[%s1 + $0x1c0] sm:$0xff]
      %v550 = vld [vmem:[%s1 + $0x1c8] sm:$0xff]
      %v551 = vld [vmem:[%s1 + $0x1d0] sm:$0xff]
      %v552 = vld [vmem:[%s1 + $0x1d8] sm:$0xff]
      %v553 = vld [vmem:[%s1 + $0x1e0] sm:$0xff]
      %v554 = vld [vmem:[%s1 + $0x1e8] sm:$0xff]
      %v555 = vld [vmem:[%s1 + $0x1f0] sm:$0xff]
      %v556 = vld [vmem:[%s1 + $0x1f8] sm:$0xff]
      %v557 = vld [vmem:[%s1 + $0x200] sm:$0xff]
      %v558 = vld [vmem:[%s1 + $0x208] sm:$0xff]
      %v559 = vld [vmem:[%s1 + $0x210] sm:$0xff]
      %v560 = vld [vmem:[%s1 + $0x218] sm:$0xff]
      %v561 = vld [vmem:[%s1 + $0x220] sm:$0xff]
      %v562 = vld [vmem:[%s1 + $0x228] sm:$0xff]
      %v563 = vld [vmem:[%s1 + $0x230] sm:$0xff]
      %v564 = vld [vmem:[%s1 + $0x238] sm:$0xff]
      %v565 = vld [vmem:[%s1 + $0x240] sm:$0xff]
      %v566 = vld [vmem:[%s1 + $0x248] sm:$0xff]
      %v567 = vld [vmem:[%s1 + $0x250] sm:$0xff]
      %v568 = vld [vmem:[%s1 + $0x258] sm:$0xff]
      %v569 = vld [vmem:[%s1 + $0x260] sm:$0xff]
      %v570 = vld [vmem:[%s1 + $0x268] sm:$0xff]
      %v571 = vld [vmem:[%s1 + $0x270] sm:$0xff]
      %v572 = vld [vmem:[%s1 + $0x278] sm:$0xff]
      %v573 = vld [vmem:[%s1 + $0x280] sm:$0xff]
      %v574 = vld [vmem:[%s1 + $0x288] sm:$0xff]
      %v575 = vld [vmem:[%s1 + $0x290] sm:$0xff]
      %v576 = vld [vmem:[%s1 + $0x298] sm:$0xff]
      %v577 = vld [vmem:[%s1 + $0x2a0] sm:$0xff]
      %v578 = vld [vmem:[%s1 + $0x2a8] sm:$0xff]
      %v579 = vld [vmem:[%s1 + $0x2b0] sm:$0xff]
      %v580 = vld [vmem:[%s1 + $0x2b8] sm:$0xff]
      %v581 = vld [vmem:[%s1 + $0x2c0] sm:$0xff]
      %v582 = vld [vmem:[%s1 + $0x2c8] sm:$0xff]
      %v583 = vld [vmem:[%s1 + $0x2d0] sm:$0xff]
      %v584 = vld [vmem:[%s1 + $0x2d8] sm:$0xff]
      %v585 = vld [vmem:[%s1 + $0x2e0] sm:$0xff]
      %v586 = vld [vmem:[%s1 + $0x2e8] sm:$0xff]
      %v587 = vld [vmem:[%s1 + $0x2f0] sm:$0xff]
      %v588 = vld [vmem:[%s1 + $0x2f8] sm:$0xff]
      %v589 = vld [vmem:[%s2] sm:$0x3f]
      %v591 = vlaneseq
      %v592 = vshrl.u32 %v591, 7
      %v593 = vsub.s32 0, %v592
      %v594 = vrot.slane %v589, %v593
      %v595 = vlaneseq
      %v596 = vshrl.u32 %v595, 7
      %v597 = vsub.s32 1, %v596
      %v598 = vrot.slane %v589, %v597
      %v599 = vlaneseq
      %v600 = vshrl.u32 %v599, 7
      %v601 = vsub.s32 2, %v600
      %v602 = vrot.slane %v589, %v601
      %v603 = vlaneseq
      %v604 = vshrl.u32 %v603, 7
      %v605 = vsub.s32 3, %v604
      %v606 = vrot.slane %v589, %v605
      %v607 = vlaneseq
      %v608 = vshrl.u32 %v607, 7
      %v609 = vsub.s32 4, %v608
      %v610 = vrot.slane %v589, %v609
      %v611 = vlaneseq
      %v612 = vshrl.u32 %v611, 7
      %v613 = vsub.s32 5, %v612
      %v614 = vrot.slane %v589, %v613
      %v717 = vunpack.c.l.b16 %v493
      %v718 = vunpack.c.h.b16 %v493
      %v719 = vunpack.c.l.b16 %v494
      %v720 = vunpack.c.h.b16 %v494
      %v721 = vunpack.c.l.b16 %v495
      %v722 = vunpack.c.h.b16 %v495
      %v723 = vunpack.c.l.b16 %v496
      %v724 = vunpack.c.h.b16 %v496
      %v725 = vunpack.c.l.b16 %v497
      %v726 = vunpack.c.h.b16 %v497
      %v727 = vunpack.c.l.b16 %v498
      %v728 = vunpack.c.h.b16 %v498
      %v729 = vunpack.c.l.b16 %v499
      %v730 = vunpack.c.h.b16 %v499
      %v731 = vunpack.c.l.b16 %v500
      %v732 = vunpack.c.h.b16 %v500
      %v733 = vunpack.c.l.b16 %v501
      %v734 = vunpack.c.h.b16 %v501
      %v735 = vunpack.c.l.b16 %v502
      %v736 = vunpack.c.h.b16 %v502
      %v737 = vunpack.c.l.b16 %v503
      %v738 = vunpack.c.h.b16 %v503
      %v739 = vunpack.c.l.b16 %v504
      %v740 = vunpack.c.h.b16 %v504
      %v741 = vunpack.c.l.b16 %v505
      %v742 = vunpack.c.h.b16 %v505
      %v743 = vunpack.c.l.b16 %v506
      %v744 = vunpack.c.h.b16 %v506
      %v745 = vunpack.c.l.b16 %v507
      %v746 = vunpack.c.h.b16 %v507
      %v747 = vunpack.c.l.b16 %v508
      %v748 = vunpack.c.h.b16 %v508
      %v749 = vunpack.c.l.b16 %v509
      %v750 = vunpack.c.h.b16 %v509
      %v751 = vunpack.c.l.b16 %v510
      %v752 = vunpack.c.h.b16 %v510
      %v753 = vunpack.c.l.b16 %v511
      %v754 = vunpack.c.h.b16 %v511
      %v755 = vunpack.c.l.b16 %v512
      %v756 = vunpack.c.h.b16 %v512
      %v757 = vunpack.c.l.b16 %v513
      %v758 = vunpack.c.h.b16 %v513
      %v759 = vunpack.c.l.b16 %v514
      %v760 = vunpack.c.h.b16 %v514
      %v761 = vunpack.c.l.b16 %v515
      %v762 = vunpack.c.h.b16 %v515
      %v763 = vunpack.c.l.b16 %v516
      %v764 = vunpack.c.h.b16 %v516
      %v765 = vunpack.c.l.b16 %v517
      %v766 = vunpack.c.h.b16 %v517
      %v767 = vunpack.c.l.b16 %v518
      %v768 = vunpack.c.h.b16 %v518
      %v769 = vunpack.c.l.b16 %v519
      %v770 = vunpack.c.h.b16 %v519
      %v771 = vunpack.c.l.b16 %v520
      %v772 = vunpack.c.h.b16 %v520
      %v773 = vunpack.c.l.b16 %v521
      %v774 = vunpack.c.h.b16 %v521
      %v775 = vunpack.c.l.b16 %v522
      %v776 = vunpack.c.h.b16 %v522
      %v777 = vunpack.c.l.b16 %v523
      %v778 = vunpack.c.h.b16 %v523
      %v779 = vunpack.c.l.b16 %v524
      %v780 = vunpack.c.h.b16 %v524
      %v781 = vunpack.c.l.b16 %v525
      %v782 = vunpack.c.h.b16 %v525
      %v783 = vunpack.c.l.b16 %v526
      %v784 = vunpack.c.h.b16 %v526
      %v785 = vunpack.c.l.b16 %v527
      %v786 = vunpack.c.h.b16 %v527
      %v787 = vunpack.c.l.b16 %v528
      %v788 = vunpack.c.h.b16 %v528
      %v789 = vunpack.c.l.b16 %v529
      %v790 = vunpack.c.h.b16 %v529
      %v791 = vunpack.c.l.b16 %v530
      %v792 = vunpack.c.h.b16 %v530
      %v793 = vunpack.c.l.b16 %v531
      %v794 = vunpack.c.h.b16 %v531
      %v795 = vunpack.c.l.b16 %v532
      %v796 = vunpack.c.h.b16 %v532
      %v797 = vunpack.c.l.b16 %v533
      %v798 = vunpack.c.h.b16 %v533
      %v799 = vunpack.c.l.b16 %v534
      %v800 = vunpack.c.h.b16 %v534
      %v801 = vunpack.c.l.b16 %v535
      %v802 = vunpack.c.h.b16 %v535
      %v803 = vunpack.c.l.b16 %v536
      %v804 = vunpack.c.h.b16 %v536
      %v805 = vunpack.c.l.b16 %v537
      %v806 = vunpack.c.h.b16 %v537
      %v807 = vunpack.c.l.b16 %v538
      %v808 = vunpack.c.h.b16 %v538
      %v809 = vunpack.c.l.b16 %v539
      %v810 = vunpack.c.h.b16 %v539
      %v811 = vunpack.c.l.b16 %v540
      %v812 = vunpack.c.h.b16 %v540
      %v813 = vunpack.c.l.b16 %v541
      %v814 = vunpack.c.h.b16 %v541
      %v815 = vunpack.c.l.b16 %v542
      %v816 = vunpack.c.h.b16 %v542
      %v817 = vunpack.c.l.b16 %v543
      %v818 = vunpack.c.h.b16 %v543
      %v819 = vunpack.c.l.b16 %v544
      %v820 = vunpack.c.h.b16 %v544
      %v821 = vunpack.c.l.b16 %v545
      %v822 = vunpack.c.h.b16 %v545
      %v823 = vunpack.c.l.b16 %v546
      %v824 = vunpack.c.h.b16 %v546
      %v825 = vunpack.c.l.b16 %v547
      %v826 = vunpack.c.h.b16 %v547
      %v827 = vunpack.c.l.b16 %v548
      %v828 = vunpack.c.h.b16 %v548
      %v829 = vunpack.c.l.b16 %v549
      %v830 = vunpack.c.h.b16 %v549
      %v831 = vunpack.c.l.b16 %v550
      %v832 = vunpack.c.h.b16 %v550
      %v833 = vunpack.c.l.b16 %v551
      %v834 = vunpack.c.h.b16 %v551
      %v835 = vunpack.c.l.b16 %v552
      %v836 = vunpack.c.h.b16 %v552
      %v837 = vunpack.c.l.b16 %v553
      %v838 = vunpack.c.h.b16 %v553
      %v839 = vunpack.c.l.b16 %v554
      %v840 = vunpack.c.h.b16 %v554
      %v841 = vunpack.c.l.b16 %v555
      %v842 = vunpack.c.h.b16 %v555
      %v843 = vunpack.c.l.b16 %v556
      %v844 = vunpack.c.h.b16 %v556
      %v845 = vunpack.c.l.b16 %v557
      %v846 = vunpack.c.h.b16 %v557
      %v847 = vunpack.c.l.b16 %v558
      %v848 = vunpack.c.h.b16 %v558
      %v849 = vunpack.c.l.b16 %v559
      %v850 = vunpack.c.h.b16 %v559
      %v851 = vunpack.c.l.b16 %v560
      %v852 = vunpack.c.h.b16 %v560
      %v853 = vunpack.c.l.b16 %v561
      %v854 = vunpack.c.h.b16 %v561
      %v855 = vunpack.c.l.b16 %v562
      %v856 = vunpack.c.h.b16 %v562
      %v857 = vunpack.c.l.b16 %v563
      %v858 = vunpack.c.h.b16 %v563
      %v859 = vunpack.c.l.b16 %v564
      %v860 = vunpack.c.h.b16 %v564
      %v861 = vunpack.c.l.b16 %v565
      %v862 = vunpack.c.h.b16 %v565
      %v863 = vunpack.c.l.b16 %v566
      %v864 = vunpack.c.h.b16 %v566
      %v865 = vunpack.c.l.b16 %v567
      %v866 = vunpack.c.h.b16 %v567
      %v867 = vunpack.c.l.b16 %v568
      %v868 = vunpack.c.h.b16 %v568
      %v869 = vunpack.c.l.b16 %v569
      %v870 = vunpack.c.h.b16 %v569
      %v871 = vunpack.c.l.b16 %v570
      %v872 = vunpack.c.h.b16 %v570
      %v873 = vunpack.c.l.b16 %v571
      %v874 = vunpack.c.h.b16 %v571
      %v875 = vunpack.c.l.b16 %v572
      %v876 = vunpack.c.h.b16 %v572
      %v877 = vunpack.c.l.b16 %v573
      %v878 = vunpack.c.h.b16 %v573
      %v879 = vunpack.c.l.b16 %v574
      %v880 = vunpack.c.h.b16 %v574
      %v881 = vunpack.c.l.b16 %v575
      %v882 = vunpack.c.h.b16 %v575
      %v883 = vunpack.c.l.b16 %v576
      %v884 = vunpack.c.h.b16 %v576
      %v885 = vunpack.c.l.b16 %v577
      %v886 = vunpack.c.h.b16 %v577
      %v887 = vunpack.c.l.b16 %v578
      %v888 = vunpack.c.h.b16 %v578
      %v889 = vunpack.c.l.b16 %v579
      %v890 = vunpack.c.h.b16 %v579
      %v891 = vunpack.c.l.b16 %v580
      %v892 = vunpack.c.h.b16 %v580
      %v893 = vunpack.c.l.b16 %v581
      %v894 = vunpack.c.h.b16 %v581
      %v895 = vunpack.c.l.b16 %v582
      %v896 = vunpack.c.h.b16 %v582
      %v897 = vunpack.c.l.b16 %v583
      %v898 = vunpack.c.h.b16 %v583
      %v899 = vunpack.c.l.b16 %v584
      %v900 = vunpack.c.h.b16 %v584
      %v901 = vunpack.c.l.b16 %v585
      %v902 = vunpack.c.h.b16 %v585
      %v903 = vunpack.c.l.b16 %v586
      %v904 = vunpack.c.h.b16 %v586
      %v905 = vunpack.c.l.b16 %v587
      %v906 = vunpack.c.h.b16 %v587
      %v907 = vunpack.c.l.b16 %v588
      %v908 = vunpack.c.h.b16 %v588
      %v909 = vpack.c.b16 %v723, %v717
      %v910 = vpack.c.b16 %v724, %v718
      %v911 = vpack.c.b16 %v725, %v719
      %v912 = vpack.c.b16 %v726, %v720
      %v913 = vpack.c.b16 %v727, %v721
      %v914 = vpack.c.b16 %v728, %v722
      %v915 = vpack.c.b16 %v735, %v729
      %v916 = vpack.c.b16 %v736, %v730
      %v917 = vpack.c.b16 %v737, %v731
      %v918 = vpack.c.b16 %v738, %v732
      %v919 = vpack.c.b16 %v739, %v733
      %v920 = vpack.c.b16 %v740, %v734
      %v921 = vpack.c.b16 %v747, %v741
      %v922 = vpack.c.b16 %v748, %v742
      %v923 = vpack.c.b16 %v749, %v743
      %v924 = vpack.c.b16 %v750, %v744
      %v925 = vpack.c.b16 %v751, %v745
      %v926 = vpack.c.b16 %v752, %v746
      %v927 = vpack.c.b16 %v759, %v753
      %v928 = vpack.c.b16 %v760, %v754
      %v929 = vpack.c.b16 %v761, %v755
      %v930 = vpack.c.b16 %v762, %v756
      %v931 = vpack.c.b16 %v763, %v757
      %v932 = vpack.c.b16 %v764, %v758
      %v933 = vpack.c.b16 %v771, %v765
      %v934 = vpack.c.b16 %v772, %v766
      %v935 = vpack.c.b16 %v773, %v767
      %v936 = vpack.c.b16 %v774, %v768
      %v937 = vpack.c.b16 %v775, %v769
      %v938 = vpack.c.b16 %v776, %v770
      %v939 = vpack.c.b16 %v783, %v777
      %v940 = vpack.c.b16 %v784, %v778
      %v941 = vpack.c.b16 %v785, %v779
      %v942 = vpack.c.b16 %v786, %v780
      %v943 = vpack.c.b16 %v787, %v781
      %v944 = vpack.c.b16 %v788, %v782
      %v945 = vpack.c.b16 %v795, %v789
      %v946 = vpack.c.b16 %v796, %v790
      %v947 = vpack.c.b16 %v797, %v791
      %v948 = vpack.c.b16 %v798, %v792
      %v949 = vpack.c.b16 %v799, %v793
      %v950 = vpack.c.b16 %v800, %v794
      %v951 = vpack.c.b16 %v807, %v801
      %v952 = vpack.c.b16 %v808, %v802
      %v953 = vpack.c.b16 %v809, %v803
      %v954 = vpack.c.b16 %v810, %v804
      %v955 = vpack.c.b16 %v811, %v805
      %v956 = vpack.c.b16 %v812, %v806
      %v957 = vpack.c.b16 %v819, %v813
      %v958 = vpack.c.b16 %v820, %v814
      %v959 = vpack.c.b16 %v821, %v815
      %v960 = vpack.c.b16 %v822, %v816
      %v961 = vpack.c.b16 %v823, %v817
      %v962 = vpack.c.b16 %v824, %v818
      %v963 = vpack.c.b16 %v831, %v825
      %v964 = vpack.c.b16 %v832, %v826
      %v965 = vpack.c.b16 %v833, %v827
      %v966 = vpack.c.b16 %v834, %v828
      %v967 = vpack.c.b16 %v835, %v829
      %v968 = vpack.c.b16 %v836, %v830
      %v969 = vpack.c.b16 %v843, %v837
      %v970 = vpack.c.b16 %v844, %v838
      %v971 = vpack.c.b16 %v845, %v839
      %v972 = vpack.c.b16 %v846, %v840
      %v973 = vpack.c.b16 %v847, %v841
      %v974 = vpack.c.b16 %v848, %v842
      %v975 = vpack.c.b16 %v855, %v849
      %v976 = vpack.c.b16 %v856, %v850
      %v977 = vpack.c.b16 %v857, %v851
      %v978 = vpack.c.b16 %v858, %v852
      %v979 = vpack.c.b16 %v859, %v853
      %v980 = vpack.c.b16 %v860, %v854
      %v981 = vpack.c.b16 %v867, %v861
      %v982 = vpack.c.b16 %v868, %v862
      %v983 = vpack.c.b16 %v869, %v863
      %v984 = vpack.c.b16 %v870, %v864
      %v985 = vpack.c.b16 %v871, %v865
      %v986 = vpack.c.b16 %v872, %v866
      %v987 = vpack.c.b16 %v879, %v873
      %v988 = vpack.c.b16 %v880, %v874
      %v989 = vpack.c.b16 %v881, %v875
      %v990 = vpack.c.b16 %v882, %v876
      %v991 = vpack.c.b16 %v883, %v877
      %v992 = vpack.c.b16 %v884, %v878
      %v993 = vpack.c.b16 %v891, %v885
      %v994 = vpack.c.b16 %v892, %v886
      %v995 = vpack.c.b16 %v893, %v887
      %v996 = vpack.c.b16 %v894, %v888
      %v997 = vpack.c.b16 %v895, %v889
      %v998 = vpack.c.b16 %v896, %v890
      %v999 = vpack.c.b16 %v903, %v897
      %v1000 = vpack.c.b16 %v904, %v898
      %v1001 = vpack.c.b16 %v905, %v899
      %v1002 = vpack.c.b16 %v906, %v900
      %v1003 = vpack.c.b16 %v907, %v901
      %v1004 = vpack.c.b16 %v908, %v902
      %1101 = vmatprep.subr.bf16.mxu0 %v910
      %1102 = vmatpush1.bf16.msra.mxu0 %v909
      %1103 = vmatprep.subr.bf16.mxu0 %v916
      %1104 = vmatpush1.bf16.msra.mxu0 %v915
      %1105 = vmatprep.subr.bf16.mxu0 %v922
      %1106 = vmatpush1.bf16.msra.mxu0 %v921
      %1107 = vmatprep.subr.bf16.mxu0 %v928
      %1108 = vmatpush1.bf16.msra.mxu0 %v927
      %1109 = vmatprep.subr.bf16.mxu0 %v934
      %1110 = vmatpush1.bf16.msra.mxu0 %v933
      %1111 = vmatprep.subr.bf16.mxu0 %v940
      %1112 = vmatpush1.bf16.msra.mxu0 %v939
      %1113 = vmatprep.subr.bf16.mxu0 %v946
      %1114 = vmatpush1.bf16.msra.mxu0 %v945
      %1115 = vmatprep.subr.bf16.mxu0 %v952
      %1116 = vmatpush1.bf16.msra.mxu0 %v951
      %1117 = vmatprep.subr.bf16.mxu0 %v958
      %1118 = vmatpush1.bf16.msra.mxu0 %v957
      %1119 = vmatprep.subr.bf16.mxu0 %v964
      %1120 = vmatpush1.bf16.msra.mxu0 %v963
      %1121 = vmatprep.subr.bf16.mxu0 %v970
      %1122 = vmatpush1.bf16.msra.mxu0 %v969
      %1123 = vmatprep.subr.bf16.mxu0 %v976
      %1124 = vmatpush1.bf16.msra.mxu0 %v975
      %1125 = vmatprep.subr.bf16.mxu0 %v982
      %1126 = vmatpush1.bf16.msra.mxu0 %v981
      %1127 = vmatprep.subr.bf16.mxu0 %v988
      %1128 = vmatpush1.bf16.msra.mxu0 %v987
      %1129 = vmatprep.subr.bf16.mxu0 %v994
      %1130 = vmatpush1.bf16.msra.mxu0 %v993
      %1131 = vmatprep.subr.bf16.mxu0 %v1000
      %1132 = vmatpush1.bf16.msra.mxu0 %v999
      %1133 = vmatprep.mubr.bf16.mxu0 %v490
      %1134 = vmatmul.mubr.bf16.gmra.mrb[0].mxu0 %v489
      %v1135 = vpop.f32.mrb[0].mxu0
      %v1136 = vadd.f32 %v594, %v1135
      %v1137 = vpop.f32.mrb[0].mxu0
      %v1138 = vadd.f32 %v598, %v1137
      %v1139 = vpop.f32.mrb[0].mxu0
      %v1140 = vadd.f32 %v594, %v1139
      %v1141 = vpop.f32.mrb[0].mxu0
      %v1142 = vadd.f32 %v598, %v1141
      %1143 = vmatprep.mubr.bf16.mxu0 %v492
      %1144 = vmatmul.mubr.bf16.gmra.mrb[0].mxu0 %v491
      %v1145 = vpop.f32.mrb[0].mxu0
      %v1146 = vadd.f32 %v594, %v1145
      %v1147 = vpop.f32.mrb[0].mxu0
      %v1148 = vadd.f32 %v598, %v1147
      %v1149 = vpop.f32.mrb[0].mxu0
      %v1150 = vadd.f32 %v594, %v1149
      %v1151 = vpop.f32.mrb[0].mxu0
      %v1152 = vadd.f32 %v598, %v1151
      %1153 = vdwg.mxu0
      %1154 = vmatprep.subr.bf16.mxu0 %v912
      %1155 = vmatpush1.bf16.msra.mxu0 %v911
      %1156 = vmatprep.subr.bf16.mxu0 %v918
      %1157 = vmatpush1.bf16.msra.mxu0 %v917
      %1158 = vmatprep.subr.bf16.mxu0 %v924
      %1159 = vmatpush1.bf16.msra.mxu0 %v923
      %1160 = vmatprep.subr.bf16.mxu0 %v930
      %1161 = vmatpush1.bf16.msra.mxu0 %v929
      %1162 = vmatprep.subr.bf16.mxu0 %v936
      %1163 = vmatpush1.bf16.msra.mxu0 %v935
      %1164 = vmatprep.subr.bf16.mxu0 %v942
      %1165 = vmatpush1.bf16.msra.mxu0 %v941
      %1166 = vmatprep.subr.bf16.mxu0 %v948
      %1167 = vmatpush1.bf16.msra.mxu0 %v947
      %1168 = vmatprep.subr.bf16.mxu0 %v954
      %1169 = vmatpush1.bf16.msra.mxu0 %v953
      %1170 = vmatprep.subr.bf16.mxu0 %v960
      %1171 = vmatpush1.bf16.msra.mxu0 %v959
      %1172 = vmatprep.subr.bf16.mxu0 %v966
      %1173 = vmatpush1.bf16.msra.mxu0 %v965
      %1174 = vmatprep.subr.bf16.mxu0 %v972
      %1175 = vmatpush1.bf16.msra.mxu0 %v971
      %1176 = vmatprep.subr.bf16.mxu0 %v978
      %1177 = vmatpush1.bf16.msra.mxu0 %v977
      %1178 = vmatprep.subr.bf16.mxu0 %v984
      %1179 = vmatpush1.bf16.msra.mxu0 %v983
      %1180 = vmatprep.subr.bf16.mxu0 %v990
      %1181 = vmatpush1.bf16.msra.mxu0 %v989
      %1182 = vmatprep.subr.bf16.mxu0 %v996
      %1183 = vmatpush1.bf16.msra.mxu0 %v995
      %1184 = vmatprep.subr.bf16.mxu0 %v1002
      %1185 = vmatpush1.bf16.msra.mxu0 %v1001
      %1186 = vmatprep.mubr.bf16.mxu0 %v490
      %1187 = vmatmul.mubr.bf16.gmra.mrb[0].mxu0 %v489
      %v1188 = vpop.f32.mrb[0].mxu0
      %v1189 = vadd.f32 %v602, %v1188
      %v1190 = vpop.f32.mrb[0].mxu0
      %v1191 = vadd.f32 %v606, %v1190
      %v1192 = vpop.f32.mrb[0].mxu0
      %v1193 = vadd.f32 %v602, %v1192
      %v1194 = vpop.f32.mrb[0].mxu0
      %v1195 = vadd.f32 %v606, %v1194
      %1196 = vmatprep.mubr.bf16.mxu0 %v492
      %1197 = vmatmul.mubr.bf16.gmra.mrb[0].mxu0 %v491
      %v1198 = vpop.f32.mrb[0].mxu0
      %v1199 = vadd.f32 %v602, %v1198
      %v1200 = vpop.f32.mrb[0].mxu0
      %v1201 = vadd.f32 %v606, %v1200
      %v1202 = vpop.f32.mrb[0].mxu0
      %v1203 = vadd.f32 %v602, %v1202
      %v1204 = vpop.f32.mrb[0].mxu0
      %v1205 = vadd.f32 %v606, %v1204
      %1206 = vdwg.mxu0
      %1207 = vmatprep.subr.bf16.mxu0 %v914
      %1208 = vmatpush1.bf16.msra.mxu0 %v913
      %1209 = vmatprep.subr.bf16.mxu0 %v920
      %1210 = vmatpush1.bf16.msra.mxu0 %v919
      %1211 = vmatprep.subr.bf16.mxu0 %v926
      %1212 = vmatpush1.bf16.msra.mxu0 %v925
      %1213 = vmatprep.subr.bf16.mxu0 %v932
      %1214 = vmatpush1.bf16.msra.mxu0 %v931
      %1215 = vmatprep.subr.bf16.mxu0 %v938
      %1216 = vmatpush1.bf16.msra.mxu0 %v937
      %1217 = vmatprep.subr.bf16.mxu0 %v944
      %1218 = vmatpush1.bf16.msra.mxu0 %v943
      %1219 = vmatprep.subr.bf16.mxu0 %v950
      %1220 = vmatpush1.bf16.msra.mxu0 %v949
      %1221 = vmatprep.subr.bf16.mxu0 %v956
      %1222 = vmatpush1.bf16.msra.mxu0 %v955
      %1223 = vmatprep.subr.bf16.mxu0 %v962
      %1224 = vmatpush1.bf16.msra.mxu0 %v961
      %1225 = vmatprep.subr.bf16.mxu0 %v968
      %1226 = vmatpush1.bf16.msra.mxu0 %v967
      %1227 = vmatprep.subr.bf16.mxu0 %v974
      %1228 = vmatpush1.bf16.msra.mxu0 %v973
      %1229 = vmatprep.subr.bf16.mxu0 %v980
      %1230 = vmatpush1.bf16.msra.mxu0 %v979
      %1231 = vmatprep.subr.bf16.mxu0 %v986
      %1232 = vmatpush1.bf16.msra.mxu0 %v985
      %1233 = vmatprep.subr.bf16.mxu0 %v992
      %1234 = vmatpush1.bf16.msra.mxu0 %v991
      %1235 = vmatprep.subr.bf16.mxu0 %v998
      %1236 = vmatpush1.bf16.msra.mxu0 %v997
      %1237 = vmatprep.subr.bf16.mxu0 %v1004
      %1238 = vmatpush1.bf16.msra.mxu0 %v1003
      %1239 = vmatprep.mubr.bf16.mxu0 %v490
      %1240 = vmatmul.mubr.bf16.gmra.mrb[0].mxu0 %v489
      %v1241 = vpop.f32.mrb[0].mxu0
      %v1242 = vadd.f32 %v610, %v1241
      %v1243 = vpop.f32.mrb[0].mxu0
      %v1244 = vadd.f32 %v614, %v1243
      %v1245 = vpop.f32.mrb[0].mxu0
      %v1246 = vadd.f32 %v610, %v1245
      %v1247 = vpop.f32.mrb[0].mxu0
      %v1248 = vadd.f32 %v614, %v1247
      %1249 = vmatprep.mubr.bf16.mxu0 %v492
      %1250 = vmatmul.mubr.bf16.gmra.mrb[0].mxu0 %v491
      %v1251 = vpop.f32.mrb[0].mxu0
      %v1252 = vadd.f32 %v610, %v1251
      %v1253 = vpop.f32.mrb[0].mxu0
      %v1254 = vadd.f32 %v614, %v1253
      %v1255 = vpop.f32.mrb[0].mxu0
      %v1256 = vadd.f32 %v610, %v1255
      %v1257 = vpop.f32.mrb[0].mxu0
      %v1258 = vadd.f32 %v614, %v1257
      %1259 = vdwg.mxu0
      %v1260 = vpack.c.bf16 %v1140, %v1136
      %v1261 = vpack.c.bf16 %v1193, %v1189
      %v1262 = vpack.c.bf16 %v1246, %v1242
      %1263 = vmatprep.subr.bf16.mxu0 0
      %1264 = vmatpush1.bf16.xpose.msra.mxu0 %v1261
      %1265 = vmatprep.subr.bf16.mxu0 0
      %1266 = vmatpush1.bf16.xpose.msra.mxu0 0
      %1267 = vmatprep.subr.bf16.mxu0 0
      %1268 = vmatpush1.bf16.xpose.msra.mxu0 0
      %1269 = vmatprep.subr.bf16.mxu0 0
      %1270 = vmatpush1.bf16.xpose.msra.mxu0 0
      %1271 = vmatprep.subr.bf16.mxu0 0
      %1272 = vmatpush1.bf16.xpose.msra.mxu0 0
      %1273 = vmatprep.subr.bf16.mxu0 0
      %1274 = vmatpush1.bf16.xpose.msra.mxu0 0
      %1275 = vmatprep.subr.bf16.mxu0 0
      %1276 = vmatpush1.bf16.xpose.msra.mxu0 0
      %1277 = vmatprep.subr.bf16.mxu0 0
      %1278 = vmatpush1.bf16.xpose.msra.mxu0 0
      %1279 = vmatprep.subr.bf16.mxu0 0
      %1280 = vmatpush1.bf16.xpose.msra.mxu0 0
      %1281 = vmatprep.subr.bf16.mxu0 0
      %1282 = vmatpush1.bf16.xpose.msra.mxu0 0
      %1283 = vmatprep.subr.bf16.mxu0 0
      %1284 = vmatpush1.bf16.xpose.msra.mxu0 0
      %1285 = vmatprep.subr.bf16.mxu0 0
      %1286 = vmatpush1.bf16.xpose.msra.mxu0 0
      %1287 = vmatprep.subr.bf16.mxu0 0
      %1288 = vmatpush1.bf16.xpose.msra.mxu0 0
      %1289 = vmatprep.subr.bf16.mxu0 0
      %1290 = vmatpush1.bf16.xpose.msra.mxu0 0
      %1291 = vmatprep.subr.bf16.mxu0 0
      %1292 = vmatpush1.bf16.xpose.msra.mxu0 0
      %1293 = vmatprep.subr.bf16.mxu0 0
      %1294 = vmatpush1.bf16.xpose.msra.mxu0 0
      %1295 = vmatprep.mubr.bf16.mxu0 0
      %1296 = vmatmul.mubr.bf16.gmra.mrb[0].mxu0 %v1260
      %v1297 = vpop.f32.mrb[0].mxu0
      %v1298 = vadd.f32 0.0, %v1297
      %v1299 = vpop.f32.mrb[0].mxu0
      %v1300 = vpop.f32.mrb[0].mxu0
      %v1301 = vadd.f32 0.0, %v1300
      %v1302 = vpop.f32.mrb[0].mxu0
      %1303 = vdwg.mxu0
      %vm1304 = vcmask 130048
      %v1305 = vsel %vm1304, %v1298, -inf
      %1306 = vmax.xlane.f32.xlu0 %v1305
      %v1307 = vpop.xlane.xlu0 %1306
      %v1308 = vsel %vm1304, %v1301, -inf
      %1309 = vmax.xlane.f32.xlu0 %v1308
      %v1310 = vpop.xlane.xlu0 %1309
      %v1311 = vsub.f32 %v1298, %v1307
      %v1312 = vsub.f32 %v1301, %v1310
      %v1313 = vmul.f32 %v1311, 1.442695
      %v1314 = vpow.pop %v1313
      %v1315 = vmul.f32 %v1312, 1.442695
      %v1316 = vpow.pop %v1315
      %v1317 = vsel %vm1304, %v1314, 0.0
      %1318 = vadd.xlane.f32.xlu0 %v1317
      %v1319 = vpop.xlane.xlu0 %1318
      %v1320 = vsel %vm1304, %v1316, 0.0
      %1321 = vadd.xlane.f32.xlu0 %v1320
      %v1322 = vpop.xlane.xlu0 %1321
      %v1323 = vrcp.pop %v1319
      %v1324 = vrcp.pop %v1322
      %v1325 = vmul.f32 %v1314, %v1323
      %v1326 = vmul.f32 %v1316, %v1324
      %v1327 = vpack.c.bf16 %v1326, %v1325
      %v1329 = vsel %vm1304, %v1327, 0
      %1331 = vmatprep.subr.bf16.mxu0 0
      %1332 = vmatpush1.bf16.msra.mxu0 %v1262
      %1333 = vmatprep.subr.bf16.mxu0 0
      %1334 = vmatpush1.bf16.msra.mxu0 0
      %1335 = vmatprep.subr.bf16.mxu0 0
      %1336 = vmatpush1.bf16.msra.mxu0 0
      %1337 = vmatprep.subr.bf16.mxu0 0
      %1338 = vmatpush1.bf16.msra.mxu0 0
      %1339 = vmatprep.subr.bf16.mxu0 0
      %1340 = vmatpush1.bf16.msra.mxu0 0
      %1341 = vmatprep.subr.bf16.mxu0 0
      %1342 = vmatpush1.bf16.msra.mxu0 0
      %1343 = vmatprep.subr.bf16.mxu0 0
      %1344 = vmatpush1.bf16.msra.mxu0 0
      %1345 = vmatprep.subr.bf16.mxu0 0
      %1346 = vmatpush1.bf16.msra.mxu0 0
      %1347 = vmatprep.subr.bf16.mxu0 0
      %1348 = vmatpush1.bf16.msra.mxu0 0
      %1349 = vmatprep.subr.bf16.mxu0 0
      %1350 = vmatpush1.bf16.msra.mxu0 0
      %1351 = vmatprep.subr.bf16.mxu0 0
      %1352 = vmatpush1.bf16.msra.mxu0 0
      %1353 = vmatprep.subr.bf16.mxu0 0
      %1354 = vmatpush1.bf16.msra.mxu0 0
      %1355 = vmatprep.subr.bf16.mxu0 0
      %1356 = vmatpush1.bf16.msra.mxu0 0
      %1357 = vmatprep.subr.bf16.mxu0 0
      %1358 = vmatpush1.bf16.msra.mxu0 0
      %1359 = vmatprep.subr.bf16.mxu0 0
      %1360 = vmatpush1.bf16.msra.mxu0 0
      %1361 = vmatprep.subr.bf16.mxu0 0
      %1362 = vmatpush1.bf16.msra.mxu0 0
      %1363 = vmatprep.mubr.bf16.mxu0 0
      %1364 = vmatmul.mubr.bf16.gmra.mrb[0].mxu0 %v1329
      %v1365 = vpop.f32.mrb[0].mxu0
      %v1366 = vadd.f32 0.0, %v1365
      %v1367 = vpop.f32.mrb[0].mxu0
      %v1368 = vpop.f32.mrb[0].mxu0
      %v1369 = vadd.f32 0.0, %v1368
      %v1370 = vpop.f32.mrb[0].mxu0
      %1371 = vdwg.mxu0
      %v1372 = vpack.c.bf16 %v1142, %v1138
      %v1373 = vpack.c.bf16 %v1195, %v1191
      %v1374 = vpack.c.bf16 %v1248, %v1244
      %1375 = vmatprep.subr.bf16.mxu0 0
      %1376 = vmatpush1.bf16.xpose.msra.mxu0 %v1373
      %1377 = vmatprep.subr.bf16.mxu0 0
      %1378 = vmatpush1.bf16.xpose.msra.mxu0 0
      %1379 = vmatprep.subr.bf16.mxu0 0
      %1380 = vmatpush1.bf16.xpose.msra.mxu0 0
      %1381 = vmatprep.subr.bf16.mxu0 0
      %1382 = vmatpush1.bf16.xpose.msra.mxu0 0
      %1383 = vmatprep.subr.bf16.mxu0 0
      %1384 = vmatpush1.bf16.xpose.msra.mxu0 0
      %1385 = vmatprep.subr.bf16.mxu0 0
      %1386 = vmatpush1.bf16.xpose.msra.mxu0 0
      %1387 = vmatprep.subr.bf16.mxu0 0
      %1388 = vmatpush1.bf16.xpose.msra.mxu0 0
      %1389 = vmatprep.subr.bf16.mxu0 0
      %1390 = vmatpush1.bf16.xpose.msra.mxu0 0
      %1391 = vmatprep.subr.bf16.mxu0 0
      %1392 = vmatpush1.bf16.xpose.msra.mxu0 0
      %1393 = vmatprep.subr.bf16.mxu0 0
      %1394 = vmatpush1.bf16.xpose.msra.mxu0 0
      %1395 = vmatprep.subr.bf16.mxu0 0
      %1396 = vmatpush1.bf16.xpose.msra.mxu0 0
      %1397 = vmatprep.subr.bf16.mxu0 0
      %1398 = vmatpush1.bf16.xpose.msra.mxu0 0
      %1399 = vmatprep.subr.bf16.mxu0 0
      %1400 = vmatpush1.bf16.xpose.msra.mxu0 0
      %1401 = vmatprep.subr.bf16.mxu0 0
      %1402 = vmatpush1.bf16.xpose.msra.mxu0 0
      %1403 = vmatprep.subr.bf16.mxu0 0
      %1404 = vmatpush1.bf16.xpose.msra.mxu0 0
      %1405 = vmatprep.subr.bf16.mxu0 0
      %1406 = vmatpush1.bf16.xpose.msra.mxu0 0
      %1407 = vmatprep.mubr.bf16.mxu0 0
      %1408 = vmatmul.mubr.bf16.gmra.mrb[0].mxu0 %v1372
      %v1409 = vpop.f32.mrb[0].mxu0
      %v1410 = vadd.f32 0.0, %v1409
      %v1411 = vpop.f32.mrb[0].mxu0
      %v1412 = vpop.f32.mrb[0].mxu0
      %v1413 = vadd.f32 0.0, %v1412
      %v1414 = vpop.f32.mrb[0].mxu0
      %1415 = vdwg.mxu0
      %v1416 = vsel %vm1304, %v1410, -inf
      %1417 = vmax.xlane.f32.xlu0 %v1416
      %v1418 = vpop.xlane.xlu0 %1417
      %v1419 = vsel %vm1304, %v1413, -inf
      %1420 = vmax.xlane.f32.xlu0 %v1419
      %v1421 = vpop.xlane.xlu0 %1420
      %v1422 = vsub.f32 %v1410, %v1418
      %v1423 = vsub.f32 %v1413, %v1421
      %v1424 = vmul.f32 %v1422, 1.442695
      %v1425 = vpow.pop %v1424
      %v1426 = vmul.f32 %v1423, 1.442695
      %v1427 = vpow.pop %v1426
      %v1428 = vsel %vm1304, %v1425, 0.0
      %1429 = vadd.xlane.f32.xlu0 %v1428
      %v1430 = vpop.xlane.xlu0 %1429
      %v1431 = vsel %vm1304, %v1427, 0.0
      %1432 = vadd.xlane.f32.xlu0 %v1431
      %v1433 = vpop.xlane.xlu0 %1432
      %v1434 = vrcp.pop %v1430
      %v1435 = vrcp.pop %v1433
      %v1436 = vmul.f32 %v1425, %v1434
      %v1437 = vmul.f32 %v1427, %v1435
      %v1438 = vpack.c.bf16 %v1437, %v1436
      %v1440 = vsel %vm1304, %v1438, 0
      %1442 = vmatprep.subr.bf16.mxu0 0
      %1443 = vmatpush1.bf16.msra.mxu0 %v1374
      %1444 = vmatprep.subr.bf16.mxu0 0
      %1445 = vmatpush1.bf16.msra.mxu0 0
      %1446 = vmatprep.subr.bf16.mxu0 0
      %1447 = vmatpush1.bf16.msra.mxu0 0
      %1448 = vmatprep.subr.bf16.mxu0 0
      %1449 = vmatpush1.bf16.msra.mxu0 0
      %1450 = vmatprep.subr.bf16.mxu0 0
      %1451 = vmatpush1.bf16.msra.mxu0 0
      %1452 = vmatprep.subr.bf16.mxu0 0
      %1453 = vmatpush1.bf16.msra.mxu0 0
      %1454 = vmatprep.subr.bf16.mxu0 0
      %1455 = vmatpush1.bf16.msra.mxu0 0
      %1456 = vmatprep.subr.bf16.mxu0 0
      %1457 = vmatpush1.bf16.msra.mxu0 0
      %1458 = vmatprep.subr.bf16.mxu0 0
      %1459 = vmatpush1.bf16.msra.mxu0 0
      %1460 = vmatprep.subr.bf16.mxu0 0
      %1461 = vmatpush1.bf16.msra.mxu0 0
      %1462 = vmatprep.subr.bf16.mxu0 0
      %1463 = vmatpush1.bf16.msra.mxu0 0
      %1464 = vmatprep.subr.bf16.mxu0 0
      %1465 = vmatpush1.bf16.msra.mxu0 0
      %1466 = vmatprep.subr.bf16.mxu0 0
      %1467 = vmatpush1.bf16.msra.mxu0 0
      %1468 = vmatprep.subr.bf16.mxu0 0
      %1469 = vmatpush1.bf16.msra.mxu0 0
      %1470 = vmatprep.subr.bf16.mxu0 0
      %1471 = vmatpush1.bf16.msra.mxu0 0
      %1472 = vmatprep.subr.bf16.mxu0 0
      %1473 = vmatpush1.bf16.msra.mxu0 0
      %1474 = vmatprep.mubr.bf16.mxu0 0
      %1475 = vmatmul.mubr.bf16.gmra.mrb[0].mxu0 %v1440
      %v1476 = vpop.f32.mrb[0].mxu0
      %v1477 = vadd.f32 0.0, %v1476
      %v1478 = vpop.f32.mrb[0].mxu0
      %v1479 = vpop.f32.mrb[0].mxu0
      %v1480 = vadd.f32 0.0, %v1479
      %v1481 = vpop.f32.mrb[0].mxu0
      %1482 = vdwg.mxu0
      %v1483 = vpack.c.bf16 %v1150, %v1146
      %v1484 = vpack.c.bf16 %v1203, %v1199
      %v1485 = vpack.c.bf16 %v1256, %v1252
      %1486 = vmatprep.subr.bf16.mxu0 0
      %1487 = vmatpush1.bf16.xpose.msra.mxu0 %v1484
      %1488 = vmatprep.subr.bf16.mxu0 0
      %1489 = vmatpush1.bf16.xpose.msra.mxu0 0
      %1490 = vmatprep.subr.bf16.mxu0 0
      %1491 = vmatpush1.bf16.xpose.msra.mxu0 0
      %1492 = vmatprep.subr.bf16.mxu0 0
      %1493 = vmatpush1.bf16.xpose.msra.mxu0 0
      %1494 = vmatprep.subr.bf16.mxu0 0
      %1495 = vmatpush1.bf16.xpose.msra.mxu0 0
      %1496 = vmatprep.subr.bf16.mxu0 0
      %1497 = vmatpush1.bf16.xpose.msra.mxu0 0
      %1498 = vmatprep.subr.bf16.mxu0 0
      %1499 = vmatpush1.bf16.xpose.msra.mxu0 0
      %1500 = vmatprep.subr.bf16.mxu0 0
      %1501 = vmatpush1.bf16.xpose.msra.mxu0 0
      %1502 = vmatprep.subr.bf16.mxu0 0
      %1503 = vmatpush1.bf16.xpose.msra.mxu0 0
      %1504 = vmatprep.subr.bf16.mxu0 0
      %1505 = vmatpush1.bf16.xpose.msra.mxu0 0
      %1506 = vmatprep.subr.bf16.mxu0 0
      %1507 = vmatpush1.bf16.xpose.msra.mxu0 0
      %1508 = vmatprep.subr.bf16.mxu0 0
      %1509 = vmatpush1.bf16.xpose.msra.mxu0 0
      %1510 = vmatprep.subr.bf16.mxu0 0
      %1511 = vmatpush1.bf16.xpose.msra.mxu0 0
      %1512 = vmatprep.subr.bf16.mxu0 0
      %1513 = vmatpush1.bf16.xpose.msra.mxu0 0
      %1514 = vmatprep.subr.bf16.mxu0 0
      %1515 = vmatpush1.bf16.xpose.msra.mxu0 0
      %1516 = vmatprep.subr.bf16.mxu0 0
      %1517 = vmatpush1.bf16.xpose.msra.mxu0 0
      %1518 = vmatprep.mubr.bf16.mxu0 0
      %1519 = vmatmul.mubr.bf16.gmra.mrb[0].mxu0 %v1483
      %v1520 = vpop.f32.mrb[0].mxu0
      %v1521 = vadd.f32 0.0, %v1520
      %v1522 = vpop.f32.mrb[0].mxu0
      %v1523 = vpop.f32.mrb[0].mxu0
      %v1524 = vadd.f32 0.0, %v1523
      %v1525 = vpop.f32.mrb[0].mxu0
      %1526 = vdwg.mxu0
      %v1527 = vsel %vm1304, %v1521, -inf
      %1528 = vmax.xlane.f32.xlu0 %v1527
      %v1529 = vpop.xlane.xlu0 %1528
      %v1530 = vsel %vm1304, %v1524, -inf
      %1531 = vmax.xlane.f32.xlu0 %v1530
      %v1532 = vpop.xlane.xlu0 %1531
      %v1533 = vsub.f32 %v1521, %v1529
      %v1534 = vsub.f32 %v1524, %v1532
      %v1535 = vmul.f32 %v1533, 1.442695
      %v1536 = vpow.pop %v1535
      %v1537 = vmul.f32 %v1534, 1.442695
      %v1538 = vpow.pop %v1537
      %v1539 = vsel %vm1304, %v1536, 0.0
      %1540 = vadd.xlane.f32.xlu0 %v1539
      %v1541 = vpop.xlane.xlu0 %1540
      %v1542 = vsel %vm1304, %v1538, 0.0
      %1543 = vadd.xlane.f32.xlu0 %v1542
      %v1544 = vpop.xlane.xlu0 %1543
      %v1545 = vrcp.pop %v1541
      %v1546 = vrcp.pop %v1544
      %v1547 = vmul.f32 %v1536, %v1545
      %v1548 = vmul.f32 %v1538, %v1546
      %v1549 = vpack.c.bf16 %v1548, %v1547
      %v1551 = vsel %vm1304, %v1549, 0
      %1553 = vmatprep.subr.bf16.mxu0 0
      %1554 = vmatpush1.bf16.msra.mxu0 %v1485
      %1555 = vmatprep.subr.bf16.mxu0 0
      %1556 = vmatpush1.bf16.msra.mxu0 0
      %1557 = vmatprep.subr.bf16.mxu0 0
      %1558 = vmatpush1.bf16.msra.mxu0 0
      %1559 = vmatprep.subr.bf16.mxu0 0
      %1560 = vmatpush1.bf16.msra.mxu0 0
      %1561 = vmatprep.subr.bf16.mxu0 0
      %1562 = vmatpush1.bf16.msra.mxu0 0
      %1563 = vmatprep.subr.bf16.mxu0 0
      %1564 = vmatpush1.bf16.msra.mxu0 0
      %1565 = vmatprep.subr.bf16.mxu0 0
      %1566 = vmatpush1.bf16.msra.mxu0 0
      %1567 = vmatprep.subr.bf16.mxu0 0
      %1568 = vmatpush1.bf16.msra.mxu0 0
      %1569 = vmatprep.subr.bf16.mxu0 0
      %1570 = vmatpush1.bf16.msra.mxu0 0
      %1571 = vmatprep.subr.bf16.mxu0 0
      %1572 = vmatpush1.bf16.msra.mxu0 0
      %1573 = vmatprep.subr.bf16.mxu0 0
      %1574 = vmatpush1.bf16.msra.mxu0 0
      %1575 = vmatprep.subr.bf16.mxu0 0
      %1576 = vmatpush1.bf16.msra.mxu0 0
      %1577 = vmatprep.subr.bf16.mxu0 0
      %1578 = vmatpush1.bf16.msra.mxu0 0
      %1579 = vmatprep.subr.bf16.mxu0 0
      %1580 = vmatpush1.bf16.msra.mxu0 0
      %1581 = vmatprep.subr.bf16.mxu0 0
      %1582 = vmatpush1.bf16.msra.mxu0 0
      %1583 = vmatprep.subr.bf16.mxu0 0
      %1584 = vmatpush1.bf16.msra.mxu0 0
      %1585 = vmatprep.mubr.bf16.mxu0 0
      %1586 = vmatmul.mubr.bf16.gmra.mrb[0].mxu0 %v1551
      %v1587 = vpop.f32.mrb[0].mxu0
      %v1588 = vadd.f32 0.0, %v1587
      %v1589 = vpop.f32.mrb[0].mxu0
      %v1590 = vpop.f32.mrb[0].mxu0
      %v1591 = vadd.f32 0.0, %v1590
      %v1592 = vpop.f32.mrb[0].mxu0
      %1593 = vdwg.mxu0
      %v1594 = vpack.c.bf16 %v1152, %v1148
      %v1595 = vpack.c.bf16 %v1205, %v1201
      %v1596 = vpack.c.bf16 %v1258, %v1254
      %1597 = vmatprep.subr.bf16.mxu0 0
      %1598 = vmatpush1.bf16.xpose.msra.mxu0 %v1595
      %1599 = vmatprep.subr.bf16.mxu0 0
      %1600 = vmatpush1.bf16.xpose.msra.mxu0 0
      %1601 = vmatprep.subr.bf16.mxu0 0
      %1602 = vmatpush1.bf16.xpose.msra.mxu0 0
      %1603 = vmatprep.subr.bf16.mxu0 0
      %1604 = vmatpush1.bf16.xpose.msra.mxu0 0
      %1605 = vmatprep.subr.bf16.mxu0 0
      %1606 = vmatpush1.bf16.xpose.msra.mxu0 0
      %1607 = vmatprep.subr.bf16.mxu0 0
      %1608 = vmatpush1.bf16.xpose.msra.mxu0 0
      %1609 = vmatprep.subr.bf16.mxu0 0
      %1610 = vmatpush1.bf16.xpose.msra.mxu0 0
      %1611 = vmatprep.subr.bf16.mxu0 0
      %1612 = vmatpush1.bf16.xpose.msra.mxu0 0
      %1613 = vmatprep.subr.bf16.mxu0 0
      %1614 = vmatpush1.bf16.xpose.msra.mxu0 0
      %1615 = vmatprep.subr.bf16.mxu0 0
      %1616 = vmatpush1.bf16.xpose.msra.mxu0 0
      %1617 = vmatprep.subr.bf16.mxu0 0
      %1618 = vmatpush1.bf16.xpose.msra.mxu0 0
      %1619 = vmatprep.subr.bf16.mxu0 0
      %1620 = vmatpush1.bf16.xpose.msra.mxu0 0
      %1621 = vmatprep.subr.bf16.mxu0 0
      %1622 = vmatpush1.bf16.xpose.msra.mxu0 0
      %1623 = vmatprep.subr.bf16.mxu0 0
      %1624 = vmatpush1.bf16.xpose.msra.mxu0 0
      %1625 = vmatprep.subr.bf16.mxu0 0
      %1626 = vmatpush1.bf16.xpose.msra.mxu0 0
      %1627 = vmatprep.subr.bf16.mxu0 0
      %1628 = vmatpush1.bf16.xpose.msra.mxu0 0
      %1629 = vmatprep.mubr.bf16.mxu0 0
      %1630 = vmatmul.mubr.bf16.gmra.mrb[0].mxu0 %v1594
      %v1631 = vpop.f32.mrb[0].mxu0
      %v1632 = vadd.f32 0.0, %v1631
      %v1633 = vpop.f32.mrb[0].mxu0
      %v1634 = vpop.f32.mrb[0].mxu0
      %v1635 = vadd.f32 0.0, %v1634
      %v1636 = vpop.f32.mrb[0].mxu0
      %1637 = vdwg.mxu0
      %v1638 = vsel %vm1304, %v1632, -inf
      %1639 = vmax.xlane.f32.xlu0 %v1638
      %v1640 = vpop.xlane.xlu0 %1639
      %v1641 = vsel %vm1304, %v1635, -inf
      %1642 = vmax.xlane.f32.xlu0 %v1641
      %v1643 = vpop.xlane.xlu0 %1642
      %v1644 = vsub.f32 %v1632, %v1640
      %v1645 = vsub.f32 %v1635, %v1643
      %v1646 = vmul.f32 %v1644, 1.442695
      %v1647 = vpow.pop %v1646
      %v1648 = vmul.f32 %v1645, 1.442695
      %v1649 = vpow.pop %v1648
      %v1650 = vsel %vm1304, %v1647, 0.0
      %1651 = vadd.xlane.f32.xlu0 %v1650
      %v1652 = vpop.xlane.xlu0 %1651
      %v1653 = vsel %vm1304, %v1649, 0.0
      %1654 = vadd.xlane.f32.xlu0 %v1653
      %v1655 = vpop.xlane.xlu0 %1654
      %v1656 = vrcp.pop %v1652
      %v1657 = vrcp.pop %v1655
      %v1658 = vmul.f32 %v1647, %v1656
      %v1659 = vmul.f32 %v1649, %v1657
      %v1660 = vpack.c.bf16 %v1659, %v1658
      %v1662 = vsel %vm1304, %v1660, 0
      %1664 = vmatprep.subr.bf16.mxu0 0
      %1665 = vmatpush1.bf16.msra.mxu0 %v1596
      %1666 = vmatprep.subr.bf16.mxu0 0
      %1667 = vmatpush1.bf16.msra.mxu0 0
      %1668 = vmatprep.subr.bf16.mxu0 0
      %1669 = vmatpush1.bf16.msra.mxu0 0
      %1670 = vmatprep.subr.bf16.mxu0 0
      %1671 = vmatpush1.bf16.msra.mxu0 0
      %1672 = vmatprep.subr.bf16.mxu0 0
      %1673 = vmatpush1.bf16.msra.mxu0 0
      %1674 = vmatprep.subr.bf16.mxu0 0
      %1675 = vmatpush1.bf16.msra.mxu0 0
      %1676 = vmatprep.subr.bf16.mxu0 0
      %1677 = vmatpush1.bf16.msra.mxu0 0
      %1678 = vmatprep.subr.bf16.mxu0 0
      %1679 = vmatpush1.bf16.msra.mxu0 0
      %1680 = vmatprep.subr.bf16.mxu0 0
      %1681 = vmatpush1.bf16.msra.mxu0 0
      %1682 = vmatprep.subr.bf16.mxu0 0
      %1683 = vmatpush1.bf16.msra.mxu0 0
      %1684 = vmatprep.subr.bf16.mxu0 0
      %1685 = vmatpush1.bf16.msra.mxu0 0
      %1686 = vmatprep.subr.bf16.mxu0 0
      %1687 = vmatpush1.bf16.msra.mxu0 0
      %1688 = vmatprep.subr.bf16.mxu0 0
      %1689 = vmatpush1.bf16.msra.mxu0 0
      %1690 = vmatprep.subr.bf16.mxu0 0
      %1691 = vmatpush1.bf16.msra.mxu0 0
      %1692 = vmatprep.subr.bf16.mxu0 0
      %1693 = vmatpush1.bf16.msra.mxu0 0
      %1694 = vmatprep.subr.bf16.mxu0 0
      %1695 = vmatpush1.bf16.msra.mxu0 0
      %1696 = vmatprep.mubr.bf16.mxu0 0
      %1697 = vmatmul.mubr.bf16.gmra.mrb[0].mxu0 %v1662
      %v1698 = vpop.f32.mrb[0].mxu0
      %v1699 = vadd.f32 0.0, %v1698
      %v1700 = vpop.f32.mrb[0].mxu0
      %v1701 = vpop.f32.mrb[0].mxu0
      %v1702 = vadd.f32 0.0, %v1701
      %v1703 = vpop.f32.mrb[0].mxu0
      %1704 = vdwg.mxu0
      %v1705 = vpack.c.bf16 %v1369, %v1366
      %v1706 = vpack.c.bf16 %v1480, %v1477
      %v1707 = vpack.c.bf16 %v1591, %v1588
      %v1708 = vpack.c.bf16 %v1702, %v1699
      %v1709 = vld [vmem:[%s3] sm:$0xff]
      %v1710 = vld [vmem:[%s3 + $0x8] sm:$0xff]
      %v1711 = vld [vmem:[%s3 + $0x10] sm:$0xff]
      %v1712 = vld [vmem:[%s3 + $0x18] sm:$0xff]
      %v1713 = vld [vmem:[%s3 + $0x20] sm:$0xff]
      %v1714 = vld [vmem:[%s3 + $0x28] sm:$0xff]
      %v1715 = vld [vmem:[%s3 + $0x30] sm:$0xff]
      %v1716 = vld [vmem:[%s3 + $0x38] sm:$0xff]
      %v1717 = vld [vmem:[%s3 + $0x40] sm:$0xff]
      %v1718 = vld [vmem:[%s3 + $0x48] sm:$0xff]
      %v1719 = vld [vmem:[%s3 + $0x50] sm:$0xff]
      %v1720 = vld [vmem:[%s3 + $0x58] sm:$0xff]
      %v1721 = vld [vmem:[%s3 + $0x60] sm:$0xff]
      %v1722 = vld [vmem:[%s3 + $0x68] sm:$0xff]
      %v1723 = vld [vmem:[%s3 + $0x70] sm:$0xff]
      %v1724 = vld [vmem:[%s3 + $0x78] sm:$0xff]
      %v1725 = vld [vmem:[%s3 + $0x80] sm:$0xff]
      %v1726 = vld [vmem:[%s3 + $0x88] sm:$0xff]
      %v1727 = vld [vmem:[%s3 + $0x90] sm:$0xff]
      %v1728 = vld [vmem:[%s3 + $0x98] sm:$0xff]
      %v1729 = vld [vmem:[%s3 + $0xa0] sm:$0xff]
      %v1730 = vld [vmem:[%s3 + $0xa8] sm:$0xff]
      %v1731 = vld [vmem:[%s3 + $0xb0] sm:$0xff]
      %v1732 = vld [vmem:[%s3 + $0xb8] sm:$0xff]
      %v1733 = vld [vmem:[%s3 + $0xc0] sm:$0xff]
      %v1734 = vld [vmem:[%s3 + $0xc8] sm:$0xff]
      %v1735 = vld [vmem:[%s3 + $0xd0] sm:$0xff]
      %v1736 = vld [vmem:[%s3 + $0xd8] sm:$0xff]
      %v1737 = vld [vmem:[%s3 + $0xe0] sm:$0xff]
      %v1738 = vld [vmem:[%s3 + $0xe8] sm:$0xff]
      %v1739 = vld [vmem:[%s3 + $0xf0] sm:$0xff]
      %v1740 = vld [vmem:[%s3 + $0xf8] sm:$0xff]
      %v1741 = vld [vmem:[%s4] sm:$0x3]
      %v1743 = vlaneseq
      %v1744 = vshrl.u32 %v1743, 7
      %v1745 = vsub.s32 0, %v1744
      %v1746 = vrot.slane %v1741, %v1745
      %v1747 = vlaneseq
      %v1748 = vshrl.u32 %v1747, 7
      %v1749 = vsub.s32 1, %v1748
      %v1750 = vrot.slane %v1741, %v1749
      %v1785 = vunpack.c.l.b16 %v1709
      %v1786 = vunpack.c.h.b16 %v1709
      %v1787 = vunpack.c.l.b16 %v1710
      %v1788 = vunpack.c.h.b16 %v1710
      %v1789 = vunpack.c.l.b16 %v1711
      %v1790 = vunpack.c.h.b16 %v1711
      %v1791 = vunpack.c.l.b16 %v1712
      %v1792 = vunpack.c.h.b16 %v1712
      %v1793 = vunpack.c.l.b16 %v1713
      %v1794 = vunpack.c.h.b16 %v1713
      %v1795 = vunpack.c.l.b16 %v1714
      %v1796 = vunpack.c.h.b16 %v1714
      %v1797 = vunpack.c.l.b16 %v1715
      %v1798 = vunpack.c.h.b16 %v1715
      %v1799 = vunpack.c.l.b16 %v1716
      %v1800 = vunpack.c.h.b16 %v1716
      %v1801 = vunpack.c.l.b16 %v1717
      %v1802 = vunpack.c.h.b16 %v1717
      %v1803 = vunpack.c.l.b16 %v1718
      %v1804 = vunpack.c.h.b16 %v1718
      %v1805 = vunpack.c.l.b16 %v1719
      %v1806 = vunpack.c.h.b16 %v1719
      %v1807 = vunpack.c.l.b16 %v1720
      %v1808 = vunpack.c.h.b16 %v1720
      %v1809 = vunpack.c.l.b16 %v1721
      %v1810 = vunpack.c.h.b16 %v1721
      %v1811 = vunpack.c.l.b16 %v1722
      %v1812 = vunpack.c.h.b16 %v1722
      %v1813 = vunpack.c.l.b16 %v1723
      %v1814 = vunpack.c.h.b16 %v1723
      %v1815 = vunpack.c.l.b16 %v1724
      %v1816 = vunpack.c.h.b16 %v1724
      %v1817 = vunpack.c.l.b16 %v1725
      %v1818 = vunpack.c.h.b16 %v1725
      %v1819 = vunpack.c.l.b16 %v1726
      %v1820 = vunpack.c.h.b16 %v1726
      %v1821 = vunpack.c.l.b16 %v1727
      %v1822 = vunpack.c.h.b16 %v1727
      %v1823 = vunpack.c.l.b16 %v1728
      %v1824 = vunpack.c.h.b16 %v1728
      %v1825 = vunpack.c.l.b16 %v1729
      %v1826 = vunpack.c.h.b16 %v1729
      %v1827 = vunpack.c.l.b16 %v1730
      %v1828 = vunpack.c.h.b16 %v1730
      %v1829 = vunpack.c.l.b16 %v1731
      %v1830 = vunpack.c.h.b16 %v1731
      %v1831 = vunpack.c.l.b16 %v1732
      %v1832 = vunpack.c.h.b16 %v1732
      %v1833 = vunpack.c.l.b16 %v1733
      %v1834 = vunpack.c.h.b16 %v1733
      %v1835 = vunpack.c.l.b16 %v1734
      %v1836 = vunpack.c.h.b16 %v1734
      %v1837 = vunpack.c.l.b16 %v1735
      %v1838 = vunpack.c.h.b16 %v1735
      %v1839 = vunpack.c.l.b16 %v1736
      %v1840 = vunpack.c.h.b16 %v1736
      %v1841 = vunpack.c.l.b16 %v1737
      %v1842 = vunpack.c.h.b16 %v1737
      %v1843 = vunpack.c.l.b16 %v1738
      %v1844 = vunpack.c.h.b16 %v1738
      %v1845 = vunpack.c.l.b16 %v1739
      %v1846 = vunpack.c.h.b16 %v1739
      %v1847 = vunpack.c.l.b16 %v1740
      %v1848 = vunpack.c.h.b16 %v1740
      %v1849 = vpack.c.b16 %v1787, %v1785
      %v1850 = vpack.c.b16 %v1788, %v1786
      %v1851 = vpack.c.b16 %v1791, %v1789
      %v1852 = vpack.c.b16 %v1792, %v1790
      %v1853 = vpack.c.b16 %v1795, %v1793
      %v1854 = vpack.c.b16 %v1796, %v1794
      %v1855 = vpack.c.b16 %v1799, %v1797
      %v1856 = vpack.c.b16 %v1800, %v1798
      %v1857 = vpack.c.b16 %v1803, %v1801
      %v1858 = vpack.c.b16 %v1804, %v1802
      %v1859 = vpack.c.b16 %v1807, %v1805
      %v1860 = vpack.c.b16 %v1808, %v1806
      %v1861 = vpack.c.b16 %v1811, %v1809
      %v1862 = vpack.c.b16 %v1812, %v1810
      %v1863 = vpack.c.b16 %v1815, %v1813
      %v1864 = vpack.c.b16 %v1816, %v1814
      %v1865 = vpack.c.b16 %v1819, %v1817
      %v1866 = vpack.c.b16 %v1820, %v1818
      %v1867 = vpack.c.b16 %v1823, %v1821
      %v1868 = vpack.c.b16 %v1824, %v1822
      %v1869 = vpack.c.b16 %v1827, %v1825
      %v1870 = vpack.c.b16 %v1828, %v1826
      %v1871 = vpack.c.b16 %v1831, %v1829
      %v1872 = vpack.c.b16 %v1832, %v1830
      %v1873 = vpack.c.b16 %v1835, %v1833
      %v1874 = vpack.c.b16 %v1836, %v1834
      %v1875 = vpack.c.b16 %v1839, %v1837
      %v1876 = vpack.c.b16 %v1840, %v1838
      %v1877 = vpack.c.b16 %v1843, %v1841
      %v1878 = vpack.c.b16 %v1844, %v1842
      %v1879 = vpack.c.b16 %v1847, %v1845
      %v1880 = vpack.c.b16 %v1848, %v1846
      %1913 = vmatprep.subr.bf16.mxu0 %v1850
      %1914 = vmatpush1.bf16.msra.mxu0 %v1849
      %1915 = vmatprep.subr.bf16.mxu0 %v1852
      %1916 = vmatpush1.bf16.msra.mxu0 %v1851
      %1917 = vmatprep.subr.bf16.mxu0 %v1854
      %1918 = vmatpush1.bf16.msra.mxu0 %v1853
      %1919 = vmatprep.subr.bf16.mxu0 %v1856
      %1920 = vmatpush1.bf16.msra.mxu0 %v1855
      %1921 = vmatprep.subr.bf16.mxu0 %v1858
      %1922 = vmatpush1.bf16.msra.mxu0 %v1857
      %1923 = vmatprep.subr.bf16.mxu0 %v1860
      %1924 = vmatpush1.bf16.msra.mxu0 %v1859
      %1925 = vmatprep.subr.bf16.mxu0 %v1862
      %1926 = vmatpush1.bf16.msra.mxu0 %v1861
      %1927 = vmatprep.subr.bf16.mxu0 %v1864
      %1928 = vmatpush1.bf16.msra.mxu0 %v1863
      %1929 = vmatprep.subr.bf16.mxu0 %v1866
      %1930 = vmatpush1.bf16.msra.mxu0 %v1865
      %1931 = vmatprep.subr.bf16.mxu0 %v1868
      %1932 = vmatpush1.bf16.msra.mxu0 %v1867
      %1933 = vmatprep.subr.bf16.mxu0 %v1870
      %1934 = vmatpush1.bf16.msra.mxu0 %v1869
      %1935 = vmatprep.subr.bf16.mxu0 %v1872
      %1936 = vmatpush1.bf16.msra.mxu0 %v1871
      %1937 = vmatprep.subr.bf16.mxu0 %v1874
      %1938 = vmatpush1.bf16.msra.mxu0 %v1873
      %1939 = vmatprep.subr.bf16.mxu0 %v1876
      %1940 = vmatpush1.bf16.msra.mxu0 %v1875
      %1941 = vmatprep.subr.bf16.mxu0 %v1878
      %1942 = vmatpush1.bf16.msra.mxu0 %v1877
      %1943 = vmatprep.subr.bf16.mxu0 %v1880
      %1944 = vmatpush1.bf16.msra.mxu0 %v1879
      %1945 = vmatprep.mubr.bf16.mxu0 %v1706
      %1946 = vmatmul.mubr.bf16.gmra.mrb[0].mxu0 %v1705
      %v1947 = vpop.f32.mrb[0].mxu0
      %v1948 = vadd.f32 %v1746, %v1947
      %v1949 = vpop.f32.mrb[0].mxu0
      %v1950 = vadd.f32 %v1750, %v1949
      %v1951 = vpop.f32.mrb[0].mxu0
      %v1952 = vadd.f32 %v1746, %v1951
      %v1953 = vpop.f32.mrb[0].mxu0
      %v1954 = vadd.f32 %v1750, %v1953
      %1955 = vmatprep.mubr.bf16.mxu0 %v1708
      %1956 = vmatmul.mubr.bf16.gmra.mrb[0].mxu0 %v1707
      %v1957 = vpop.f32.mrb[0].mxu0
      %v1958 = vadd.f32 %v1746, %v1957
      %v1959 = vpop.f32.mrb[0].mxu0
      %v1960 = vadd.f32 %v1750, %v1959
      %v1961 = vpop.f32.mrb[0].mxu0
      %v1962 = vadd.f32 %v1746, %v1961
      %v1963 = vpop.f32.mrb[0].mxu0
      %v1964 = vadd.f32 %v1750, %v1963
      %1965 = vdwg.mxu0
      %v1966 = vadd.f32 %v481, %v1948
      %v1967 = vadd.f32 %v482, %v1950
      %v1968 = vadd.f32 %v483, %v1952
      %v1969 = vadd.f32 %v484, %v1954
      %v1970 = vadd.f32 %v485, %v1958
      %v1971 = vadd.f32 %v486, %v1960
      %v1972 = vadd.f32 %v487, %v1962
      %v1973 = vadd.f32 %v488, %v1964
      %v1974 = vld [vmem:[%s5] sm:$0x3]
      %v1975 = vld [vmem:[%s6] sm:$0x3]
      %v1976 = vadd.f32 %v1966, %v1967
      %1977 = vadd.xlane.f32.xlu0 %v1976
      %v1978 = vpop.xlane.xlu0 %1977
      %v1979 = vadd.f32 %v1968, %v1969
      %1980 = vadd.xlane.f32.xlu0 %v1979
      %v1981 = vpop.xlane.xlu0 %1980
      %v1982 = vadd.f32 %v1970, %v1971
      %1983 = vadd.xlane.f32.xlu0 %v1982
      %v1984 = vpop.xlane.xlu0 %1983
      %v1985 = vadd.f32 %v1972, %v1973
      %1986 = vadd.xlane.f32.xlu0 %v1985
      %v1987 = vpop.xlane.xlu0 %1986
      %v1988 = vrcp.pop 256.0
      %v1989 = vmul.f32 %v1978, %v1988
      %v1990 = vmul.f32 %v1981, %v1988
      %v1991 = vmul.f32 %v1984, %v1988
      %v1992 = vmul.f32 %v1987, %v1988
      %v1993 = vsub.f32 %v1966, %v1989
      %v1994 = vsub.f32 %v1967, %v1989
      %v1995 = vsub.f32 %v1968, %v1990
      %v1996 = vsub.f32 %v1969, %v1990
      %v1997 = vsub.f32 %v1970, %v1991
      %v1998 = vsub.f32 %v1971, %v1991
      %v1999 = vsub.f32 %v1972, %v1992
      %v2000 = vsub.f32 %v1973, %v1992
      %v2001 = vmul.f32 %v1993, %v1993
      %v2002 = vmul.f32 %v1994, %v1994
      %v2003 = vmul.f32 %v1995, %v1995
      %v2004 = vmul.f32 %v1996, %v1996
      %v2005 = vmul.f32 %v1997, %v1997
      %v2006 = vmul.f32 %v1998, %v1998
      %v2007 = vmul.f32 %v1999, %v1999
      %v2008 = vmul.f32 %v2000, %v2000
      %v2009 = vadd.f32 %v2001, %v2002
      %2010 = vadd.xlane.f32.xlu0 %v2009
      %v2011 = vpop.xlane.xlu0 %2010
      %v2012 = vadd.f32 %v2003, %v2004
      %2013 = vadd.xlane.f32.xlu0 %v2012
      %v2014 = vpop.xlane.xlu0 %2013
      %v2015 = vadd.f32 %v2005, %v2006
      %2016 = vadd.xlane.f32.xlu0 %v2015
      %v2017 = vpop.xlane.xlu0 %2016
      %v2018 = vadd.f32 %v2007, %v2008
      %2019 = vadd.xlane.f32.xlu0 %v2018
      %v2020 = vpop.xlane.xlu0 %2019
      %v2021 = vmul.f32 %v2011, %v1988
      %v2022 = vmul.f32 %v2014, %v1988
      %v2023 = vmul.f32 %v2017, %v1988
      %v2024 = vmul.f32 %v2020, %v1988
      %v2025 = vadd.f32 %v2021, 1e-05
      %v2026 = vadd.f32 %v2022, 1e-05
      %v2027 = vadd.f32 %v2023, 1e-05
      %v2028 = vadd.f32 %v2024, 1e-05
      %v2029 = vrsqrt.pop %v2025
      %v2030 = vrsqrt.pop %v2026
      %v2031 = vrsqrt.pop %v2027
      %v2032 = vrsqrt.pop %v2028
      %v2033 = vmul.f32 %v1993, %v2029
      %v2034 = vmul.f32 %v1994, %v2029
      %v2035 = vmul.f32 %v1995, %v2030
      %v2036 = vmul.f32 %v1996, %v2030
      %v2037 = vmul.f32 %v1997, %v2031
      %v2038 = vmul.f32 %v1998, %v2031
      %v2039 = vmul.f32 %v1999, %v2032
      %v2040 = vmul.f32 %v2000, %v2032
      %v2042 = vlaneseq
      %v2043 = vshrl.u32 %v2042, 7
      %v2044 = vsub.s32 0, %v2043
      %v2045 = vrot.slane %v1974, %v2044
      %v2046 = vlaneseq
      %v2047 = vshrl.u32 %v2046, 7
      %v2048 = vsub.s32 1, %v2047
      %v2049 = vrot.slane %v1974, %v2048
      %v2052 = vmul.f32 %v2033, %v2045
      %v2053 = vmul.f32 %v2034, %v2049
      %v2054 = vmul.f32 %v2035, %v2045
      %v2055 = vmul.f32 %v2036, %v2049
      %v2056 = vmul.f32 %v2037, %v2045
      %v2057 = vmul.f32 %v2038, %v2049
      %v2058 = vmul.f32 %v2039, %v2045
      %v2059 = vmul.f32 %v2040, %v2049
      %v2061 = vlaneseq
      %v2062 = vshrl.u32 %v2061, 7
      %v2063 = vsub.s32 0, %v2062
      %v2064 = vrot.slane %v1975, %v2063
      %v2065 = vlaneseq
      %v2066 = vshrl.u32 %v2065, 7
      %v2067 = vsub.s32 1, %v2066
      %v2068 = vrot.slane %v1975, %v2067
      %v2071 = vadd.f32 %v2052, %v2064
      %v2072 = vadd.f32 %v2053, %v2068
      %v2073 = vadd.f32 %v2054, %v2064
      %v2074 = vadd.f32 %v2055, %v2068
      %v2075 = vadd.f32 %v2056, %v2064
      %v2076 = vadd.f32 %v2057, %v2068
      %v2077 = vadd.f32 %v2058, %v2064
      %v2078 = vadd.f32 %v2059, %v2068
      %v2079 = vpack.c.bf16 %v2073, %v2071
      %v2080 = vpack.c.bf16 %v2074, %v2072
      %v2081 = vpack.c.bf16 %v2077, %v2075
      %v2082 = vpack.c.bf16 %v2078, %v2076
      %v2083 = vld [vmem:[%s7] sm:$0xff]
      %v2084 = vld [vmem:[%s7 + $0x8] sm:$0xff]
      %v2085 = vld [vmem:[%s7 + $0x10] sm:$0xff]
      %v2086 = vld [vmem:[%s7 + $0x18] sm:$0xff]
      %v2087 = vld [vmem:[%s7 + $0x20] sm:$0xff]
      %v2088 = vld [vmem:[%s7 + $0x28] sm:$0xff]
      %v2089 = vld [vmem:[%s7 + $0x30] sm:$0xff]
      %v2090 = vld [vmem:[%s7 + $0x38] sm:$0xff]
      %v2091 = vld [vmem:[%s7 + $0x40] sm:$0xff]
      %v2092 = vld [vmem:[%s7 + $0x48] sm:$0xff]
      %v2093 = vld [vmem:[%s7 + $0x50] sm:$0xff]
      %v2094 = vld [vmem:[%s7 + $0x58] sm:$0xff]
      %v2095 = vld [vmem:[%s7 + $0x60] sm:$0xff]
      %v2096 = vld [vmem:[%s7 + $0x68] sm:$0xff]
      %v2097 = vld [vmem:[%s7 + $0x70] sm:$0xff]
      %v2098 = vld [vmem:[%s7 + $0x78] sm:$0xff]
      %v2099 = vld [vmem:[%s7 + $0x80] sm:$0xff]
      %v2100 = vld [vmem:[%s7 + $0x88] sm:$0xff]
      %v2101 = vld [vmem:[%s7 + $0x90] sm:$0xff]
      %v2102 = vld [vmem:[%s7 + $0x98] sm:$0xff]
      %v2103 = vld [vmem:[%s7 + $0xa0] sm:$0xff]
      %v2104 = vld [vmem:[%s7 + $0xa8] sm:$0xff]
      %v2105 = vld [vmem:[%s7 + $0xb0] sm:$0xff]
      %v2106 = vld [vmem:[%s7 + $0xb8] sm:$0xff]
      %v2107 = vld [vmem:[%s7 + $0xc0] sm:$0xff]
      %v2108 = vld [vmem:[%s7 + $0xc8] sm:$0xff]
      %v2109 = vld [vmem:[%s7 + $0xd0] sm:$0xff]
      %v2110 = vld [vmem:[%s7 + $0xd8] sm:$0xff]
      %v2111 = vld [vmem:[%s7 + $0xe0] sm:$0xff]
      %v2112 = vld [vmem:[%s7 + $0xe8] sm:$0xff]
      %v2113 = vld [vmem:[%s7 + $0xf0] sm:$0xff]
      %v2114 = vld [vmem:[%s7 + $0xf8] sm:$0xff]
      %v2115 = vld [vmem:[%s7 + $0x100] sm:$0xff]
      %v2116 = vld [vmem:[%s7 + $0x108] sm:$0xff]
      %v2117 = vld [vmem:[%s7 + $0x110] sm:$0xff]
      %v2118 = vld [vmem:[%s7 + $0x118] sm:$0xff]
      %v2119 = vld [vmem:[%s7 + $0x120] sm:$0xff]
      %v2120 = vld [vmem:[%s7 + $0x128] sm:$0xff]
      %v2121 = vld [vmem:[%s7 + $0x130] sm:$0xff]
      %v2122 = vld [vmem:[%s7 + $0x138] sm:$0xff]
      %v2123 = vld [vmem:[%s7 + $0x140] sm:$0xff]
      %v2124 = vld [vmem:[%s7 + $0x148] sm:$0xff]
      %v2125 = vld [vmem:[%s7 + $0x150] sm:$0xff]
      %v2126 = vld [vmem:[%s7 + $0x158] sm:$0xff]
      %v2127 = vld [vmem:[%s7 + $0x160] sm:$0xff]
      %v2128 = vld [vmem:[%s7 + $0x168] sm:$0xff]
      %v2129 = vld [vmem:[%s7 + $0x170] sm:$0xff]
      %v2130 = vld [vmem:[%s7 + $0x178] sm:$0xff]
      %v2131 = vld [vmem:[%s7 + $0x180] sm:$0xff]
      %v2132 = vld [vmem:[%s7 + $0x188] sm:$0xff]
      %v2133 = vld [vmem:[%s7 + $0x190] sm:$0xff]
      %v2134 = vld [vmem:[%s7 + $0x198] sm:$0xff]
      %v2135 = vld [vmem:[%s7 + $0x1a0] sm:$0xff]
      %v2136 = vld [vmem:[%s7 + $0x1a8] sm:$0xff]
      %v2137 = vld [vmem:[%s7 + $0x1b0] sm:$0xff]
      %v2138 = vld [vmem:[%s7 + $0x1b8] sm:$0xff]
      %v2139 = vld [vmem:[%s7 + $0x1c0] sm:$0xff]
      %v2140 = vld [vmem:[%s7 + $0x1c8] sm:$0xff]
      %v2141 = vld [vmem:[%s7 + $0x1d0] sm:$0xff]
      %v2142 = vld [vmem:[%s7 + $0x1d8] sm:$0xff]
      %v2143 = vld [vmem:[%s7 + $0x1e0] sm:$0xff]
      %v2144 = vld [vmem:[%s7 + $0x1e8] sm:$0xff]
      %v2145 = vld [vmem:[%s7 + $0x1f0] sm:$0xff]
      %v2146 = vld [vmem:[%s7 + $0x1f8] sm:$0xff]
      %v2147 = vld [vmem:[%s8] sm:$0xf]
      %v2149 = vlaneseq
      %v2150 = vshrl.u32 %v2149, 7
      %v2151 = vsub.s32 0, %v2150
      %v2152 = vrot.slane %v2147, %v2151
      %v2153 = vlaneseq
      %v2154 = vshrl.u32 %v2153, 7
      %v2155 = vsub.s32 1, %v2154
      %v2156 = vrot.slane %v2147, %v2155
      %v2157 = vlaneseq
      %v2158 = vshrl.u32 %v2157, 7
      %v2159 = vsub.s32 2, %v2158
      %v2160 = vrot.slane %v2147, %v2159
      %v2161 = vlaneseq
      %v2162 = vshrl.u32 %v2161, 7
      %v2163 = vsub.s32 3, %v2162
      %v2164 = vrot.slane %v2147, %v2163
      %v2233 = vunpack.c.l.b16 %v2083
      %v2234 = vunpack.c.h.b16 %v2083
      %v2235 = vunpack.c.l.b16 %v2084
      %v2236 = vunpack.c.h.b16 %v2084
      %v2237 = vunpack.c.l.b16 %v2085
      %v2238 = vunpack.c.h.b16 %v2085
      %v2239 = vunpack.c.l.b16 %v2086
      %v2240 = vunpack.c.h.b16 %v2086
      %v2241 = vunpack.c.l.b16 %v2087
      %v2242 = vunpack.c.h.b16 %v2087
      %v2243 = vunpack.c.l.b16 %v2088
      %v2244 = vunpack.c.h.b16 %v2088
      %v2245 = vunpack.c.l.b16 %v2089
      %v2246 = vunpack.c.h.b16 %v2089
      %v2247 = vunpack.c.l.b16 %v2090
      %v2248 = vunpack.c.h.b16 %v2090
      %v2249 = vunpack.c.l.b16 %v2091
      %v2250 = vunpack.c.h.b16 %v2091
      %v2251 = vunpack.c.l.b16 %v2092
      %v2252 = vunpack.c.h.b16 %v2092
      %v2253 = vunpack.c.l.b16 %v2093
      %v2254 = vunpack.c.h.b16 %v2093
      %v2255 = vunpack.c.l.b16 %v2094
      %v2256 = vunpack.c.h.b16 %v2094
      %v2257 = vunpack.c.l.b16 %v2095
      %v2258 = vunpack.c.h.b16 %v2095
      %v2259 = vunpack.c.l.b16 %v2096
      %v2260 = vunpack.c.h.b16 %v2096
      %v2261 = vunpack.c.l.b16 %v2097
      %v2262 = vunpack.c.h.b16 %v2097
      %v2263 = vunpack.c.l.b16 %v2098
      %v2264 = vunpack.c.h.b16 %v2098
      %v2265 = vunpack.c.l.b16 %v2099
      %v2266 = vunpack.c.h.b16 %v2099
      %v2267 = vunpack.c.l.b16 %v2100
      %v2268 = vunpack.c.h.b16 %v2100
      %v2269 = vunpack.c.l.b16 %v2101
      %v2270 = vunpack.c.h.b16 %v2101
      %v2271 = vunpack.c.l.b16 %v2102
      %v2272 = vunpack.c.h.b16 %v2102
      %v2273 = vunpack.c.l.b16 %v2103
      %v2274 = vunpack.c.h.b16 %v2103
      %v2275 = vunpack.c.l.b16 %v2104
      %v2276 = vunpack.c.h.b16 %v2104
      %v2277 = vunpack.c.l.b16 %v2105
      %v2278 = vunpack.c.h.b16 %v2105
      %v2279 = vunpack.c.l.b16 %v2106
      %v2280 = vunpack.c.h.b16 %v2106
      %v2281 = vunpack.c.l.b16 %v2107
      %v2282 = vunpack.c.h.b16 %v2107
      %v2283 = vunpack.c.l.b16 %v2108
      %v2284 = vunpack.c.h.b16 %v2108
      %v2285 = vunpack.c.l.b16 %v2109
      %v2286 = vunpack.c.h.b16 %v2109
      %v2287 = vunpack.c.l.b16 %v2110
      %v2288 = vunpack.c.h.b16 %v2110
      %v2289 = vunpack.c.l.b16 %v2111
      %v2290 = vunpack.c.h.b16 %v2111
      %v2291 = vunpack.c.l.b16 %v2112
      %v2292 = vunpack.c.h.b16 %v2112
      %v2293 = vunpack.c.l.b16 %v2113
      %v2294 = vunpack.c.h.b16 %v2113
      %v2295 = vunpack.c.l.b16 %v2114
      %v2296 = vunpack.c.h.b16 %v2114
      %v2297 = vunpack.c.l.b16 %v2115
      %v2298 = vunpack.c.h.b16 %v2115
      %v2299 = vunpack.c.l.b16 %v2116
      %v2300 = vunpack.c.h.b16 %v2116
      %v2301 = vunpack.c.l.b16 %v2117
      %v2302 = vunpack.c.h.b16 %v2117
      %v2303 = vunpack.c.l.b16 %v2118
      %v2304 = vunpack.c.h.b16 %v2118
      %v2305 = vunpack.c.l.b16 %v2119
      %v2306 = vunpack.c.h.b16 %v2119
      %v2307 = vunpack.c.l.b16 %v2120
      %v2308 = vunpack.c.h.b16 %v2120
      %v2309 = vunpack.c.l.b16 %v2121
      %v2310 = vunpack.c.h.b16 %v2121
      %v2311 = vunpack.c.l.b16 %v2122
      %v2312 = vunpack.c.h.b16 %v2122
      %v2313 = vunpack.c.l.b16 %v2123
      %v2314 = vunpack.c.h.b16 %v2123
      %v2315 = vunpack.c.l.b16 %v2124
      %v2316 = vunpack.c.h.b16 %v2124
      %v2317 = vunpack.c.l.b16 %v2125
      %v2318 = vunpack.c.h.b16 %v2125
      %v2319 = vunpack.c.l.b16 %v2126
      %v2320 = vunpack.c.h.b16 %v2126
      %v2321 = vunpack.c.l.b16 %v2127
      %v2322 = vunpack.c.h.b16 %v2127
      %v2323 = vunpack.c.l.b16 %v2128
      %v2324 = vunpack.c.h.b16 %v2128
      %v2325 = vunpack.c.l.b16 %v2129
      %v2326 = vunpack.c.h.b16 %v2129
      %v2327 = vunpack.c.l.b16 %v2130
      %v2328 = vunpack.c.h.b16 %v2130
      %v2329 = vunpack.c.l.b16 %v2131
      %v2330 = vunpack.c.h.b16 %v2131
      %v2331 = vunpack.c.l.b16 %v2132
      %v2332 = vunpack.c.h.b16 %v2132
      %v2333 = vunpack.c.l.b16 %v2133
      %v2334 = vunpack.c.h.b16 %v2133
      %v2335 = vunpack.c.l.b16 %v2134
      %v2336 = vunpack.c.h.b16 %v2134
      %v2337 = vunpack.c.l.b16 %v2135
      %v2338 = vunpack.c.h.b16 %v2135
      %v2339 = vunpack.c.l.b16 %v2136
      %v2340 = vunpack.c.h.b16 %v2136
      %v2341 = vunpack.c.l.b16 %v2137
      %v2342 = vunpack.c.h.b16 %v2137
      %v2343 = vunpack.c.l.b16 %v2138
      %v2344 = vunpack.c.h.b16 %v2138
      %v2345 = vunpack.c.l.b16 %v2139
      %v2346 = vunpack.c.h.b16 %v2139
      %v2347 = vunpack.c.l.b16 %v2140
      %v2348 = vunpack.c.h.b16 %v2140
      %v2349 = vunpack.c.l.b16 %v2141
      %v2350 = vunpack.c.h.b16 %v2141
      %v2351 = vunpack.c.l.b16 %v2142
      %v2352 = vunpack.c.h.b16 %v2142
      %v2353 = vunpack.c.l.b16 %v2143
      %v2354 = vunpack.c.h.b16 %v2143
      %v2355 = vunpack.c.l.b16 %v2144
      %v2356 = vunpack.c.h.b16 %v2144
      %v2357 = vunpack.c.l.b16 %v2145
      %v2358 = vunpack.c.h.b16 %v2145
      %v2359 = vunpack.c.l.b16 %v2146
      %v2360 = vunpack.c.h.b16 %v2146
      %v2361 = vpack.c.b16 %v2237, %v2233
      %v2362 = vpack.c.b16 %v2238, %v2234
      %v2363 = vpack.c.b16 %v2239, %v2235
      %v2364 = vpack.c.b16 %v2240, %v2236
      %v2365 = vpack.c.b16 %v2245, %v2241
      %v2366 = vpack.c.b16 %v2246, %v2242
      %v2367 = vpack.c.b16 %v2247, %v2243
      %v2368 = vpack.c.b16 %v2248, %v2244
      %v2369 = vpack.c.b16 %v2253, %v2249
      %v2370 = vpack.c.b16 %v2254, %v2250
      %v2371 = vpack.c.b16 %v2255, %v2251
      %v2372 = vpack.c.b16 %v2256, %v2252
      %v2373 = vpack.c.b16 %v2261, %v2257
      %v2374 = vpack.c.b16 %v2262, %v2258
      %v2375 = vpack.c.b16 %v2263, %v2259
      %v2376 = vpack.c.b16 %v2264, %v2260
      %v2377 = vpack.c.b16 %v2269, %v2265
      %v2378 = vpack.c.b16 %v2270, %v2266
      %v2379 = vpack.c.b16 %v2271, %v2267
      %v2380 = vpack.c.b16 %v2272, %v2268
      %v2381 = vpack.c.b16 %v2277, %v2273
      %v2382 = vpack.c.b16 %v2278, %v2274
      %v2383 = vpack.c.b16 %v2279, %v2275
      %v2384 = vpack.c.b16 %v2280, %v2276
      %v2385 = vpack.c.b16 %v2285, %v2281
      %v2386 = vpack.c.b16 %v2286, %v2282
      %v2387 = vpack.c.b16 %v2287, %v2283
      %v2388 = vpack.c.b16 %v2288, %v2284
      %v2389 = vpack.c.b16 %v2293, %v2289
      %v2390 = vpack.c.b16 %v2294, %v2290
      %v2391 = vpack.c.b16 %v2295, %v2291
      %v2392 = vpack.c.b16 %v2296, %v2292
      %v2393 = vpack.c.b16 %v2301, %v2297
      %v2394 = vpack.c.b16 %v2302, %v2298
      %v2395 = vpack.c.b16 %v2303, %v2299
      %v2396 = vpack.c.b16 %v2304, %v2300
      %v2397 = vpack.c.b16 %v2309, %v2305
      %v2398 = vpack.c.b16 %v2310, %v2306
      %v2399 = vpack.c.b16 %v2311, %v2307
      %v2400 = vpack.c.b16 %v2312, %v2308
      %v2401 = vpack.c.b16 %v2317, %v2313
      %v2402 = vpack.c.b16 %v2318, %v2314
      %v2403 = vpack.c.b16 %v2319, %v2315
      %v2404 = vpack.c.b16 %v2320, %v2316
      %v2405 = vpack.c.b16 %v2325, %v2321
      %v2406 = vpack.c.b16 %v2326, %v2322
      %v2407 = vpack.c.b16 %v2327, %v2323
      %v2408 = vpack.c.b16 %v2328, %v2324
      %v2409 = vpack.c.b16 %v2333, %v2329
      %v2410 = vpack.c.b16 %v2334, %v2330
      %v2411 = vpack.c.b16 %v2335, %v2331
      %v2412 = vpack.c.b16 %v2336, %v2332
      %v2413 = vpack.c.b16 %v2341, %v2337
      %v2414 = vpack.c.b16 %v2342, %v2338
      %v2415 = vpack.c.b16 %v2343, %v2339
      %v2416 = vpack.c.b16 %v2344, %v2340
      %v2417 = vpack.c.b16 %v2349, %v2345
      %v2418 = vpack.c.b16 %v2350, %v2346
      %v2419 = vpack.c.b16 %v2351, %v2347
      %v2420 = vpack.c.b16 %v2352, %v2348
      %v2421 = vpack.c.b16 %v2357, %v2353
      %v2422 = vpack.c.b16 %v2358, %v2354
      %v2423 = vpack.c.b16 %v2359, %v2355
      %v2424 = vpack.c.b16 %v2360, %v2356
      %2489 = vmatprep.subr.bf16.mxu0 %v2362
      %2490 = vmatpush1.bf16.msra.mxu0 %v2361
      %2491 = vmatprep.subr.bf16.mxu0 %v2366
      %2492 = vmatpush1.bf16.msra.mxu0 %v2365
      %2493 = vmatprep.subr.bf16.mxu0 %v2370
      %2494 = vmatpush1.bf16.msra.mxu0 %v2369
      %2495 = vmatprep.subr.bf16.mxu0 %v2374
      %2496 = vmatpush1.bf16.msra.mxu0 %v2373
      %2497 = vmatprep.subr.bf16.mxu0 %v2378
      %2498 = vmatpush1.bf16.msra.mxu0 %v2377
      %2499 = vmatprep.subr.bf16.mxu0 %v2382
      %2500 = vmatpush1.bf16.msra.mxu0 %v2381
      %2501 = vmatprep.subr.bf16.mxu0 %v2386
      %2502 = vmatpush1.bf16.msra.mxu0 %v2385
      %2503 = vmatprep.subr.bf16.mxu0 %v2390
      %2504 = vmatpush1.bf16.msra.mxu0 %v2389
      %2505 = vmatprep.subr.bf16.mxu0 %v2394
      %2506 = vmatpush1.bf16.msra.mxu0 %v2393
      %2507 = vmatprep.subr.bf16.mxu0 %v2398
      %2508 = vmatpush1.bf16.msra.mxu0 %v2397
      %2509 = vmatprep.subr.bf16.mxu0 %v2402
      %2510 = vmatpush1.bf16.msra.mxu0 %v2401
      %2511 = vmatprep.subr.bf16.mxu0 %v2406
      %2512 = vmatpush1.bf16.msra.mxu0 %v2405
      %2513 = vmatprep.subr.bf16.mxu0 %v2410
      %2514 = vmatpush1.bf16.msra.mxu0 %v2409
      %2515 = vmatprep.subr.bf16.mxu0 %v2414
      %2516 = vmatpush1.bf16.msra.mxu0 %v2413
      %2517 = vmatprep.subr.bf16.mxu0 %v2418
      %2518 = vmatpush1.bf16.msra.mxu0 %v2417
      %2519 = vmatprep.subr.bf16.mxu0 %v2422
      %2520 = vmatpush1.bf16.msra.mxu0 %v2421
      %2521 = vmatprep.mubr.bf16.mxu0 %v2080
      %2522 = vmatmul.mubr.bf16.gmra.mrb[0].mxu0 %v2079
      %v2523 = vpop.f32.mrb[0].mxu0
      %v2524 = vadd.f32 %v2152, %v2523
      %v2525 = vpop.f32.mrb[0].mxu0
      %v2526 = vadd.f32 %v2156, %v2525
      %v2527 = vpop.f32.mrb[0].mxu0
      %v2528 = vadd.f32 %v2152, %v2527
      %v2529 = vpop.f32.mrb[0].mxu0
      %v2530 = vadd.f32 %v2156, %v2529
      %2531 = vmatprep.mubr.bf16.mxu0 %v2082
      %2532 = vmatmul.mubr.bf16.gmra.mrb[0].mxu0 %v2081
      %v2533 = vpop.f32.mrb[0].mxu0
      %v2534 = vadd.f32 %v2152, %v2533
      %v2535 = vpop.f32.mrb[0].mxu0
      %v2536 = vadd.f32 %v2156, %v2535
      %v2537 = vpop.f32.mrb[0].mxu0
      %v2538 = vadd.f32 %v2152, %v2537
      %v2539 = vpop.f32.mrb[0].mxu0
      %v2540 = vadd.f32 %v2156, %v2539
      %2541 = vdwg.mxu0
      %2542 = vmatprep.subr.bf16.mxu0 %v2364
      %2543 = vmatpush1.bf16.msra.mxu0 %v2363
      %2544 = vmatprep.subr.bf16.mxu0 %v2368
      %2545 = vmatpush1.bf16.msra.mxu0 %v2367
      %2546 = vmatprep.subr.bf16.mxu0 %v2372
      %2547 = vmatpush1.bf16.msra.mxu0 %v2371
      %2548 = vmatprep.subr.bf16.mxu0 %v2376
      %2549 = vmatpush1.bf16.msra.mxu0 %v2375
      %2550 = vmatprep.subr.bf16.mxu0 %v2380
      %2551 = vmatpush1.bf16.msra.mxu0 %v2379
      %2552 = vmatprep.subr.bf16.mxu0 %v2384
      %2553 = vmatpush1.bf16.msra.mxu0 %v2383
      %2554 = vmatprep.subr.bf16.mxu0 %v2388
      %2555 = vmatpush1.bf16.msra.mxu0 %v2387
      %2556 = vmatprep.subr.bf16.mxu0 %v2392
      %2557 = vmatpush1.bf16.msra.mxu0 %v2391
      %2558 = vmatprep.subr.bf16.mxu0 %v2396
      %2559 = vmatpush1.bf16.msra.mxu0 %v2395
      %2560 = vmatprep.subr.bf16.mxu0 %v2400
      %2561 = vmatpush1.bf16.msra.mxu0 %v2399
      %2562 = vmatprep.subr.bf16.mxu0 %v2404
      %2563 = vmatpush1.bf16.msra.mxu0 %v2403
      %2564 = vmatprep.subr.bf16.mxu0 %v2408
      %2565 = vmatpush1.bf16.msra.mxu0 %v2407
      %2566 = vmatprep.subr.bf16.mxu0 %v2412
      %2567 = vmatpush1.bf16.msra.mxu0 %v2411
      %2568 = vmatprep.subr.bf16.mxu0 %v2416
      %2569 = vmatpush1.bf16.msra.mxu0 %v2415
      %2570 = vmatprep.subr.bf16.mxu0 %v2420
      %2571 = vmatpush1.bf16.msra.mxu0 %v2419
      %2572 = vmatprep.subr.bf16.mxu0 %v2424
      %2573 = vmatpush1.bf16.msra.mxu0 %v2423
      %2574 = vmatprep.mubr.bf16.mxu0 %v2080
      %2575 = vmatmul.mubr.bf16.gmra.mrb[0].mxu0 %v2079
      %v2576 = vpop.f32.mrb[0].mxu0
      %v2577 = vadd.f32 %v2160, %v2576
      %v2578 = vpop.f32.mrb[0].mxu0
      %v2579 = vadd.f32 %v2164, %v2578
      %v2580 = vpop.f32.mrb[0].mxu0
      %v2581 = vadd.f32 %v2160, %v2580
      %v2582 = vpop.f32.mrb[0].mxu0
      %v2583 = vadd.f32 %v2164, %v2582
      %2584 = vmatprep.mubr.bf16.mxu0 %v2082
      %2585 = vmatmul.mubr.bf16.gmra.mrb[0].mxu0 %v2081
      %v2586 = vpop.f32.mrb[0].mxu0
      %v2587 = vadd.f32 %v2160, %v2586
      %v2588 = vpop.f32.mrb[0].mxu0
      %v2589 = vadd.f32 %v2164, %v2588
      %v2590 = vpop.f32.mrb[0].mxu0
      %v2591 = vadd.f32 %v2160, %v2590
      %v2592 = vpop.f32.mrb[0].mxu0
      %v2593 = vadd.f32 %v2164, %v2592
      %2594 = vdwg.mxu0
      %v2595 = vmax.f32 %v2524, 0.0
      %v2596 = vmax.f32 %v2526, 0.0
      %v2597 = vmax.f32 %v2577, 0.0
      %v2598 = vmax.f32 %v2579, 0.0
      %v2599 = vmax.f32 %v2528, 0.0
      %v2600 = vmax.f32 %v2530, 0.0
      %v2601 = vmax.f32 %v2581, 0.0
      %v2602 = vmax.f32 %v2583, 0.0
      %v2603 = vmax.f32 %v2534, 0.0
      %v2604 = vmax.f32 %v2536, 0.0
      %v2605 = vmax.f32 %v2587, 0.0
      %v2606 = vmax.f32 %v2589, 0.0
      %v2607 = vmax.f32 %v2538, 0.0
      %v2608 = vmax.f32 %v2540, 0.0
      %v2609 = vmax.f32 %v2591, 0.0
      %v2610 = vmax.f32 %v2593, 0.0
      %v2611 = vpack.c.bf16 %v2599, %v2595
      %v2612 = vpack.c.bf16 %v2600, %v2596
      %v2613 = vpack.c.bf16 %v2601, %v2597
      %v2614 = vpack.c.bf16 %v2602, %v2598
      %v2615 = vpack.c.bf16 %v2607, %v2603
      %v2616 = vpack.c.bf16 %v2608, %v2604
      %v2617 = vpack.c.bf16 %v2609, %v2605
      %v2618 = vpack.c.bf16 %v2610, %v2606
      %v2619 = vld [vmem:[%s9] sm:$0xff]
      %v2620 = vld [vmem:[%s9 + $0x8] sm:$0xff]
      %v2621 = vld [vmem:[%s9 + $0x10] sm:$0xff]
      %v2622 = vld [vmem:[%s9 + $0x18] sm:$0xff]
      %v2623 = vld [vmem:[%s9 + $0x20] sm:$0xff]
      %v2624 = vld [vmem:[%s9 + $0x28] sm:$0xff]
      %v2625 = vld [vmem:[%s9 + $0x30] sm:$0xff]
      %v2626 = vld [vmem:[%s9 + $0x38] sm:$0xff]
      %v2627 = vld [vmem:[%s9 + $0x40] sm:$0xff]
      %v2628 = vld [vmem:[%s9 + $0x48] sm:$0xff]
      %v2629 = vld [vmem:[%s9 + $0x50] sm:$0xff]
      %v2630 = vld [vmem:[%s9 + $0x58] sm:$0xff]
      %v2631 = vld [vmem:[%s9 + $0x60] sm:$0xff]
      %v2632 = vld [vmem:[%s9 + $0x68] sm:$0xff]
      %v2633 = vld [vmem:[%s9 + $0x70] sm:$0xff]
      %v2634 = vld [vmem:[%s9 + $0x78] sm:$0xff]
      %v2635 = vld [vmem:[%s9 + $0x80] sm:$0xff]
      %v2636 = vld [vmem:[%s9 + $0x88] sm:$0xff]
      %v2637 = vld [vmem:[%s9 + $0x90] sm:$0xff]
      %v2638 = vld [vmem:[%s9 + $0x98] sm:$0xff]
      %v2639 = vld [vmem:[%s9 + $0xa0] sm:$0xff]
      %v2640 = vld [vmem:[%s9 + $0xa8] sm:$0xff]
      %v2641 = vld [vmem:[%s9 + $0xb0] sm:$0xff]
      %v2642 = vld [vmem:[%s9 + $0xb8] sm:$0xff]
      %v2643 = vld [vmem:[%s9 + $0xc0] sm:$0xff]
      %v2644 = vld [vmem:[%s9 + $0xc8] sm:$0xff]
      %v2645 = vld [vmem:[%s9 + $0xd0] sm:$0xff]
      %v2646 = vld [vmem:[%s9 + $0xd8] sm:$0xff]
      %v2647 = vld [vmem:[%s9 + $0xe0] sm:$0xff]
      %v2648 = vld [vmem:[%s9 + $0xe8] sm:$0xff]
      %v2649 = vld [vmem:[%s9 + $0xf0] sm:$0xff]
      %v2650 = vld [vmem:[%s9 + $0xf8] sm:$0xff]
      %v2651 = vld [vmem:[%s9 + $0x100] sm:$0xff]
      %v2652 = vld [vmem:[%s9 + $0x108] sm:$0xff]
      %v2653 = vld [vmem:[%s9 + $0x110] sm:$0xff]
      %v2654 = vld [vmem:[%s9 + $0x118] sm:$0xff]
      %v2655 = vld [vmem:[%s9 + $0x120] sm:$0xff]
      %v2656 = vld [vmem:[%s9 + $0x128] sm:$0xff]
      %v2657 = vld [vmem:[%s9 + $0x130] sm:$0xff]
      %v2658 = vld [vmem:[%s9 + $0x138] sm:$0xff]
      %v2659 = vld [vmem:[%s9 + $0x140] sm:$0xff]
      %v2660 = vld [vmem:[%s9 + $0x148] sm:$0xff]
      %v2661 = vld [vmem:[%s9 + $0x150] sm:$0xff]
      %v2662 = vld [vmem:[%s9 + $0x158] sm:$0xff]
      %v2663 = vld [vmem:[%s9 + $0x160] sm:$0xff]
      %v2664 = vld [vmem:[%s9 + $0x168] sm:$0xff]
      %v2665 = vld [vmem:[%s9 + $0x170] sm:$0xff]
      %v2666 = vld [vmem:[%s9 + $0x178] sm:$0xff]
      %v2667 = vld [vmem:[%s9 + $0x180] sm:$0xff]
      %v2668 = vld [vmem:[%s9 + $0x188] sm:$0xff]
      %v2669 = vld [vmem:[%s9 + $0x190] sm:$0xff]
      %v2670 = vld [vmem:[%s9 + $0x198] sm:$0xff]
      %v2671 = vld [vmem:[%s9 + $0x1a0] sm:$0xff]
      %v2672 = vld [vmem:[%s9 + $0x1a8] sm:$0xff]
      %v2673 = vld [vmem:[%s9 + $0x1b0] sm:$0xff]
      %v2674 = vld [vmem:[%s9 + $0x1b8] sm:$0xff]
      %v2675 = vld [vmem:[%s9 + $0x1c0] sm:$0xff]
      %v2676 = vld [vmem:[%s9 + $0x1c8] sm:$0xff]
      %v2677 = vld [vmem:[%s9 + $0x1d0] sm:$0xff]
      %v2678 = vld [vmem:[%s9 + $0x1d8] sm:$0xff]
      %v2679 = vld [vmem:[%s9 + $0x1e0] sm:$0xff]
      %v2680 = vld [vmem:[%s9 + $0x1e8] sm:$0xff]
      %v2681 = vld [vmem:[%s9 + $0x1f0] sm:$0xff]
      %v2682 = vld [vmem:[%s9 + $0x1f8] sm:$0xff]
      %v2747 = vunpack.c.l.b16 %v2619
      %v2748 = vunpack.c.h.b16 %v2619
      %v2749 = vunpack.c.l.b16 %v2620
      %v2750 = vunpack.c.h.b16 %v2620
      %v2751 = vunpack.c.l.b16 %v2621
      %v2752 = vunpack.c.h.b16 %v2621
      %v2753 = vunpack.c.l.b16 %v2622
      %v2754 = vunpack.c.h.b16 %v2622
      %v2755 = vunpack.c.l.b16 %v2623
      %v2756 = vunpack.c.h.b16 %v2623
      %v2757 = vunpack.c.l.b16 %v2624
      %v2758 = vunpack.c.h.b16 %v2624
      %v2759 = vunpack.c.l.b16 %v2625
      %v2760 = vunpack.c.h.b16 %v2625
      %v2761 = vunpack.c.l.b16 %v2626
      %v2762 = vunpack.c.h.b16 %v2626
      %v2763 = vunpack.c.l.b16 %v2627
      %v2764 = vunpack.c.h.b16 %v2627
      %v2765 = vunpack.c.l.b16 %v2628
      %v2766 = vunpack.c.h.b16 %v2628
      %v2767 = vunpack.c.l.b16 %v2629
      %v2768 = vunpack.c.h.b16 %v2629
      %v2769 = vunpack.c.l.b16 %v2630
      %v2770 = vunpack.c.h.b16 %v2630
      %v2771 = vunpack.c.l.b16 %v2631
      %v2772 = vunpack.c.h.b16 %v2631
      %v2773 = vunpack.c.l.b16 %v2632
      %v2774 = vunpack.c.h.b16 %v2632
      %v2775 = vunpack.c.l.b16 %v2633
      %v2776 = vunpack.c.h.b16 %v2633
      %v2777 = vunpack.c.l.b16 %v2634
      %v2778 = vunpack.c.h.b16 %v2634
      %v2779 = vunpack.c.l.b16 %v2635
      %v2780 = vunpack.c.h.b16 %v2635
      %v2781 = vunpack.c.l.b16 %v2636
      %v2782 = vunpack.c.h.b16 %v2636
      %v2783 = vunpack.c.l.b16 %v2637
      %v2784 = vunpack.c.h.b16 %v2637
      %v2785 = vunpack.c.l.b16 %v2638
      %v2786 = vunpack.c.h.b16 %v2638
      %v2787 = vunpack.c.l.b16 %v2639
      %v2788 = vunpack.c.h.b16 %v2639
      %v2789 = vunpack.c.l.b16 %v2640
      %v2790 = vunpack.c.h.b16 %v2640
      %v2791 = vunpack.c.l.b16 %v2641
      %v2792 = vunpack.c.h.b16 %v2641
      %v2793 = vunpack.c.l.b16 %v2642
      %v2794 = vunpack.c.h.b16 %v2642
      %v2795 = vunpack.c.l.b16 %v2643
      %v2796 = vunpack.c.h.b16 %v2643
      %v2797 = vunpack.c.l.b16 %v2644
      %v2798 = vunpack.c.h.b16 %v2644
      %v2799 = vunpack.c.l.b16 %v2645
      %v2800 = vunpack.c.h.b16 %v2645
      %v2801 = vunpack.c.l.b16 %v2646
      %v2802 = vunpack.c.h.b16 %v2646
      %v2803 = vunpack.c.l.b16 %v2647
      %v2804 = vunpack.c.h.b16 %v2647
      %v2805 = vunpack.c.l.b16 %v2648
      %v2806 = vunpack.c.h.b16 %v2648
      %v2807 = vunpack.c.l.b16 %v2649
      %v2808 = vunpack.c.h.b16 %v2649
      %v2809 = vunpack.c.l.b16 %v2650
      %v2810 = vunpack.c.h.b16 %v2650
      %v2811 = vunpack.c.l.b16 %v2651
      %v2812 = vunpack.c.h.b16 %v2651
      %v2813 = vunpack.c.l.b16 %v2652
      %v2814 = vunpack.c.h.b16 %v2652
      %v2815 = vunpack.c.l.b16 %v2653
      %v2816 = vunpack.c.h.b16 %v2653
      %v2817 = vunpack.c.l.b16 %v2654
      %v2818 = vunpack.c.h.b16 %v2654
      %v2819 = vunpack.c.l.b16 %v2655
      %v2820 = vunpack.c.h.b16 %v2655
      %v2821 = vunpack.c.l.b16 %v2656
      %v2822 = vunpack.c.h.b16 %v2656
      %v2823 = vunpack.c.l.b16 %v2657
      %v2824 = vunpack.c.h.b16 %v2657
      %v2825 = vunpack.c.l.b16 %v2658
      %v2826 = vunpack.c.h.b16 %v2658
      %v2827 = vunpack.c.l.b16 %v2659
      %v2828 = vunpack.c.h.b16 %v2659
      %v2829 = vunpack.c.l.b16 %v2660
      %v2830 = vunpack.c.h.b16 %v2660
      %v2831 = vunpack.c.l.b16 %v2661
      %v2832 = vunpack.c.h.b16 %v2661
      %v2833 = vunpack.c.l.b16 %v2662
      %v2834 = vunpack.c.h.b16 %v2662
      %v2835 = vunpack.c.l.b16 %v2663
      %v2836 = vunpack.c.h.b16 %v2663
      %v2837 = vunpack.c.l.b16 %v2664
      %v2838 = vunpack.c.h.b16 %v2664
      %v2839 = vunpack.c.l.b16 %v2665
      %v2840 = vunpack.c.h.b16 %v2665
      %v2841 = vunpack.c.l.b16 %v2666
      %v2842 = vunpack.c.h.b16 %v2666
      %v2843 = vunpack.c.l.b16 %v2667
      %v2844 = vunpack.c.h.b16 %v2667
      %v2845 = vunpack.c.l.b16 %v2668
      %v2846 = vunpack.c.h.b16 %v2668
      %v2847 = vunpack.c.l.b16 %v2669
      %v2848 = vunpack.c.h.b16 %v2669
      %v2849 = vunpack.c.l.b16 %v2670
      %v2850 = vunpack.c.h.b16 %v2670
      %v2851 = vunpack.c.l.b16 %v2671
      %v2852 = vunpack.c.h.b16 %v2671
      %v2853 = vunpack.c.l.b16 %v2672
      %v2854 = vunpack.c.h.b16 %v2672
      %v2855 = vunpack.c.l.b16 %v2673
      %v2856 = vunpack.c.h.b16 %v2673
      %v2857 = vunpack.c.l.b16 %v2674
      %v2858 = vunpack.c.h.b16 %v2674
      %v2859 = vunpack.c.l.b16 %v2675
      %v2860 = vunpack.c.h.b16 %v2675
      %v2861 = vunpack.c.l.b16 %v2676
      %v2862 = vunpack.c.h.b16 %v2676
      %v2863 = vunpack.c.l.b16 %v2677
      %v2864 = vunpack.c.h.b16 %v2677
      %v2865 = vunpack.c.l.b16 %v2678
      %v2866 = vunpack.c.h.b16 %v2678
      %v2867 = vunpack.c.l.b16 %v2679
      %v2868 = vunpack.c.h.b16 %v2679
      %v2869 = vunpack.c.l.b16 %v2680
      %v2870 = vunpack.c.h.b16 %v2680
      %v2871 = vunpack.c.l.b16 %v2681
      %v2872 = vunpack.c.h.b16 %v2681
      %v2873 = vunpack.c.l.b16 %v2682
      %v2874 = vunpack.c.h.b16 %v2682
      %v2875 = vpack.c.b16 %v2749, %v2747
      %v2876 = vpack.c.b16 %v2750, %v2748
      %v2877 = vpack.c.b16 %v2753, %v2751
      %v2878 = vpack.c.b16 %v2754, %v2752
      %v2879 = vpack.c.b16 %v2757, %v2755
      %v2880 = vpack.c.b16 %v2758, %v2756
      %v2881 = vpack.c.b16 %v2761, %v2759
      %v2882 = vpack.c.b16 %v2762, %v2760
      %v2883 = vpack.c.b16 %v2765, %v2763
      %v2884 = vpack.c.b16 %v2766, %v2764
      %v2885 = vpack.c.b16 %v2769, %v2767
      %v2886 = vpack.c.b16 %v2770, %v2768
      %v2887 = vpack.c.b16 %v2773, %v2771
      %v2888 = vpack.c.b16 %v2774, %v2772
      %v2889 = vpack.c.b16 %v2777, %v2775
      %v2890 = vpack.c.b16 %v2778, %v2776
      %v2891 = vpack.c.b16 %v2781, %v2779
      %v2892 = vpack.c.b16 %v2782, %v2780
      %v2893 = vpack.c.b16 %v2785, %v2783
      %v2894 = vpack.c.b16 %v2786, %v2784
      %v2895 = vpack.c.b16 %v2789, %v2787
      %v2896 = vpack.c.b16 %v2790, %v2788
      %v2897 = vpack.c.b16 %v2793, %v2791
      %v2898 = vpack.c.b16 %v2794, %v2792
      %v2899 = vpack.c.b16 %v2797, %v2795
      %v2900 = vpack.c.b16 %v2798, %v2796
      %v2901 = vpack.c.b16 %v2801, %v2799
      %v2902 = vpack.c.b16 %v2802, %v2800
      %v2903 = vpack.c.b16 %v2805, %v2803
      %v2904 = vpack.c.b16 %v2806, %v2804
      %v2905 = vpack.c.b16 %v2809, %v2807
      %v2906 = vpack.c.b16 %v2810, %v2808
      %v2907 = vpack.c.b16 %v2813, %v2811
      %v2908 = vpack.c.b16 %v2814, %v2812
      %v2909 = vpack.c.b16 %v2817, %v2815
      %v2910 = vpack.c.b16 %v2818, %v2816
      %v2911 = vpack.c.b16 %v2821, %v2819
      %v2912 = vpack.c.b16 %v2822, %v2820
      %v2913 = vpack.c.b16 %v2825, %v2823
      %v2914 = vpack.c.b16 %v2826, %v2824
      %v2915 = vpack.c.b16 %v2829, %v2827
      %v2916 = vpack.c.b16 %v2830, %v2828
      %v2917 = vpack.c.b16 %v2833, %v2831
      %v2918 = vpack.c.b16 %v2834, %v2832
      %v2919 = vpack.c.b16 %v2837, %v2835
      %v2920 = vpack.c.b16 %v2838, %v2836
      %v2921 = vpack.c.b16 %v2841, %v2839
      %v2922 = vpack.c.b16 %v2842, %v2840
      %v2923 = vpack.c.b16 %v2845, %v2843
      %v2924 = vpack.c.b16 %v2846, %v2844
      %v2925 = vpack.c.b16 %v2849, %v2847
      %v2926 = vpack.c.b16 %v2850, %v2848
      %v2927 = vpack.c.b16 %v2853, %v2851
      %v2928 = vpack.c.b16 %v2854, %v2852
      %v2929 = vpack.c.b16 %v2857, %v2855
      %v2930 = vpack.c.b16 %v2858, %v2856
      %v2931 = vpack.c.b16 %v2861, %v2859
      %v2932 = vpack.c.b16 %v2862, %v2860
      %v2933 = vpack.c.b16 %v2865, %v2863
      %v2934 = vpack.c.b16 %v2866, %v2864
      %v2935 = vpack.c.b16 %v2869, %v2867
      %v2936 = vpack.c.b16 %v2870, %v2868
      %v2937 = vpack.c.b16 %v2873, %v2871
      %v2938 = vpack.c.b16 %v2874, %v2872
      %3003 = vmatprep.subr.bf16.mxu0 %v2876
      %3004 = vmatpush1.bf16.msra.mxu0 %v2875
      %3005 = vmatprep.subr.bf16.mxu0 %v2878
      %3006 = vmatpush1.bf16.msra.mxu0 %v2877
      %3007 = vmatprep.subr.bf16.mxu0 %v2880
      %3008 = vmatpush1.bf16.msra.mxu0 %v2879
      %3009 = vmatprep.subr.bf16.mxu0 %v2882
      %3010 = vmatpush1.bf16.msra.mxu0 %v2881
      %3011 = vmatprep.subr.bf16.mxu0 %v2884
      %3012 = vmatpush1.bf16.msra.mxu0 %v2883
      %3013 = vmatprep.subr.bf16.mxu0 %v2886
      %3014 = vmatpush1.bf16.msra.mxu0 %v2885
      %3015 = vmatprep.subr.bf16.mxu0 %v2888
      %3016 = vmatpush1.bf16.msra.mxu0 %v2887
      %3017 = vmatprep.subr.bf16.mxu0 %v2890
      %3018 = vmatpush1.bf16.msra.mxu0 %v2889
      %3019 = vmatprep.subr.bf16.mxu0 %v2892
      %3020 = vmatpush1.bf16.msra.mxu0 %v2891
      %3021 = vmatprep.subr.bf16.mxu0 %v2894
      %3022 = vmatpush1.bf16.msra.mxu0 %v2893
      %3023 = vmatprep.subr.bf16.mxu0 %v2896
      %3024 = vmatpush1.bf16.msra.mxu0 %v2895
      %3025 = vmatprep.subr.bf16.mxu0 %v2898
      %3026 = vmatpush1.bf16.msra.mxu0 %v2897
      %3027 = vmatprep.subr.bf16.mxu0 %v2900
      %3028 = vmatpush1.bf16.msra.mxu0 %v2899
      %3029 = vmatprep.subr.bf16.mxu0 %v2902
      %3030 = vmatpush1.bf16.msra.mxu0 %v2901
      %3031 = vmatprep.subr.bf16.mxu0 %v2904
      %3032 = vmatpush1.bf16.msra.mxu0 %v2903
      %3033 = vmatprep.subr.bf16.mxu0 %v2906
      %3034 = vmatpush1.bf16.msra.mxu0 %v2905
      %3035 = vmatprep.mubr.bf16.mxu0 %v2612
      %3036 = vmatmul.mubr.bf16.gmra.mrb[0].mxu0 %v2611
      %v3037 = vpop.f32.mrb[0].mxu0
      %v3038 = vadd.f32 0.0, %v3037
      %v3039 = vpop.f32.mrb[0].mxu0
      %v3040 = vadd.f32 0.0, %v3039
      %v3041 = vpop.f32.mrb[0].mxu0
      %v3042 = vadd.f32 0.0, %v3041
      %v3043 = vpop.f32.mrb[0].mxu0
      %v3044 = vadd.f32 0.0, %v3043
      %3045 = vmatprep.mubr.bf16.mxu0 %v2616
      %3046 = vmatmul.mubr.bf16.gmra.mrb[0].mxu0 %v2615
      %v3047 = vpop.f32.mrb[0].mxu0
      %v3048 = vadd.f32 0.0, %v3047
      %v3049 = vpop.f32.mrb[0].mxu0
      %v3050 = vadd.f32 0.0, %v3049
      %v3051 = vpop.f32.mrb[0].mxu0
      %v3052 = vadd.f32 0.0, %v3051
      %v3053 = vpop.f32.mrb[0].mxu0
      %v3054 = vadd.f32 0.0, %v3053
      %3055 = vdwg.mxu0
      %3056 = vmatprep.subr.bf16.mxu0 %v2908
      %3057 = vmatpush1.bf16.msra.mxu0 %v2907
      %3058 = vmatprep.subr.bf16.mxu0 %v2910
      %3059 = vmatpush1.bf16.msra.mxu0 %v2909
      %3060 = vmatprep.subr.bf16.mxu0 %v2912
      %3061 = vmatpush1.bf16.msra.mxu0 %v2911
      %3062 = vmatprep.subr.bf16.mxu0 %v2914
      %3063 = vmatpush1.bf16.msra.mxu0 %v2913
      %3064 = vmatprep.subr.bf16.mxu0 %v2916
      %3065 = vmatpush1.bf16.msra.mxu0 %v2915
      %3066 = vmatprep.subr.bf16.mxu0 %v2918
      %3067 = vmatpush1.bf16.msra.mxu0 %v2917
      %3068 = vmatprep.subr.bf16.mxu0 %v2920
      %3069 = vmatpush1.bf16.msra.mxu0 %v2919
      %3070 = vmatprep.subr.bf16.mxu0 %v2922
      %3071 = vmatpush1.bf16.msra.mxu0 %v2921
      %3072 = vmatprep.subr.bf16.mxu0 %v2924
      %3073 = vmatpush1.bf16.msra.mxu0 %v2923
      %3074 = vmatprep.subr.bf16.mxu0 %v2926
      %3075 = vmatpush1.bf16.msra.mxu0 %v2925
      %3076 = vmatprep.subr.bf16.mxu0 %v2928
      %3077 = vmatpush1.bf16.msra.mxu0 %v2927
      %3078 = vmatprep.subr.bf16.mxu0 %v2930
      %3079 = vmatpush1.bf16.msra.mxu0 %v2929
      %3080 = vmatprep.subr.bf16.mxu0 %v2932
      %3081 = vmatpush1.bf16.msra.mxu0 %v2931
      %3082 = vmatprep.subr.bf16.mxu0 %v2934
      %3083 = vmatpush1.bf16.msra.mxu0 %v2933
      %3084 = vmatprep.subr.bf16.mxu0 %v2936
      %3085 = vmatpush1.bf16.msra.mxu0 %v2935
      %3086 = vmatprep.subr.bf16.mxu0 %v2938
      %3087 = vmatpush1.bf16.msra.mxu0 %v2937
      %3088 = vmatprep.mubr.bf16.mxu0 %v2614
      %3089 = vmatmul.mubr.bf16.gmra.mrb[0].mxu0 %v2613
      %v3090 = vpop.f32.mrb[0].mxu0
      %v3091 = vadd.f32 %v3038, %v3090
      %v3092 = vpop.f32.mrb[0].mxu0
      %v3093 = vadd.f32 %v3040, %v3092
      %v3094 = vpop.f32.mrb[0].mxu0
      %v3095 = vadd.f32 %v3042, %v3094
      %v3096 = vpop.f32.mrb[0].mxu0
      %v3097 = vadd.f32 %v3044, %v3096
      %3098 = vmatprep.mubr.bf16.mxu0 %v2618
      %3099 = vmatmul.mubr.bf16.gmra.mrb[0].mxu0 %v2617
      %v3100 = vpop.f32.mrb[0].mxu0
      %v3101 = vadd.f32 %v3048, %v3100
      %v3102 = vpop.f32.mrb[0].mxu0
      %v3103 = vadd.f32 %v3050, %v3102
      %v3104 = vpop.f32.mrb[0].mxu0
      %v3105 = vadd.f32 %v3052, %v3104
      %v3106 = vpop.f32.mrb[0].mxu0
      %v3107 = vadd.f32 %v3054, %v3106
      %3108 = vdwg.mxu0
      %v3109 = vadd.f32 %v2071, %v3091
      %v3110 = vadd.f32 %v2072, %v3093
      %v3111 = vadd.f32 %v2073, %v3095
      %v3112 = vadd.f32 %v2074, %v3097
      %v3113 = vadd.f32 %v2075, %v3101
      %v3114 = vadd.f32 %v2076, %v3103
      %v3115 = vadd.f32 %v2077, %v3105
      %v3116 = vadd.f32 %v2078, %v3107
      %v3117 = vld [vmem:[%s10] sm:$0x3]
      %v3119 = vlaneseq
      %v3120 = vshrl.u32 %v3119, 7
      %v3121 = vsub.s32 0, %v3120
      %v3122 = vrot.slane %v3117, %v3121
      %v3123 = vlaneseq
      %v3124 = vshrl.u32 %v3123, 7
      %v3125 = vsub.s32 1, %v3124
      %v3126 = vrot.slane %v3117, %v3125
      %v3129 = vadd.f32 %v3109, %v3122
      %v3130 = vadd.f32 %v3110, %v3126
      %v3131 = vadd.f32 %v3111, %v3122
      %v3132 = vadd.f32 %v3112, %v3126
      %v3133 = vadd.f32 %v3113, %v3122
      %v3134 = vadd.f32 %v3114, %v3126
      %v3135 = vadd.f32 %v3115, %v3122
      %v3136 = vadd.f32 %v3116, %v3126
      %v3137 = vld [vmem:[%s11] sm:$0x3]
      %v3138 = vld [vmem:[%s12] sm:$0x3]
      %v3139 = vadd.f32 %v3129, %v3130
      %3140 = vadd.xlane.f32.xlu0 %v3139
      %v3141 = vpop.xlane.xlu0 %3140
      %v3142 = vadd.f32 %v3131, %v3132
      %3143 = vadd.xlane.f32.xlu0 %v3142
      %v3144 = vpop.xlane.xlu0 %3143
      %v3145 = vadd.f32 %v3133, %v3134
      %3146 = vadd.xlane.f32.xlu0 %v3145
      %v3147 = vpop.xlane.xlu0 %3146
      %v3148 = vadd.f32 %v3135, %v3136
      %3149 = vadd.xlane.f32.xlu0 %v3148
      %v3150 = vpop.xlane.xlu0 %3149
      %v3151 = vmul.f32 %v3141, %v1988
      %v3152 = vmul.f32 %v3144, %v1988
      %v3153 = vmul.f32 %v3147, %v1988
      %v3154 = vmul.f32 %v3150, %v1988
      %v3155 = vsub.f32 %v3129, %v3151
      %v3156 = vsub.f32 %v3130, %v3151
      %v3157 = vsub.f32 %v3131, %v3152
      %v3158 = vsub.f32 %v3132, %v3152
      %v3159 = vsub.f32 %v3133, %v3153
      %v3160 = vsub.f32 %v3134, %v3153
      %v3161 = vsub.f32 %v3135, %v3154
      %v3162 = vsub.f32 %v3136, %v3154
      %v3163 = vmul.f32 %v3155, %v3155
      %v3164 = vmul.f32 %v3156, %v3156
      %v3165 = vmul.f32 %v3157, %v3157
      %v3166 = vmul.f32 %v3158, %v3158
      %v3167 = vmul.f32 %v3159, %v3159
      %v3168 = vmul.f32 %v3160, %v3160
      %v3169 = vmul.f32 %v3161, %v3161
      %v3170 = vmul.f32 %v3162, %v3162
      %v3171 = vadd.f32 %v3163, %v3164
      %3172 = vadd.xlane.f32.xlu0 %v3171
      %v3173 = vpop.xlane.xlu0 %3172
      %v3174 = vadd.f32 %v3165, %v3166
      %3175 = vadd.xlane.f32.xlu0 %v3174
      %v3176 = vpop.xlane.xlu0 %3175
      %v3177 = vadd.f32 %v3167, %v3168
      %3178 = vadd.xlane.f32.xlu0 %v3177
      %v3179 = vpop.xlane.xlu0 %3178
      %v3180 = vadd.f32 %v3169, %v3170
      %3181 = vadd.xlane.f32.xlu0 %v3180
      %v3182 = vpop.xlane.xlu0 %3181
      %v3183 = vmul.f32 %v3173, %v1988
      %v3184 = vmul.f32 %v3176, %v1988
      %v3185 = vmul.f32 %v3179, %v1988
      %v3186 = vmul.f32 %v3182, %v1988
      %v3187 = vadd.f32 %v3183, 1e-05
      %v3188 = vadd.f32 %v3184, 1e-05
      %v3189 = vadd.f32 %v3185, 1e-05
      %v3190 = vadd.f32 %v3186, 1e-05
      %v3191 = vrsqrt.pop %v3187
      %v3192 = vrsqrt.pop %v3188
      %v3193 = vrsqrt.pop %v3189
      %v3194 = vrsqrt.pop %v3190
      %v3195 = vmul.f32 %v3155, %v3191
      %v3196 = vmul.f32 %v3156, %v3191
      %v3197 = vmul.f32 %v3157, %v3192
      %v3198 = vmul.f32 %v3158, %v3192
      %v3199 = vmul.f32 %v3159, %v3193
      %v3200 = vmul.f32 %v3160, %v3193
      %v3201 = vmul.f32 %v3161, %v3194
      %v3202 = vmul.f32 %v3162, %v3194
      %v3204 = vlaneseq
      %v3205 = vshrl.u32 %v3204, 7
      %v3206 = vsub.s32 0, %v3205
      %v3207 = vrot.slane %v3137, %v3206
      %v3208 = vlaneseq
      %v3209 = vshrl.u32 %v3208, 7
      %v3210 = vsub.s32 1, %v3209
      %v3211 = vrot.slane %v3137, %v3210
      %v3214 = vmul.f32 %v3195, %v3207
      %v3215 = vmul.f32 %v3196, %v3211
      %v3216 = vmul.f32 %v3197, %v3207
      %v3217 = vmul.f32 %v3198, %v3211
      %v3218 = vmul.f32 %v3199, %v3207
      %v3219 = vmul.f32 %v3200, %v3211
      %v3220 = vmul.f32 %v3201, %v3207
      %v3221 = vmul.f32 %v3202, %v3211
      %v3223 = vlaneseq
      %v3224 = vshrl.u32 %v3223, 7
      %v3225 = vsub.s32 0, %v3224
      %v3226 = vrot.slane %v3138, %v3225
      %v3227 = vlaneseq
      %v3228 = vshrl.u32 %v3227, 7
      %v3229 = vsub.s32 1, %v3228
      %v3230 = vrot.slane %v3138, %v3229
      %v3233 = vadd.f32 %v3214, %v3226
      %v3234 = vadd.f32 %v3215, %v3230
      %v3235 = vadd.f32 %v3216, %v3226
      %v3236 = vadd.f32 %v3217, %v3230
      %v3237 = vadd.f32 %v3218, %v3226
      %v3238 = vadd.f32 %v3219, %v3230
      %v3239 = vadd.f32 %v3220, %v3226
      %v3240 = vadd.f32 %v3221, %v3230
      %3241 = vst [vmem:[#allocation2] sm:$0xff] %v3233
      %3242 = vst [vmem:[#allocation2 + $0x8] sm:$0xff] %v3234
      %3243 = vst [vmem:[#allocation2 + $0x10] sm:$0xff] %v3235
      %3244 = vst [vmem:[#allocation2 + $0x18] sm:$0xff] %v3236
      %3245 = vst [vmem:[#allocation2 + $0x20] sm:$0xff] %v3237
      %3246 = vst [vmem:[#allocation2 + $0x28] sm:$0xff] %v3238
      %3247 = vst [vmem:[#allocation2 + $0x30] sm:$0xff] %v3239
      %3248 = vst [vmem:[#allocation2 + $0x38] sm:$0xff] %v3240
      %p3249 = scmp.eq.s32.totalorder %s26, 1
      // Predicated region
      $region85: #{_lambda_.1} parent=79 // pred_check
        %p3250 = pneg %p3249
      $region86: #{_lambda_.1} parent=79 // pred_check_branch
        %3252 = sbr.rel (%p3250) target = $region88
      $region87: #{_lambda_.1} parent=79 // pred_region
        %v3253 = vld [vmem:[%s13] sm:$0x3]
        %v3254 = vld [vmem:[%s14] sm:$0x3]
        %v3255 = vadd.f32 %v3233, %v3234
        %3256 = vadd.xlane.f32.xlu0 %v3255
        %v3257 = vpop.xlane.xlu0 %3256
        %v3258 = vadd.f32 %v3235, %v3236
        %3259 = vadd.xlane.f32.xlu0 %v3258
        %v3260 = vpop.xlane.xlu0 %3259
        %v3261 = vadd.f32 %v3237, %v3238
        %3262 = vadd.xlane.f32.xlu0 %v3261
        %v3263 = vpop.xlane.xlu0 %3262
        %v3264 = vadd.f32 %v3239, %v3240
        %3265 = vadd.xlane.f32.xlu0 %v3264
        %v3266 = vpop.xlane.xlu0 %3265
        %v3267 = vmul.f32 %v3257, %v1988
        %v3268 = vmul.f32 %v3260, %v1988
        %v3269 = vmul.f32 %v3263, %v1988
        %v3270 = vmul.f32 %v3266, %v1988
        %v3271 = vsub.f32 %v3233, %v3267
        %v3272 = vsub.f32 %v3234, %v3267
        %v3273 = vsub.f32 %v3235, %v3268
        %v3274 = vsub.f32 %v3236, %v3268
        %v3275 = vsub.f32 %v3237, %v3269
        %v3276 = vsub.f32 %v3238, %v3269
        %v3277 = vsub.f32 %v3239, %v3270
        %v3278 = vsub.f32 %v3240, %v3270
        %v3279 = vmul.f32 %v3271, %v3271
        %v3280 = vmul.f32 %v3272, %v3272
        %v3281 = vmul.f32 %v3273, %v3273
        %v3282 = vmul.f32 %v3274, %v3274
        %v3283 = vmul.f32 %v3275, %v3275
        %v3284 = vmul.f32 %v3276, %v3276
        %v3285 = vmul.f32 %v3277, %v3277
        %v3286 = vmul.f32 %v3278, %v3278
        %v3287 = vadd.f32 %v3279, %v3280
        %3288 = vadd.xlane.f32.xlu0 %v3287
        %v3289 = vpop.xlane.xlu0 %3288
        %v3290 = vadd.f32 %v3281, %v3282
        %3291 = vadd.xlane.f32.xlu0 %v3290
        %v3292 = vpop.xlane.xlu0 %3291
        %v3293 = vadd.f32 %v3283, %v3284
        %3294 = vadd.xlane.f32.xlu0 %v3293
        %v3295 = vpop.xlane.xlu0 %3294
        %v3296 = vadd.f32 %v3285, %v3286
        %3297 = vadd.xlane.f32.xlu0 %v3296
        %v3298 = vpop.xlane.xlu0 %3297
        %v3299 = vmul.f32 %v3289, %v1988
        %v3300 = vmul.f32 %v3292, %v1988
        %v3301 = vmul.f32 %v3295, %v1988
        %v3302 = vmul.f32 %v3298, %v1988
        %v3303 = vadd.f32 %v3299, 1e-05
        %v3304 = vadd.f32 %v3300, 1e-05
        %v3305 = vadd.f32 %v3301, 1e-05
        %v3306 = vadd.f32 %v3302, 1e-05
        %v3307 = vrsqrt.pop %v3303
        %v3308 = vrsqrt.pop %v3304
        %v3309 = vrsqrt.pop %v3305
        %v3310 = vrsqrt.pop %v3306
        %v3311 = vmul.f32 %v3271, %v3307
        %v3312 = vmul.f32 %v3272, %v3307
        %v3313 = vmul.f32 %v3273, %v3308
        %v3314 = vmul.f32 %v3274, %v3308
        %v3315 = vmul.f32 %v3275, %v3309
        %v3316 = vmul.f32 %v3276, %v3309
        %v3317 = vmul.f32 %v3277, %v3310
        %v3318 = vmul.f32 %v3278, %v3310
        %v3320 = vlaneseq
        %v3321 = vshrl.u32 %v3320, 7
        %v3322 = vsub.s32 0, %v3321
        %v3323 = vrot.slane %v3253, %v3322
        %v3324 = vlaneseq
        %v3325 = vshrl.u32 %v3324, 7
        %v3326 = vsub.s32 1, %v3325
        %v3327 = vrot.slane %v3253, %v3326
        %v3330 = vmul.f32 %v3311, %v3323
        %v3331 = vmul.f32 %v3312, %v3327
        %v3332 = vmul.f32 %v3313, %v3323
        %v3333 = vmul.f32 %v3314, %v3327
        %v3334 = vmul.f32 %v3315, %v3323
        %v3335 = vmul.f32 %v3316, %v3327
        %v3336 = vmul.f32 %v3317, %v3323
        %v3337 = vmul.f32 %v3318, %v3327
        %v3339 = vlaneseq
        %v3340 = vshrl.u32 %v3339, 7
        %v3341 = vsub.s32 0, %v3340
        %v3342 = vrot.slane %v3254, %v3341
        %v3343 = vlaneseq
        %v3344 = vshrl.u32 %v3343, 7
        %v3345 = vsub.s32 1, %v3344
        %v3346 = vrot.slane %v3254, %v3345
        %v3349 = vadd.f32 %v3330, %v3342
        %v3350 = vadd.f32 %v3331, %v3346
        %v3351 = vadd.f32 %v3332, %v3342
        %v3352 = vadd.f32 %v3333, %v3346
        %v3353 = vadd.f32 %v3334, %v3342
        %v3354 = vadd.f32 %v3335, %v3346
        %v3355 = vadd.f32 %v3336, %v3342
        %v3356 = vadd.f32 %v3337, %v3346
        %3357 = vst [vmem:[%s15] sm:$0xff] %v3349
        %3358 = vst [vmem:[%s15 + $0x8] sm:$0xff] %v3350
        %3359 = vst [vmem:[%s15 + $0x10] sm:$0xff] %v3351
        %3360 = vst [vmem:[%s15 + $0x18] sm:$0xff] %v3352
        %3361 = vst [vmem:[%s15 + $0x20] sm:$0xff] %v3353
        %3362 = vst [vmem:[%s15 + $0x28] sm:$0xff] %v3354
        %3363 = vst [vmem:[%s15 + $0x30] sm:$0xff] %v3355
        %3364 = vst [vmem:[%s15 + $0x38] sm:$0xff] %v3356
      $region88: #{_lambda_.1} parent=79 // pred_fallthru
        _
      // Predicated region
      $region89: #{_lambda_.1} parent=79 // pred_check
        %p3365 = pneg %p354
      $region90: #{_lambda_.1} parent=79 // pred_check_branch
        %3367 = sbr.rel (%p3365) target = $region92
      $region91: #{_lambda_.1} parent=79 // pred_region
        _
      $region92: #{_lambda_.1} parent=79 // pred_fallthru
        _
      // Predicated region
      $region93: #{_lambda_.1} parent=79 // pred_check
        %p3368 = pneg %p354
      $region94: #{_lambda_.1} parent=79 // pred_check_branch
        %3370 = sbr.rel (%p3368) target = $region96
      $region95: #{_lambda_.1} parent=79 // pred_region
        _
      $region96: #{_lambda_.1} parent=79 // pred_fallthru
        _
    $region80: #{_lambda_.1} parent=5 // pred_fallthru
      _
    %p3371 = scmp.le.s32.totalorder 2, %s21
    // Predicated region
    $region97: #{_lambda_.1} parent=5 // pred_check
      %p3372 = pneg %p3371
    $region98: #{_lambda_.1} parent=5 // pred_check_branch
      %3374 = sbr.rel (%p3372) target = $region100
    $region99: #{_lambda_.1} parent=5 // pred_region
      %s3375 = ssub.s32 %s21, 2
    $region100: #{_lambda_.1} parent=5 // pred_fallthru
      _
  $region6: #{_lambda_.1} parent=0 // loop_footer
    %s25 = sadd.s32 1, %s21
  $region7: #{_lambda_.1} parent=0 // loop_footer_branch
    %20 = sbr.rel target = $region3
  $region8: #{_lambda_.1} parent=0 // loop_exit
    _

</llo_original>
